<compile_context>
chip_gen: v7x
topology: tpu7x:2x2x1
jax: 0.10.0
libtpu: 0.0.40
codegen_flags: <defaults>
</compile_context>

<pallas_src>
import functools

import jax
import jax.numpy as jnp
from jax import lax
from jax.experimental import pallas as pl
from jax.experimental.pallas import tpu as pltpu

# bf16 streaming of the big operands (A_hat, XW, x1); accumulation stays f32.
STREAM_DTYPE = jnp.bfloat16
# Final (N, N) matrix: post-sigmoid values ~0.5, bf16 error ~1e-3 << 1e-2 tol.
SIM_OUT_DTYPE = jnp.bfloat16


def _vmem_limit_bytes():
    """Generation-aware scoped-VMEM cap: ~5/8 of physical VMEM.

    ≈40 MiB on v7x (64 MiB/TC), ≈80 MiB on v5e/v6e (128 MiB), leaving headroom
    for compiler-internal scratch."""
    cap = 64 * 1024 * 1024
    try:
        cap = int(pltpu.get_tpu_info().vmem_capacity_bytes)
    except Exception:
        pass
    return max(32 * 1024 * 1024, min(cap * 5 // 8, 100 * 1024 * 1024))


_VMEM_LIMIT_BYTES = _vmem_limit_bytes()


def _pick_row_tile(n, preferred=512):
    """Sublane-axis tile: power-of-two multiple of 8 dividing n, else full n.

    Keep n // tm >= 2 * num_cores for production N so the 'parallel' row axis
    still load-balances v7x's two TensorCores."""
    t = preferred
    while t >= 8:
        if n % t == 0:
            return t
        t //= 2
    return n


def _pick_lane_tile(n, preferred=2048):
    """Lane-axis tile: power-of-two multiple of 128 dividing n, else full n."""
    t = preferred
    while t >= 128:
        if n % t == 0:
            return t
        t //= 2
    return n


def _pick_sim_tile(n, out_itemsize, budget, preferred=512):
    """Query tile for the sim kernel, capped by a VMEM budget.

    Per query row the kernel holds ~ (2*out_itemsize) bytes of double-buffered
    output block plus ~8 B of f32 intermediates per key -> cap tq accordingly
    (matters on v7x's 64 MiB VMEM for large N)."""
    per_row = n * (2 * out_itemsize + 8) + 64
    cap = max(8, budget // per_row)
    t = preferred
    while t >= 8:
        if n % t == 0 and t <= cap:
            return t
        t //= 2
    return 8 if n % 8 == 0 else n


# ---------------------------------------------------------------------------
# Kernel 1: x1 = relu( A_hat @ XW + b1 ),  XW = feat @ W1 precomputed in XLA.
# Grid: (row tiles, K tiles); f32 VMEM accumulator over K.
# ---------------------------------------------------------------------------
def _gcn1_kernel(a_ref, xw_ref, b1_ref, x1_ref, acc_ref):
    k = pl.program_id(1)

    @pl.when(k == 0)
    def _():
        acc_ref[...] = jnp.zeros_like(acc_ref)

    acc_ref[...] += jnp.dot(a_ref[...], xw_ref[...],
                            preferred_element_type=jnp.float32)

    @pl.when(k == pl.num_programs(1) - 1)
    def _():
        x1_ref[...] = jnp.maximum(acc_ref[...] + b1_ref[...],
                                  0.0).astype(x1_ref.dtype)


def gcn1(a_hat, xw, b1, *, tm=None, tk=None):
    n = a_hat.shape[0]
    c1 = xw.shape[1]
    tm = tm or _pick_row_tile(n)
    tk = tk or _pick_lane_tile(n)
    assert n % tm == 0 and n % tk == 0
    grid = (n // tm, n // tk)

    xw = xw.astype(a_hat.dtype)
    b1 = b1.reshape(1, c1).astype(jnp.float32)

    return pl.pallas_call(
        _gcn1_kernel,
        out_shape=jax.ShapeDtypeStruct((n, c1), STREAM_DTYPE),
        grid_spec=pltpu.PrefetchScalarGridSpec(
            num_scalar_prefetch=0,
            grid=grid,
            in_specs=[
                pl.BlockSpec((tm, tk), lambda i, k: (i, k)),      # A_hat tile (bf16)
                pl.BlockSpec((tk, c1), lambda i, k: (k, 0)),      # XW rows (bf16)
                pl.BlockSpec((1, c1), lambda i, k: (0, 0)),       # b1 (whole)
            ],
            out_specs=pl.BlockSpec((tm, c1), lambda i, k: (i, 0)),
            scratch_shapes=[pltpu.VMEM((tm, c1), jnp.float32)],
        ),
        compiler_params=pltpu.CompilerParams(
            dimension_semantics=("parallel", "arbitrary"),
            vmem_limit_bytes=_VMEM_LIMIT_BYTES,
        ),
    )(a_hat, xw, b1)


# ---------------------------------------------------------------------------
# Kernel 2: conv2 + conv3 fused.
#   H  = A_hat @ x1     (f32 VMEM accumulator over the K axis)
#   x2 = H @ W2 + b2 ;  pw1 = sigmoid(H @ W3 + b3)   via one H @ [W2|W3] matmul
# ---------------------------------------------------------------------------
def _gcn23_kernel(a_ref, x1_ref, wc_ref, bc_ref, x2_ref, pw_ref, h_acc_ref, *, c_out):
    k = pl.program_id(1)

    @pl.when(k == 0)
    def _():
        h_acc_ref[...] = jnp.zeros_like(h_acc_ref)

    h_acc_ref[...] += jnp.dot(a_ref[...], x1_ref[...],
                              preferred_element_type=jnp.float32)

    @pl.when(k == pl.num_programs(1) - 1)
    def _():
        z = jnp.dot(h_acc_ref[...], wc_ref[...],
                    preferred_element_type=jnp.float32) + bc_ref[...]
        # x2/pw1 are narrow (N x C / N x 1) but tiny; cost negligible vs A_hat.
        x2_ref[...] = z[:, :c_out].astype(x2_ref.dtype)
        pw_ref[...] = jax.nn.sigmoid(z[:, c_out:]).astype(pw_ref.dtype)


def gcn2_and_gcn3(a_hat, x1, w2, b2, w3, b3, *, tm=None, tk=None):
    n = a_hat.shape[0]
    c1 = x1.shape[1]
    c_out = w2.shape[1]
    tm = tm or _pick_row_tile(n)
    tk = tk or _pick_lane_tile(n)
    assert n % tm == 0 and n % tk == 0
    grid = (n // tm, n // tk)

    x1 = x1.astype(a_hat.dtype)
    wc = jnp.concatenate([w2, w3], axis=1).astype(jnp.float32)         # (2C, C+1)
    bc = jnp.concatenate([b2, b3]).reshape(1, c_out + 1).astype(jnp.float32)

    return pl.pallas_call(
        functools.partial(_gcn23_kernel, c_out=c_out),
        out_shape=(jax.ShapeDtypeStruct((n, c_out), jnp.float32),
                   jax.ShapeDtypeStruct((n, 1), jnp.float32)),
        grid_spec=pltpu.PrefetchScalarGridSpec(
            num_scalar_prefetch=0,
            grid=grid,
            in_specs=[
                pl.BlockSpec((tm, tk), lambda i, k: (i, k)),           # A_hat tile
                pl.BlockSpec((tk, c1), lambda i, k: (k, 0)),           # x1 rows (bf16)
                pl.BlockSpec((c1, c_out + 1), lambda i, k: (0, 0)),    # [W2|W3]
                pl.BlockSpec((1, c_out + 1), lambda i, k: (0, 0)),     # [b2|b3]
            ],
            out_specs=(pl.BlockSpec((tm, c_out), lambda i, k: (i, 0)),
                       pl.BlockSpec((tm, 1), lambda i, k: (i, 0))),
            scratch_shapes=[pltpu.VMEM((tm, c1), jnp.float32)],
        ),
        compiler_params=pltpu.CompilerParams(
            dimension_semantics=("parallel", "arbitrary"),
            vmem_limit_bytes=_VMEM_LIMIT_BYTES,
        ),
    )(a_hat, x1, wc, bc)


# ---------------------------------------------------------------------------
# Kernel 3: get_sim_matrix(x2, pw1).sigmoid(), row-tiled (flash-style),
# lane-dense (tq, N) output blocks, bf16 output, one-EUP-op sigmoid.
# ---------------------------------------------------------------------------
def _sim_kernel(xq_ref, xk_ref, pw_ref, o_ref):
    # (tq, C) x (N, C) contracting last dims -> (tq, N); avoids an XLU transpose.
    s = lax.dot_general(xq_ref[...], xk_ref[...],
                        dimension_numbers=(((1,), (1,)), ((), ())),
                        preferred_element_type=jnp.float32)
    s = s - jnp.max(s, axis=1, keepdims=True)          # rowwise max-shift
    e = jnp.exp(s) * pw_ref[...]                       # (tq, N) * (tq, 1)
    denom = jnp.sum(e, axis=1, keepdims=True)
    pred = e * pl.reciprocal(denom, approx=True)       # EUP divide
    # pos_weights2 is None in Encoder.forward -> multiplication skipped.
    # sigmoid(x) == 0.5*tanh(0.5*x)+0.5: one EUP op instead of exp+reciprocal.
    o_ref[...] = (0.5 * jnp.tanh(0.5 * pred) + 0.5).astype(o_ref.dtype)


def sim_matrix(x2, pw1, *, tq=None, out_dtype=SIM_OUT_DTYPE):
    n, c = x2.shape
    out_itemsize = jnp.dtype(out_dtype).itemsize
    tq = tq or _pick_sim_tile(n, out_itemsize, _VMEM_LIMIT_BYTES // 2)
    assert n % tq == 0
    grid = (n // tq,)

    x2 = x2.astype(jnp.float32)
    pw1 = pw1.astype(jnp.float32)

    return pl.pallas_call(
        _sim_kernel,
        out_shape=jax.ShapeDtypeStruct((n, n), out_dtype),
        grid_spec=pltpu.PrefetchScalarGridSpec(
            num_scalar_prefetch=0,
            grid=grid,
            in_specs=[
                pl.BlockSpec((tq, c), lambda i: (i, 0)),   # query row tile
                pl.BlockSpec((n, c), lambda i: (0, 0)),    # all keys (resident)
                pl.BlockSpec((tq, 1), lambda i: (i, 0)),   # per-row weight
            ],
            out_specs=pl.BlockSpec((tq, n), lambda i: (i, 0)),  # lane-dense (tq, N)
        ),
        compiler_params=pltpu.CompilerParams(
            dimension_semantics=("parallel",),
            vmem_limit_bytes=_VMEM_LIMIT_BYTES,
        ),
    )(x2, x2, pw1)


# ---------------------------------------------------------------------------
# Plain-JAX glue: parameters, adjacency normalization, forward
# ---------------------------------------------------------------------------
def glorot(key, shape):
    fan_in, fan_out = shape[-2], shape[-1]
    bound = jnp.sqrt(6.0 / (fan_in + fan_out))
    return jax.random.uniform(key, shape, jnp.float32, -bound, bound)


def init_params(key, nb_nodes, in_channels, out_channels):
    k = jax.random.split(key, 8)
    return {
        "feat": glorot(k[0], (nb_nodes, in_channels)),                 # self.feat
        "w1": glorot(k[1], (in_channels, 2 * out_channels)),           # conv1
        "b1": jnp.zeros((2 * out_channels,), jnp.float32),
        "w2": glorot(k[2], (2 * out_channels, out_channels)),          # conv2
        "b2": jnp.zeros((out_channels,), jnp.float32),
        "w3": glorot(k[3], (2 * out_channels, 1)),                     # conv3
        "b3": jnp.zeros((1,), jnp.float32),
        # present in __init__ but unused by forward():
        "w4": glorot(k[4], (2 * out_channels, 1)),                     # conv4
        "b4": jnp.zeros((1,), jnp.float32),
        "pos_weights1": 0.05 * jax.random.truncated_normal(k[5], -2.0, 2.0, (1, nb_nodes)),
        "pos_weights2": 0.05 * jax.random.truncated_normal(k[6], -2.0, 2.0, (nb_nodes, 1)),
        "bias": jnp.zeros((in_channels,), jnp.float32),
    }


def gcn_norm_adj(edge_index, n):
    """Dense D^{-1/2} (A + I_remaining) D^{-1/2}, A[dst, src] = 1 (PyG src->tgt).

    Precondition: multi-edges are deduped and existing self-loops keep weight 1
    (matching add_remaining_self_loops on an unweighted, coalesced graph)."""
    src, dst = edge_index[0], edge_index[1]
    a = jnp.zeros((n, n), jnp.float32).at[dst, src].add(1.0)
    a = jnp.minimum(a, 1.0)                                   # dedupe
    a = jnp.maximum(a, jnp.eye(n, dtype=jnp.float32))         # self-loops (no 2.0 diag)
    deg = a.sum(axis=1)
    dinv = jnp.where(deg > 0, 1.0 / jnp.sqrt(deg), 0.0)
    return dinv[:, None] * a * dinv[None, :]


@functools.partial(jax.jit, static_argnames=("nb_nodes", "tm", "tk", "tq"))
def encoder_forward(params, feat, edge_index, *, nb_nodes, tm=None, tk=None, tq=None):
    a_hat = gcn_norm_adj(edge_index, nb_nodes).astype(STREAM_DTYPE)
    # XW = feat @ W1 is tiny (N, 2C): compute once in XLA, stream bf16 into gcn1.
    xw = jnp.dot(feat.astype(jnp.float32),
                 params["w1"].astype(jnp.float32)).astype(STREAM_DTYPE)
    x1 = gcn1(a_hat, xw, params["b1"], tm=tm, tk=tk)                   # bf16 (N, 2C)
    x2, pw1 = gcn2_and_gcn3(a_hat, x1, params["w2"], params["b2"],
                            params["w3"], params["b3"], tm=tm, tk=tk)
    # NOTE: the (N,1) pw1 weighting cancels algebraically in the row
    # normalization; it is kept (nearly free after fusion) to match the
    # reference module's forward exactly.
    return sim_matrix(x2, pw1, tq=tq)


def encoder_reference(params, feat, edge_index, nb_nodes):
    """Pure-JAX f32 reference mirroring the PyTorch forward."""
    a_hat = gcn_norm_adj(edge_index, nb_nodes)
    x1 = jnp.maximum(a_hat @ (feat @ params["w1"]) + params["b1"], 0.0)
    pw1 = jax.nn.sigmoid(a_hat @ (x1 @ params["w3"]) + params["b3"])
    x2 = a_hat @ (x1 @ params["w2"]) + params["b2"]
    sim = x2 @ x2.T
    sim = sim - jnp.max(sim, axis=1, keepdims=True)
    e = jnp.exp(sim) * pw1
    pred = e / jnp.sum(e, axis=1, keepdims=True)
    return jax.nn.sigmoid(pred)


# ---------------------------------------------------------------------------
if __name__ == "__main__":
    nb_nodes, in_channels, out_channels = 256, 16, 8

    key = jax.random.PRNGKey(0)
    pkey, ekey = jax.random.split(key)
    params = init_params(pkey, nb_nodes, in_channels, out_channels)

    # deterministic small directed graph: a ring plus a few extra edges
    src = jnp.arange(nb_nodes, dtype=jnp.int32)
    dst = (src + 1) % nb_nodes
    extra_src = jax.random.randint(ekey, (64,), 0, nb_nodes, dtype=jnp.int32)
    extra_dst = (extra_src + 3) % nb_nodes
    edge_index = jnp.stack(
        [jnp.concatenate([src, extra_src]), jnp.concatenate([dst, extra_dst])]
    )

    # Explicit 128 tiles so the small demo exercises multi-tile grids and the
    # K-axis accumulator; production sizes use the larger (512, 2048) defaults.
    out = encoder_forward(params, params["feat"], edge_index,
                          nb_nodes=nb_nodes, tm=128, tk=128, tq=128)
    out = jax.block_until_ready(out)

    assert out.shape == (nb_nodes, nb_nodes)
    out_f32 = out.astype(jnp.float32)
    assert bool(jnp.all(jnp.isfinite(out_f32)))
    assert bool(jnp.all((out_f32 > 0.0) & (out_f32 < 1.0)))  # sigmoid of a softmax row

    ref = encoder_reference(params, params["feat"], edge_index, nb_nodes)
    assert bool(jnp.allclose(out_f32, ref, atol=1e-2, rtol=0.0)), \
        float(jnp.max(jnp.abs(out_f32 - ref)))

    print("KERNEL_OK")
</pallas_src>

<mosaic_0001>
module attributes {stable_mosaic.version = 11 : i64} {
  func.func private @main(%arg0: i32) attributes {dimension_semantics = [#tpu.dimension_semantics<core_parallel>], iteration_bounds = array<i64: 2>, tpu.core_type = #tpu.core_type<sc_scalar_subcore>, window_params = []} {
    return
  }
}

module attributes {stable_mosaic.version = 11 : i64} {
  func.func private @main(%arg0: i32) attributes {dimension_semantics = [#tpu.dimension_semantics<core_parallel>], iteration_bounds = array<i64: 2>, tpu.core_type = #tpu.core_type<sc_scalar_subcore>, window_params = []} {
    return
  }
}

module attributes {stable_mosaic.version = 11 : i64} {
  func.func @_gcn1_kernel(%arg0: i32, %arg1: i32, %arg2: memref<128x128xbf16, #tpu.memory_space<vmem>>, %arg3: memref<128x16xbf16, #tpu.memory_space<vmem>>, %arg4: memref<1x16xf32, #tpu.memory_space<vmem>>, %arg5: memref<128x16xbf16, #tpu.memory_space<vmem>>, %arg6: memref<128x16xf32, #tpu.memory_space<vmem>>) attributes {dimension_semantics = [#tpu.dimension_semantics<parallel>, #tpu.dimension_semantics<arbitrary>], iteration_bounds = array<i64: 2, 2>, scalar_prefetch = 0 : i64, scratch_operands = 1 : i64, tpu.core_type = #tpu.core_type<tc>, window_params = [{transform_indices = @transform_0, window_bounds = array<i64: 128, 128>}, {transform_indices = @transform_1, window_bounds = array<i64: 128, 16>}, {pipeline_mode = #tpu.pipeline_mode<synchronous>, transform_indices = @transform_2, window_bounds = array<i64: 1, 16>}, {transform_indices = @transform_3, window_bounds = array<i64: 128, 16>}]} {
    %c0_i32 = arith.constant 0 : i32
    %0 = arith.cmpi eq, %arg1, %c0_i32 : i32
    %1 = arith.extui %0 : i1 to i32
    %c0_i32_0 = arith.constant 0 : i32
    %2 = arith.cmpi ne, %1, %c0_i32_0 : i32
    scf.if %2 {
      %cst_9 = arith.constant 0.000000e+00 : f32
      %12 = vector.broadcast %cst_9 : f32 to vector<128x16xf32>
      %c0_10 = arith.constant 0 : index
      %c0_11 = arith.constant 0 : index
      %13 = vector.load %arg6[%c0_10, %c0_11] : memref<128x16xf32, #tpu.memory_space<vmem>>, vector<128x16xf32>
      tpu.vector_store %arg6[%c0_10, %c0_11], %12 {strides = array<i32>} : memref<128x16xf32, #tpu.memory_space<vmem>>, vector<128x16xf32>,
    } else {
    }
    %c0 = arith.constant 0 : index
    %c0_1 = arith.constant 0 : index
    %3 = vector.load %arg6[%c0, %c0_1] : memref<128x16xf32, #tpu.memory_space<vmem>>, vector<128x16xf32>
    %c0_2 = arith.constant 0 : index
    %c0_3 = arith.constant 0 : index
    %4 = vector.load %arg2[%c0_2, %c0_3] : memref<128x128xbf16, #tpu.memory_space<vmem>>, vector<128x128xbf16>
    %c0_4 = arith.constant 0 : index
    %c0_5 = arith.constant 0 : index
    %5 = vector.load %arg3[%c0_4, %c0_5] : memref<128x16xbf16, #tpu.memory_space<vmem>>, vector<128x16xbf16>
    %cst = arith.constant dense<0.000000e+00> : vector<128x16xf32>
    %6 = tpu.matmul %4, %5, %cst {dimension_numbers = #tpu.dot_dimension_numbers<[1], [0], [0], [1], [0, 0, 1, 1], [], []>} : vector<128x128xbf16>, vector<128x16xbf16>, vector<128x16xf32> -> vector<128x16xf32>
    %7 = arith.addf %3, %6 : vector<128x16xf32>
    %c0_6 = arith.constant 0 : index
    %c0_7 = arith.constant 0 : index
    %8 = vector.load %arg6[%c0_6, %c0_7] : memref<128x16xf32, #tpu.memory_space<vmem>>, vector<128x16xf32>
    tpu.vector_store %arg6[%c0_6, %c0_7], %7 {strides = array<i32>} : memref<128x16xf32, #tpu.memory_space<vmem>>, vector<128x16xf32>,
    %c1_i32 = arith.constant 1 : i32
    %9 = arith.cmpi eq, %arg1, %c1_i32 : i32
    %10 = arith.extui %9 : i1 to i32
    %c0_i32_8 = arith.constant 0 : i32
    %11 = arith.cmpi ne, %10, %c0_i32_8 : i32
    scf.if %11 {
      %c0_9 = arith.constant 0 : index
      %c0_10 = arith.constant 0 : index
      %12 = vector.load %arg6[%c0_9, %c0_10] : memref<128x16xf32, #tpu.memory_space<vmem>>, vector<128x16xf32>
      %c0_11 = arith.constant 0 : index
      %c0_12 = arith.constant 0 : index
      %13 = vector.load %arg4[%c0_11, %c0_12] : memref<1x16xf32, #tpu.memory_space<vmem>>, vector<1x16xf32>
      %14 = vector.broadcast %13 : vector<1x16xf32> to vector<128x16xf32>
      %15 = arith.addf %12, %14 : vector<128x16xf32>
      %cst_13 = arith.constant 0.000000e+00 : f32
      %16 = vector.broadcast %cst_13 : f32 to vector<128x16xf32>
      %17 = arith.maximumf %15, %16 : vector<128x16xf32>
      %18 = arith.truncf %17 : vector<128x16xf32> to vector<128x16xbf16>
      %c0_14 = arith.constant 0 : index
      %c0_15 = arith.constant 0 : index
      %19 = vector.load %arg5[%c0_14, %c0_15] : memref<128x16xbf16, #tpu.memory_space<vmem>>, vector<128x16xbf16>
      tpu.vector_store %arg5[%c0_14, %c0_15], %18 {strides = array<i32>} : memref<128x16xbf16, #tpu.memory_space<vmem>>, vector<128x16xbf16>,
    } else {
    }
    return
  }
  func.func @transform_0(%arg0: i32, %arg1: i32) -> (i32, i32) {
    %c0_i32 = arith.constant 0 : i32
    return %arg0, %arg1 : i32, i32
  }
  func.func @transform_1(%arg0: i32, %arg1: i32) -> (i32, i32) {
    %c0_i32 = arith.constant 0 : i32
    %c0_i32_0 = arith.constant 0 : i32
    return %arg1, %c0_i32 : i32, i32
  }
  func.func @transform_2(%arg0: i32, %arg1: i32) -> (i32, i32) {
    %c0_i32 = arith.constant 0 : i32
    %c0_i32_0 = arith.constant 0 : i32
    %c0_i32_1 = arith.constant 0 : i32
    return %c0_i32, %c0_i32_0 : i32, i32
  }
  func.func @transform_3(%arg0: i32, %arg1: i32) -> (i32, i32) {
    %c0_i32 = arith.constant 0 : i32
    %c0_i32_0 = arith.constant 0 : i32
    return %arg0, %c0_i32 : i32, i32
  }
}

module attributes {stable_mosaic.version = 11 : i64} {
  func.func @_gcn23_kernel(%arg0: i32, %arg1: i32, %arg2: memref<128x128xbf16, #tpu.memory_space<vmem>>, %arg3: memref<128x16xbf16, #tpu.memory_space<vmem>>, %arg4: memref<16x9xf32, #tpu.memory_space<vmem>>, %arg5: memref<1x9xf32, #tpu.memory_space<vmem>>, %arg6: memref<128x8xf32, #tpu.memory_space<vmem>>, %arg7: memref<128x1xf32, #tpu.memory_space<vmem>>, %arg8: memref<128x16xf32, #tpu.memory_space<vmem>>) attributes {dimension_semantics = [#tpu.dimension_semantics<parallel>, #tpu.dimension_semantics<arbitrary>], iteration_bounds = array<i64: 2, 2>, scalar_prefetch = 0 : i64, scratch_operands = 1 : i64, tpu.core_type = #tpu.core_type<tc>, window_params = [{transform_indices = @transform_0, window_bounds = array<i64: 128, 128>}, {transform_indices = @transform_1, window_bounds = array<i64: 128, 16>}, {pipeline_mode = #tpu.pipeline_mode<synchronous>, transform_indices = @transform_2, window_bounds = array<i64: 16, 9>}, {pipeline_mode = #tpu.pipeline_mode<synchronous>, transform_indices = @transform_3, window_bounds = array<i64: 1, 9>}, {transform_indices = @transform_4, window_bounds = array<i64: 128, 8>}, {transform_indices = @transform_5, window_bounds = array<i64: 128, 1>}]} {
    %c0_i32 = arith.constant 0 : i32
    %0 = arith.cmpi eq, %arg1, %c0_i32 : i32
    %1 = arith.extui %0 : i1 to i32
    %c0_i32_0 = arith.constant 0 : i32
    %2 = arith.cmpi ne, %1, %c0_i32_0 : i32
    scf.if %2 {
      %cst_9 = arith.constant 0.000000e+00 : f32
      %12 = vector.broadcast %cst_9 : f32 to vector<128x16xf32>
      %c0_10 = arith.constant 0 : index
      %c0_11 = arith.constant 0 : index
      %13 = vector.load %arg8[%c0_10, %c0_11] : memref<128x16xf32, #tpu.memory_space<vmem>>, vector<128x16xf32>
      tpu.vector_store %arg8[%c0_10, %c0_11], %12 {strides = array<i32>} : memref<128x16xf32, #tpu.memory_space<vmem>>, vector<128x16xf32>,
    } else {
    }
    %c0 = arith.constant 0 : index
    %c0_1 = arith.constant 0 : index
    %3 = vector.load %arg8[%c0, %c0_1] : memref<128x16xf32, #tpu.memory_space<vmem>>, vector<128x16xf32>
    %c0_2 = arith.constant 0 : index
    %c0_3 = arith.constant 0 : index
    %4 = vector.load %arg2[%c0_2, %c0_3] : memref<128x128xbf16, #tpu.memory_space<vmem>>, vector<128x128xbf16>
    %c0_4 = arith.constant 0 : index
    %c0_5 = arith.constant 0 : index
    %5 = vector.load %arg3[%c0_4, %c0_5] : memref<128x16xbf16, #tpu.memory_space<vmem>>, vector<128x16xbf16>
    %cst = arith.constant dense<0.000000e+00> : vector<128x16xf32>
    %6 = tpu.matmul %4, %5, %cst {dimension_numbers = #tpu.dot_dimension_numbers<[1], [0], [0], [1], [0, 0, 1, 1], [], []>} : vector<128x128xbf16>, vector<128x16xbf16>, vector<128x16xf32> -> vector<128x16xf32>
    %7 = arith.addf %3, %6 : vector<128x16xf32>
    %c0_6 = arith.constant 0 : index
    %c0_7 = arith.constant 0 : index
    %8 = vector.load %arg8[%c0_6, %c0_7] : memref<128x16xf32, #tpu.memory_space<vmem>>, vector<128x16xf32>
    tpu.vector_store %arg8[%c0_6, %c0_7], %7 {strides = array<i32>} : memref<128x16xf32, #tpu.memory_space<vmem>>, vector<128x16xf32>,
    %c1_i32 = arith.constant 1 : i32
    %9 = arith.cmpi eq, %arg1, %c1_i32 : i32
    %10 = arith.extui %9 : i1 to i32
    %c0_i32_8 = arith.constant 0 : i32
    %11 = arith.cmpi ne, %10, %c0_i32_8 : i32
    scf.if %11 {
      %c0_9 = arith.constant 0 : index
      %c0_10 = arith.constant 0 : index
      %12 = vector.load %arg8[%c0_9, %c0_10] : memref<128x16xf32, #tpu.memory_space<vmem>>, vector<128x16xf32>
      %c0_11 = arith.constant 0 : index
      %c0_12 = arith.constant 0 : index
      %13 = vector.load %arg4[%c0_11, %c0_12] : memref<16x9xf32, #tpu.memory_space<vmem>>, vector<16x9xf32>
      %cst_13 = arith.constant dense<0.000000e+00> : vector<128x9xf32>
      %14 = tpu.matmul %12, %13, %cst_13 {dimension_numbers = #tpu.dot_dimension_numbers<[1], [0], [0], [1], [0, 0, 1, 1], [], []>} : vector<128x16xf32>, vector<16x9xf32>, vector<128x9xf32> -> vector<128x9xf32>
      %c0_14 = arith.constant 0 : index
      %c0_15 = arith.constant 0 : index
      %15 = vector.load %arg5[%c0_14, %c0_15] : memref<1x9xf32, #tpu.memory_space<vmem>>, vector<1x9xf32>
      %16 = vector.broadcast %15 : vector<1x9xf32> to vector<128x9xf32>
      %17 = arith.addf %14, %16 : vector<128x9xf32>
      %18 = vector.extract_strided_slice %17 {offsets = [0, 0], sizes = [128, 8], strides = [1, 1]} : vector<128x9xf32> to vector<128x8xf32>
      %c0_16 = arith.constant 0 : index
      %c0_17 = arith.constant 0 : index
      %19 = vector.load %arg6[%c0_16, %c0_17] : memref<128x8xf32, #tpu.memory_space<vmem>>, vector<128x8xf32>
      tpu.vector_store %arg6[%c0_16, %c0_17], %18 {strides = array<i32>} : memref<128x8xf32, #tpu.memory_space<vmem>>, vector<128x8xf32>,
      %20 = vector.extract_strided_slice %17 {offsets = [0, 8], sizes = [128, 1], strides = [1, 1]} : vector<128x9xf32> to vector<128x1xf32>
      %21 = arith.negf %20 : vector<128x1xf32>
      %22 = math.exp %21 : vector<128x1xf32>
      %cst_18 = arith.constant 1.000000e+00 : f32
      %23 = vector.broadcast %cst_18 : f32 to vector<128x1xf32>
      %24 = arith.addf %23, %22 : vector<128x1xf32>
      %25 = arith.divf %23, %24 : vector<128x1xf32>
      %c0_19 = arith.constant 0 : index
      %c0_20 = arith.constant 0 : index
      %26 = vector.load %arg7[%c0_19, %c0_20] : memref<128x1xf32, #tpu.memory_space<vmem>>, vector<128x1xf32>
      tpu.vector_store %arg7[%c0_19, %c0_20], %25 {strides = array<i32>} : memref<128x1xf32, #tpu.memory_space<vmem>>, vector<128x1xf32>,
    } else {
    }
    return
  }
  func.func @transform_0(%arg0: i32, %arg1: i32) -> (i32, i32) {
    %c0_i32 = arith.constant 0 : i32
    return %arg0, %arg1 : i32, i32
  }
  func.func @transform_1(%arg0: i32, %arg1: i32) -> (i32, i32) {
    %c0_i32 = arith.constant 0 : i32
    %c0_i32_0 = arith.constant 0 : i32
    return %arg1, %c0_i32 : i32, i32
  }
  func.func @transform_2(%arg0: i32, %arg1: i32) -> (i32, i32) {
    %c0_i32 = arith.constant 0 : i32
    %c0_i32_0 = arith.constant 0 : i32
    %c0_i32_1 = arith.constant 0 : i32
    return %c0_i32, %c0_i32_0 : i32, i32
  }
  func.func @transform_3(%arg0: i32, %arg1: i32) -> (i32, i32) {
    %c0_i32 = arith.constant 0 : i32
    %c0_i32_0 = arith.constant 0 : i32
    %c0_i32_1 = arith.constant 0 : i32
    return %c0_i32, %c0_i32_0 : i32, i32
  }
  func.func @transform_4(%arg0: i32, %arg1: i32) -> (i32, i32) {
    %c0_i32 = arith.constant 0 : i32
    %c0_i32_0 = arith.constant 0 : i32
    return %arg0, %c0_i32 : i32, i32
  }
  func.func @transform_5(%arg0: i32, %arg1: i32) -> (i32, i32) {
    %c0_i32 = arith.constant 0 : i32
    %c0_i32_0 = arith.constant 0 : i32
    return %arg0, %c0_i32 : i32, i32
  }
}

module attributes {stable_mosaic.version = 11 : i64} {
  func.func @_sim_kernel(%arg0: i32, %arg1: memref<128x8xf32, #tpu.memory_space<vmem>>, %arg2: memref<256x8xf32, #tpu.memory_space<vmem>>, %arg3: memref<128x1xf32, #tpu.memory_space<vmem>>, %arg4: memref<128x256xbf16, #tpu.memory_space<vmem>>) attributes {dimension_semantics = [#tpu.dimension_semantics<parallel>], iteration_bounds = array<i64: 2>, scalar_prefetch = 0 : i64, scratch_operands = 0 : i64, tpu.core_type = #tpu.core_type<tc>, window_params = [{transform_indices = @transform_0, window_bounds = array<i64: 128, 8>}, {pipeline_mode = #tpu.pipeline_mode<synchronous>, transform_indices = @transform_1, window_bounds = array<i64: 256, 8>}, {transform_indices = @transform_2, window_bounds = array<i64: 128, 1>}, {transform_indices = @transform_3, window_bounds = array<i64: 128, 256>}]} {
    %c0 = arith.constant 0 : index
    %c0_0 = arith.constant 0 : index
    %0 = vector.load %arg1[%c0, %c0_0] : memref<128x8xf32, #tpu.memory_space<vmem>>, vector<128x8xf32>
    %c0_1 = arith.constant 0 : index
    %c0_2 = arith.constant 0 : index
    %1 = vector.load %arg2[%c0_1, %c0_2] : memref<256x8xf32, #tpu.memory_space<vmem>>, vector<256x8xf32>
    %cst = arith.constant dense<0.000000e+00> : vector<128x256xf32>
    %2 = tpu.matmul %0, %1, %cst {dimension_numbers = #tpu.dot_dimension_numbers<[1], [1], [0], [0], [0, 0, 1, 0], [], []>} : vector<128x8xf32>, vector<256x8xf32>, vector<128x256xf32> -> vector<128x256xf32>
    %cst_3 = arith.constant dense<0xFF800000> : vector<128xf32>
    %3 = vector.multi_reduction <maximumf>, %2, %cst_3 [1] : vector<128x256xf32> to vector<128xf32>
    %4 = vector.shape_cast %3 : vector<128xf32> to vector<128x1xf32>
    %5 = vector.broadcast %4 : vector<128x1xf32> to vector<128x256xf32>
    %6 = arith.subf %2, %5 : vector<128x256xf32>
    %7 = math.exp %6 : vector<128x256xf32>
    %c0_4 = arith.constant 0 : index
    %c0_5 = arith.constant 0 : index
    %8 = vector.load %arg3[%c0_4, %c0_5] : memref<128x1xf32, #tpu.memory_space<vmem>>, vector<128x1xf32>
    %9 = vector.broadcast %8 : vector<128x1xf32> to vector<128x256xf32>
    %10 = arith.mulf %7, %9 : vector<128x256xf32>
    %cst_6 = arith.constant dense<0.000000e+00> : vector<128xf32>
    %11 = vector.multi_reduction <add>, %10, %cst_6 [1] : vector<128x256xf32> to vector<128xf32>
    %12 = vector.shape_cast %11 : vector<128xf32> to vector<128x1xf32>
    %13 = tpu.reciprocal %12 {approx = true} : vector<128x1xf32> -> vector<128x1xf32>
    %14 = vector.broadcast %13 : vector<128x1xf32> to vector<128x256xf32>
    %15 = arith.mulf %10, %14 : vector<128x256xf32>
    %cst_7 = arith.constant 5.000000e-01 : f32
    %16 = vector.broadcast %cst_7 : f32 to vector<128x256xf32>
    %17 = arith.mulf %16, %15 : vector<128x256xf32>
    %18 = math.tanh %17 : vector<128x256xf32>
    %cst_8 = arith.constant 5.000000e-01 : f32
    %19 = vector.broadcast %cst_8 : f32 to vector<128x256xf32>
    %20 = arith.mulf %19, %18 : vector<128x256xf32>
    %cst_9 = arith.constant 5.000000e-01 : f32
    %21 = vector.broadcast %cst_9 : f32 to vector<128x256xf32>
    %22 = arith.addf %20, %21 : vector<128x256xf32>
    %23 = arith.truncf %22 : vector<128x256xf32> to vector<128x256xbf16>
    %c0_10 = arith.constant 0 : index
    %c0_11 = arith.constant 0 : index
    %24 = vector.load %arg4[%c0_10, %c0_11] : memref<128x256xbf16, #tpu.memory_space<vmem>>, vector<128x256xbf16>
    tpu.vector_store %arg4[%c0_10, %c0_11], %23 {strides = array<i32>} : memref<128x256xbf16, #tpu.memory_space<vmem>>, vector<128x256xbf16>,
    return
  }
  func.func @transform_0(%arg0: i32) -> (i32, i32) {
    %c0_i32 = arith.constant 0 : i32
    %c0_i32_0 = arith.constant 0 : i32
    return %arg0, %c0_i32 : i32, i32
  }
  func.func @transform_1(%arg0: i32) -> (i32, i32) {
    %c0_i32 = arith.constant 0 : i32
    %c0_i32_0 = arith.constant 0 : i32
    %c0_i32_1 = arith.constant 0 : i32
    return %c0_i32, %c0_i32_0 : i32, i32
  }
  func.func @transform_2(%arg0: i32) -> (i32, i32) {
    %c0_i32 = arith.constant 0 : i32
    %c0_i32_0 = arith.constant 0 : i32
    return %arg0, %c0_i32 : i32, i32
  }
  func.func @transform_3(%arg0: i32) -> (i32, i32) {
    %c0_i32 = arith.constant 0 : i32
    %c0_i32_0 = arith.constant 0 : i32
    return %arg0, %c0_i32 : i32, i32
  }
}

</mosaic_0001>

<llo_original>
// kernel: encoder_forward.3
$region0: #{encoder_forward.3}
  #allocation0 [shape = 'u32[]', space=smem, size = 0x4, offset = 0x4, fixed_abs, tag = 'smem constant byte address 0x4 - core index']
  #allocation1 [shape = 'u32[144,128]{1,0:T(1,128)}', space=vmem, size = 0x12000, scoped, tag = 'internal scratch']
  #allocation2 [shape = 'f32[128,16]{1,0:T(8,128)}', space=vmem, size = 0x10000, scoped, tag = 'scratch operand']
  %s0 = inlined_call_operand.vmem [shape: bf16[256,256], index: 0, kind: input, shape index: {}]
  %s1 = inlined_call_operand.vmem [shape: bf16[256,16], index: 1, kind: input, shape index: {}]
  %s2 = inlined_call_operand.vmem [shape: f32[1,16], index: 2, kind: input, shape index: {}]
  %s3 = inlined_call_operand.vmem [shape: bf16[256,16], index: 3, kind: output, shape index: {}]
  %s4 = sld [smem:[#allocation0]]
  $region94: #{encoder_forward.3} parent=0
    _
  %s6 = ssub.s32 1, %s4
  %s7 = scalar_select 0, %s6, %s4
  $region1: #{encoder_forward.3} parent=0
    #allocation3 [shape = 'u8[65536]{0}', space=vmem, size = 0x10000, scoped, tag = 'input window, operand 0']
    loop: start=0, step=1, limit=6
    $region2: #{encoder_forward.3} parent=1 // loop_pre_header
      _
    $region3: #{encoder_forward.3} parent=1 // loop_header
      %s9 = sphi 0, %s13
      %p10 = scmp.ge.s32.totalorder %s9, 6
      %s16 = sphi 0, %s28
      %s17 = sphi 0, %s24
      %s18 = sphi 0, %s16
      %s19 = sphi 0, %s17
      %s20 = sphi 0, %s18
      %s21 = sphi 0, %s19
      %s33 = sphi 0, %s35
      %s36 = sphi 0, %s33
      %s37 = sphi 0, %s36
      %s53 = sphi 0, %s37
      %s59 = sphi 0, %s61
      %s62 = sphi 0, %s59
      %s63 = sphi 0, %s62
      %s79 = sphi 0, %s63
      %s83 = sphi 0, %s83
      %s85 = sphi 0, %s83
      %s86 = sphi 0, %s85
      %s100 = sphi 0, %s86
      %s106 = sphi 0, %s108
      %s109 = sphi 0, %s106
      %s110 = sphi 0, %s109
      %s126 = sphi 0, %s110
    $region4: #{encoder_forward.3} parent=1 // loop_header_branch
      %12 = sbr.rel (%p10) target = $region8
    $region5: #{encoder_forward.3} parent=1 // loop_body
      %s14 = ssub.s32 %s9, 1
      %s15 = ssub.s32 %s9, 2
      %s22 = sadd.s32 1, %s17
      %p23 = scmp.ge.s32.totalorder %s22, 2
      %s24 = scalar_select %p23, 0, %s22
      %s25 = sadd.s32 1, %s16
      %s26 = scalar_select %p23, %s25, %s16
      %p27 = scmp.ge.s32.totalorder %s26, 2
      %s28 = scalar_select %p27, 0, %s26
      %s29 = ssub.s32 %s16, %s28
      %s30 = ssub.s32 %s17, %s24
      %s31 = sor.u32 %s29, %s30
      %p32 = scmp.eq.s32.totalorder %s31, 0
      %s34 = sadd.s32 %s33, 1
      %s35 = scalar_select %p32, %s33, %s34
      %p38 = pneg %p32
      %p39 = scmp.eq.s32.totalorder %s9, 3
      %p40 = por %p38, %p39
      %p41 = scmp.ne.s32.totalorder %s33, %s36
      %p42 = scmp.eq.s32.totalorder %s9, 0
      %p43 = por %p41, %p42
      %p44 = scmp.ne.s32.totalorder %s33, %s36
      %p45 = scmp.eq.s32.totalorder %s14, 3
      %p46 = por %p44, %p45
      %p47 = scmp.ne.s32.totalorder %s36, %s37
      %p48 = scmp.eq.s32.totalorder %s14, 0
      %p49 = por %p47, %p48
      %p50 = scmp.ne.s32.totalorder %s36, %s37
      %p51 = scmp.eq.s32.totalorder %s15, 3
      %p52 = por %p50, %p51
      %p54 = scmp.ne.s32.totalorder %s37, %s53
      %p55 = scmp.eq.s32.totalorder %s15, 0
      %p56 = por %p54, %p55
      %s57 = ssub.s32 %s17, %s24
      %p58 = scmp.eq.s32.totalorder %s57, 0
      %s60 = sadd.s32 %s59, 1
      %s61 = scalar_select %p58, %s59, %s60
      %p64 = pneg %p58
      %p65 = scmp.eq.s32.totalorder %s9, 3
      %p66 = por %p64, %p65
      %p67 = scmp.ne.s32.totalorder %s59, %s62
      %p68 = scmp.eq.s32.totalorder %s9, 0
      %p69 = por %p67, %p68
      %p70 = scmp.ne.s32.totalorder %s59, %s62
      %p71 = scmp.eq.s32.totalorder %s14, 3
      %p72 = por %p70, %p71
      %p73 = scmp.ne.s32.totalorder %s62, %s63
      %p74 = scmp.eq.s32.totalorder %s14, 0
      %p75 = por %p73, %p74
      %p76 = scmp.ne.s32.totalorder %s62, %s63
      %p77 = scmp.eq.s32.totalorder %s15, 3
      %p78 = por %p76, %p77
      %p80 = scmp.ne.s32.totalorder %s63, %s79
      %p81 = scmp.eq.s32.totalorder %s15, 0
      %p82 = por %p80, %p81
      %s84 = sadd.s32 %s83, 1
      %p87 = scmp.eq.s32.totalorder %s9, 3
      %p88 = scmp.ne.s32.totalorder %s83, %s85
      %p89 = scmp.eq.s32.totalorder %s9, 0
      %p90 = por %p88, %p89
      %p91 = scmp.ne.s32.totalorder %s83, %s85
      %p92 = scmp.eq.s32.totalorder %s14, 3
      %p93 = por %p91, %p92
      %p94 = scmp.ne.s32.totalorder %s85, %s86
      %p95 = scmp.eq.s32.totalorder %s14, 0
      %p96 = por %p94, %p95
      %p97 = scmp.ne.s32.totalorder %s85, %s86
      %p98 = scmp.eq.s32.totalorder %s15, 3
      %p99 = por %p97, %p98
      %p101 = scmp.ne.s32.totalorder %s86, %s100
      %p102 = scmp.eq.s32.totalorder %s15, 0
      %p103 = por %p101, %p102
      %s104 = ssub.s32 %s16, %s28
      %p105 = scmp.eq.s32.totalorder %s104, 0
      %s107 = sadd.s32 %s106, 1
      %s108 = scalar_select %p105, %s106, %s107
      %p111 = pneg %p105
      %p112 = scmp.eq.s32.totalorder %s9, 3
      %p113 = por %p111, %p112
      %p114 = scmp.ne.s32.totalorder %s106, %s109
      %p115 = scmp.eq.s32.totalorder %s9, 0
      %p116 = por %p114, %p115
      %p117 = scmp.ne.s32.totalorder %s106, %s109
      %p118 = scmp.eq.s32.totalorder %s14, 3
      %p119 = por %p117, %p118
      %p120 = scmp.ne.s32.totalorder %s109, %s110
      %p121 = scmp.eq.s32.totalorder %s14, 0
      %p122 = por %p120, %p121
      %p123 = scmp.ne.s32.totalorder %s109, %s110
      %p124 = scmp.eq.s32.totalorder %s15, 3
      %p125 = por %p123, %p124
      %p127 = scmp.ne.s32.totalorder %s110, %s126
      %p128 = scmp.eq.s32.totalorder %s15, 0
      %p129 = por %p127, %p128
      %p130 = scmp.le.s32.totalorder 1, %s9
      %p131 = scmp.lt.s32.totalorder %s9, 5
      %p132 = pnand %p130, %p131
      %p133 = pneg %p132
      // Predicated region
      $region9: #{encoder_forward.3} parent=5 // pred_check
        _
      $region10: #{encoder_forward.3} parent=5 // pred_check_branch
        %135 = sbr.rel (%p132) target = $region12
      $region11: #{encoder_forward.3} parent=5 // pred_region
        %s136 = ssub.s32 %s9, 1
        // Predicated region
        $region13: #{encoder_forward.3} parent=11 // pred_check
          %p137 = pneg %p96
        $region14: #{encoder_forward.3} parent=11 // pred_check_branch
          %139 = sbr.rel (%p137) target = $region16
        $region15: #{encoder_forward.3} parent=11 // pred_region
          _
        $region16: #{encoder_forward.3} parent=11 // pred_fallthru
          _
      $region12: #{encoder_forward.3} parent=5 // pred_fallthru
        _
      %p140 = scmp.lt.s32.totalorder %s9, 4
      // Predicated region
      $region17: #{encoder_forward.3} parent=5 // pred_check
        %p141 = pneg %p140
      $region18: #{encoder_forward.3} parent=5 // pred_check_branch
        %143 = sbr.rel (%p141) target = $region20
      $region19: #{encoder_forward.3} parent=5 // pred_region
        // Predicated region
        $region21: #{encoder_forward.3} parent=19 // pred_check
          %p144 = pneg %p43
        $region22: #{encoder_forward.3} parent=19 // pred_check_branch
          %146 = sbr.rel (%p144) target = $region24
        $region23: #{encoder_forward.3} parent=19 // pred_region
          %s147 = sand.u32 %s33, 1
          %s148 = sand.u32 %s33, 1
          %s149 = smul.addr %s148, 64
          %s150 = scalar_lea.vmem [#allocation3], %s149
          %s151 = smul.u32 16, %s16
          %s152 = smul.addr %s151, 2
          %s153 = sadd.s32 %s17, %s152
          %s154 = smul.addr %s153, 4
          %s155 = scalar_lea.vmem %s0, %s154
          // Predicated region
          $region25: #{encoder_forward.3} parent=23 // pred_check
            _
          $region26: #{encoder_forward.3} parent=23 // pred_check_branch
            %157 = sbr.rel (0) target = $region28
          $region27: #{encoder_forward.3} parent=23 // pred_region
            // Predicated region
            $region29: #{encoder_forward.3} parent=27 // pred_check
              _
            $region30: #{encoder_forward.3} parent=27 // pred_check_branch
              %159 = sbr.rel target = $region32
            $region31: #{encoder_forward.3} parent=27 // pred_region
              // Predicated region
              $region44: #{encoder_forward.3} parent=31 // pred_check
                _
              $region45: #{encoder_forward.3} parent=31 // pred_check_branch
                %204 = sbr.rel (0) target = $region47
              $region46: #{encoder_forward.3} parent=31 // pred_region
                loop: start=0, step=1, limit=1
                $region48: #{encoder_forward.3} parent=46 // loop_pre_header
                  _
                $region49: #{encoder_forward.3} parent=46 // loop_header
                  %s206 = sphi 0, %s210
                  %p207 = scmp.ge.s32.totalorder %s206, 1
                  %s211 = sphi %s155, %s155
                  %s212 = sphi %s150, %s150
                $region50: #{encoder_forward.3} parent=46 // loop_header_branch
                  %209 = sbr.rel (%p207) target = $region54
                $region51: #{encoder_forward.3} parent=46 // loop_body
                  _
                $region52: #{encoder_forward.3} parent=46 // loop_footer
                  %s210 = sadd.s32 1, %s206
                $region53: #{encoder_forward.3} parent=46 // loop_footer_branch
                  %205 = sbr.rel target = $region49
                $region54: #{encoder_forward.3} parent=46 // loop_exit
                  _
                loop: start=0, step=1, limit=1
                $region55: #{encoder_forward.3} parent=46 // loop_pre_header
                  _
                $region56: #{encoder_forward.3} parent=46 // loop_header
                  %s215 = sphi 0, %s219
                  %p216 = scmp.ge.s32.totalorder %s215, 1
                  %s220 = sphi %s155, %s155
                  %s221 = sphi %s150, %s150
                $region57: #{encoder_forward.3} parent=46 // loop_header_branch
                  %218 = sbr.rel (%p216) target = $region61
                $region58: #{encoder_forward.3} parent=46 // loop_body
                  %v222 = vld [vmem:[%s220] sm:$0xf]
                  %223 = vst [vmem:[%s221] sm:$0xf] %v222
                  %v224 = vld [vmem:[%s220 + $0x8] sm:$0xf]
                  %225 = vst [vmem:[%s221 + $0x4] sm:$0xf] %v224
                  %v226 = vld [vmem:[%s220 + $0x10] sm:$0xf]
                  %227 = vst [vmem:[%s221 + $0x8] sm:$0xf] %v226
                  %v228 = vld [vmem:[%s220 + $0x18] sm:$0xf]
                  %229 = vst [vmem:[%s221 + $0xc] sm:$0xf] %v228
                  %v230 = vld [vmem:[%s220 + $0x20] sm:$0xf]
                  %231 = vst [vmem:[%s221 + $0x10] sm:$0xf] %v230
                  %v232 = vld [vmem:[%s220 + $0x28] sm:$0xf]
                  %233 = vst [vmem:[%s221 + $0x14] sm:$0xf] %v232
                  %v234 = vld [vmem:[%s220 + $0x30] sm:$0xf]
                  %235 = vst [vmem:[%s221 + $0x18] sm:$0xf] %v234
                  %v236 = vld [vmem:[%s220 + $0x38] sm:$0xf]
                  %237 = vst [vmem:[%s221 + $0x1c] sm:$0xf] %v236
                  %v238 = vld [vmem:[%s220 + $0x40] sm:$0xf]
                  %239 = vst [vmem:[%s221 + $0x20] sm:$0xf] %v238
                  %v240 = vld [vmem:[%s220 + $0x48] sm:$0xf]
                  %241 = vst [vmem:[%s221 + $0x24] sm:$0xf] %v240
                  %v242 = vld [vmem:[%s220 + $0x50] sm:$0xf]
                  %243 = vst [vmem:[%s221 + $0x28] sm:$0xf] %v242
                  %v244 = vld [vmem:[%s220 + $0x58] sm:$0xf]
                  %245 = vst [vmem:[%s221 + $0x2c] sm:$0xf] %v244
                  %v246 = vld [vmem:[%s220 + $0x60] sm:$0xf]
                  %247 = vst [vmem:[%s221 + $0x30] sm:$0xf] %v246
                  %v248 = vld [vmem:[%s220 + $0x68] sm:$0xf]
                  %249 = vst [vmem:[%s221 + $0x34] sm:$0xf] %v248
                  %v250 = vld [vmem:[%s220 + $0x70] sm:$0xf]
                  %251 = vst [vmem:[%s221 + $0x38] sm:$0xf] %v250
                  %v252 = vld [vmem:[%s220 + $0x78] sm:$0xf]
                  %253 = vst [vmem:[%s221 + $0x3c] sm:$0xf] %v252
                $region59: #{encoder_forward.3} parent=46 // loop_footer
                  %s219 = sadd.s32 1, %s215
                $region60: #{encoder_forward.3} parent=46 // loop_footer_branch
                  %214 = sbr.rel target = $region56
                $region61: #{encoder_forward.3} parent=46 // loop_exit
                  _
              $region47: #{encoder_forward.3} parent=31 // pred_fallthru
                _
            $region32: #{encoder_forward.3} parent=27 // pred_fallthru
              _
            // Predicated region
            $region33: #{encoder_forward.3} parent=27 // pred_check
              _
            $region34: #{encoder_forward.3} parent=27 // pred_check_branch
              %161 = sbr.rel (0) target = $region36
            $region35: #{encoder_forward.3} parent=27 // pred_region
              loop: start=0, step=1, limit=1
              $region37: #{encoder_forward.3} parent=35 // loop_pre_header
                _
              $region38: #{encoder_forward.3} parent=35 // loop_header
                %s164 = sphi 0, %s168
                %p165 = scmp.ge.s32.totalorder %s164, 1
                %s169 = sphi %s155, %s155
                %s170 = sphi %s150, %s150
              $region39: #{encoder_forward.3} parent=35 // loop_header_branch
                %167 = sbr.rel (%p165) target = $region43
              $region40: #{encoder_forward.3} parent=35 // loop_body
                %v171 = vld [vmem:[%s169] sm:$0xf]
                %172 = vst [vmem:[%s170] sm:$0xf] %v171
                %v173 = vld [vmem:[%s169 + $0x8] sm:$0xf]
                %174 = vst [vmem:[%s170 + $0x4] sm:$0xf] %v173
                %v175 = vld [vmem:[%s169 + $0x10] sm:$0xf]
                %176 = vst [vmem:[%s170 + $0x8] sm:$0xf] %v175
                %v177 = vld [vmem:[%s169 + $0x18] sm:$0xf]
                %178 = vst [vmem:[%s170 + $0xc] sm:$0xf] %v177
                %v179 = vld [vmem:[%s169 + $0x20] sm:$0xf]
                %180 = vst [vmem:[%s170 + $0x10] sm:$0xf] %v179
                %v181 = vld [vmem:[%s169 + $0x28] sm:$0xf]
                %182 = vst [vmem:[%s170 + $0x14] sm:$0xf] %v181
                %v183 = vld [vmem:[%s169 + $0x30] sm:$0xf]
                %184 = vst [vmem:[%s170 + $0x18] sm:$0xf] %v183
                %v185 = vld [vmem:[%s169 + $0x38] sm:$0xf]
                %186 = vst [vmem:[%s170 + $0x1c] sm:$0xf] %v185
                %v187 = vld [vmem:[%s169 + $0x40] sm:$0xf]
                %188 = vst [vmem:[%s170 + $0x20] sm:$0xf] %v187
                %v189 = vld [vmem:[%s169 + $0x48] sm:$0xf]
                %190 = vst [vmem:[%s170 + $0x24] sm:$0xf] %v189
                %v191 = vld [vmem:[%s169 + $0x50] sm:$0xf]
                %192 = vst [vmem:[%s170 + $0x28] sm:$0xf] %v191
                %v193 = vld [vmem:[%s169 + $0x58] sm:$0xf]
                %194 = vst [vmem:[%s170 + $0x2c] sm:$0xf] %v193
                %v195 = vld [vmem:[%s169 + $0x60] sm:$0xf]
                %196 = vst [vmem:[%s170 + $0x30] sm:$0xf] %v195
                %v197 = vld [vmem:[%s169 + $0x68] sm:$0xf]
                %198 = vst [vmem:[%s170 + $0x34] sm:$0xf] %v197
                %v199 = vld [vmem:[%s169 + $0x70] sm:$0xf]
                %200 = vst [vmem:[%s170 + $0x38] sm:$0xf] %v199
                %v201 = vld [vmem:[%s169 + $0x78] sm:$0xf]
                %202 = vst [vmem:[%s170 + $0x3c] sm:$0xf] %v201
              $region41: #{encoder_forward.3} parent=35 // loop_footer
                %s168 = sadd.s32 1, %s164
              $region42: #{encoder_forward.3} parent=35 // loop_footer_branch
                %163 = sbr.rel target = $region38
              $region43: #{encoder_forward.3} parent=35 // loop_exit
                _
            $region36: #{encoder_forward.3} parent=27 // pred_fallthru
              _
          $region28: #{encoder_forward.3} parent=23 // pred_fallthru
            _
          %254 = vnop
        $region24: #{encoder_forward.3} parent=19 // pred_fallthru
          _
        // Predicated region
        $region62: #{encoder_forward.3} parent=19 // pred_check
          %p255 = pneg %p69
        $region63: #{encoder_forward.3} parent=19 // pred_check_branch
          %257 = sbr.rel (%p255) target = $region65
        $region64: #{encoder_forward.3} parent=19 // pred_region
          %s258 = smul.u32 16, %s17
          %p259 = scmp.lt.s32.totalorder %s258, 31
          %s260 = scalar_select %p259, %s258, 31
          %s261 = smul.addr %s260, 4
          %s262 = scalar_lea.vmem %s1, %s261
          %s263 = smul.u32 16, %s17
        $region65: #{encoder_forward.3} parent=19 // pred_fallthru
          _
      $region20: #{encoder_forward.3} parent=5 // pred_fallthru
        _
      %p264 = scmp.le.s32.totalorder 1, %s9
      %p265 = scmp.lt.s32.totalorder %s9, 5
      %p266 = pnand %p264, %p265
      %p267 = pneg %p266
      // Predicated region
      $region66: #{encoder_forward.3} parent=5 // pred_check
        _
      $region67: #{encoder_forward.3} parent=5 // pred_check_branch
        %269 = sbr.rel (%p266) target = $region69
      $region68: #{encoder_forward.3} parent=5 // pred_region
        %s270 = ssub.s32 %s9, 1
        %s271 = sand.u32 %s36, 1
        %s272 = sand.u32 %s36, 1
        %s273 = smul.addr %s272, 64
        %s274 = scalar_lea.vmem [#allocation3], %s273
        // Predicated region
        $region70: #{encoder_forward.3} parent=68 // pred_check
          %p275 = pneg %p49
        $region71: #{encoder_forward.3} parent=68 // pred_check_branch
          %277 = sbr.rel (%p275) target = $region73
        $region72: #{encoder_forward.3} parent=68 // pred_region
          _
        $region73: #{encoder_forward.3} parent=68 // pred_fallthru
          _
        %s278 = sand.u32 %s36, 1
        %s279 = sand.u32 %s36, 1
        %s280 = smul.addr %s279, 64
        %s281 = scalar_lea.vmem [#allocation3], %s280
        %p282 = pneg %p49
        %p283 = pneg %p46
        %s284 = smul.u32 16, %s19
        %p285 = scmp.lt.s32.totalorder %s284, 31
        %s286 = scalar_select %p285, %s284, 31
        %s287 = smul.addr %s286, 4
        %s288 = scalar_lea.vmem %s1, %s287
        %p289 = pneg %p75
        %p290 = pneg %p72
        %p291 = pneg %p96
        %p292 = pneg %p93
        %p293 = pneg %p122
        %p294 = pneg %p119
        %s295 = smul.u32 16, %s18
        %p296 = scmp.lt.s32.totalorder %s295, 31
        %s297 = scalar_select %p296, %s295, 31
        %s298 = smul.addr %s297, 4
        %s299 = scalar_lea.vmem %s3, %s298
        %s300 = smul.u32 16, %s18
        %s301 = smul.u32 16, %s19
        %p302 = scmp.lt.s32.totalorder %s301, 31
        %s303 = scalar_select %p302, %s301, 31
        %s304 = smul.addr %s303, 4
        %s305 = scalar_lea.vmem %s1, %s304
        %s306 = smul.u32 16, %s19
        %s307 = smul.u32 16, %s18
        %p308 = scmp.lt.s32.totalorder %s307, 31
        %s309 = scalar_select %p308, %s307, 31
        %s310 = smul.addr %s309, 4
        %s311 = scalar_lea.vmem %s3, %s310
        %s312 = smul.u32 16, %s18
        %p314 = scmp.eq.s32.totalorder %s19, 0
        // Predicated region
        $region74: #{encoder_forward.3} parent=68 // pred_check
          %p315 = pneg %p314
        $region75: #{encoder_forward.3} parent=68 // pred_check_branch
          %317 = sbr.rel (%p315) target = $region77
        $region76: #{encoder_forward.3} parent=68 // pred_region
          %vm318 = vcmask 130048
          %319 = vst.msk [vmem:[#allocation2] sm:$0xff] %vm318, 0.0
          %320 = vst.msk [vmem:[#allocation2 + $0x8] sm:$0xff] %vm318, 0.0
          %321 = vst.msk [vmem:[#allocation2 + $0x10] sm:$0xff] %vm318, 0.0
          %322 = vst.msk [vmem:[#allocation2 + $0x18] sm:$0xff] %vm318, 0.0
          %323 = vst.msk [vmem:[#allocation2 + $0x20] sm:$0xff] %vm318, 0.0
          %324 = vst.msk [vmem:[#allocation2 + $0x28] sm:$0xff] %vm318, 0.0
          %325 = vst.msk [vmem:[#allocation2 + $0x30] sm:$0xff] %vm318, 0.0
          %326 = vst.msk [vmem:[#allocation2 + $0x38] sm:$0xff] %vm318, 0.0
          %327 = vst.msk [vmem:[#allocation2 + $0x40] sm:$0xff] %vm318, 0.0
          %328 = vst.msk [vmem:[#allocation2 + $0x48] sm:$0xff] %vm318, 0.0
          %329 = vst.msk [vmem:[#allocation2 + $0x50] sm:$0xff] %vm318, 0.0
          %330 = vst.msk [vmem:[#allocation2 + $0x58] sm:$0xff] %vm318, 0.0
          %331 = vst.msk [vmem:[#allocation2 + $0x60] sm:$0xff] %vm318, 0.0
          %332 = vst.msk [vmem:[#allocation2 + $0x68] sm:$0xff] %vm318, 0.0
          %333 = vst.msk [vmem:[#allocation2 + $0x70] sm:$0xff] %vm318, 0.0
          %334 = vst.msk [vmem:[#allocation2 + $0x78] sm:$0xff] %vm318, 0.0
        $region77: #{encoder_forward.3} parent=68 // pred_fallthru
          _
        %v335 = vld [vmem:[#allocation2] sm:$0xff]
        %v336 = vld [vmem:[#allocation2 + $0x8] sm:$0xff]
        %v337 = vld [vmem:[#allocation2 + $0x10] sm:$0xff]
        %v338 = vld [vmem:[#allocation2 + $0x18] sm:$0xff]
        %v339 = vld [vmem:[#allocation2 + $0x20] sm:$0xff]
        %v340 = vld [vmem:[#allocation2 + $0x28] sm:$0xff]
        %v341 = vld [vmem:[#allocation2 + $0x30] sm:$0xff]
        %v342 = vld [vmem:[#allocation2 + $0x38] sm:$0xff]
        %v343 = vld [vmem:[#allocation2 + $0x40] sm:$0xff]
        %v344 = vld [vmem:[#allocation2 + $0x48] sm:$0xff]
        %v345 = vld [vmem:[#allocation2 + $0x50] sm:$0xff]
        %v346 = vld [vmem:[#allocation2 + $0x58] sm:$0xff]
        %v347 = vld [vmem:[#allocation2 + $0x60] sm:$0xff]
        %v348 = vld [vmem:[#allocation2 + $0x68] sm:$0xff]
        %v349 = vld [vmem:[#allocation2 + $0x70] sm:$0xff]
        %v350 = vld [vmem:[#allocation2 + $0x78] sm:$0xff]
        %v351 = vld [vmem:[%s274] sm:$0xf]
        %v352 = vld [vmem:[%s274 + $0x4] sm:$0xf]
        %v353 = vld [vmem:[%s274 + $0x8] sm:$0xf]
        %v354 = vld [vmem:[%s274 + $0xc] sm:$0xf]
        %v355 = vld [vmem:[%s274 + $0x10] sm:$0xf]
        %v356 = vld [vmem:[%s274 + $0x14] sm:$0xf]
        %v357 = vld [vmem:[%s274 + $0x18] sm:$0xf]
        %v358 = vld [vmem:[%s274 + $0x1c] sm:$0xf]
        %v359 = vld [vmem:[%s274 + $0x20] sm:$0xf]
        %v360 = vld [vmem:[%s274 + $0x24] sm:$0xf]
        %v361 = vld [vmem:[%s274 + $0x28] sm:$0xf]
        %v362 = vld [vmem:[%s274 + $0x2c] sm:$0xf]
        %v363 = vld [vmem:[%s274 + $0x30] sm:$0xf]
        %v364 = vld [vmem:[%s274 + $0x34] sm:$0xf]
        %v365 = vld [vmem:[%s274 + $0x38] sm:$0xf]
        %v366 = vld [vmem:[%s274 + $0x3c] sm:$0xf]
        %v367 = vld [vmem:[%s305] sm:$0xf]
        %v368 = vld [vmem:[%s305 + $0x4] sm:$0xf]
        %v369 = vld [vmem:[%s305 + $0x8] sm:$0xf]
        %v370 = vld [vmem:[%s305 + $0xc] sm:$0xf]
        %v371 = vld [vmem:[%s305 + $0x10] sm:$0xf]
        %v372 = vld [vmem:[%s305 + $0x14] sm:$0xf]
        %v373 = vld [vmem:[%s305 + $0x18] sm:$0xf]
        %v374 = vld [vmem:[%s305 + $0x1c] sm:$0xf]
        %v375 = vld [vmem:[%s305 + $0x20] sm:$0xf]
        %v376 = vld [vmem:[%s305 + $0x24] sm:$0xf]
        %v377 = vld [vmem:[%s305 + $0x28] sm:$0xf]
        %v378 = vld [vmem:[%s305 + $0x2c] sm:$0xf]
        %v379 = vld [vmem:[%s305 + $0x30] sm:$0xf]
        %v380 = vld [vmem:[%s305 + $0x34] sm:$0xf]
        %v381 = vld [vmem:[%s305 + $0x38] sm:$0xf]
        %v382 = vld [vmem:[%s305 + $0x3c] sm:$0xf]
        %v399 = vunpack.c.l.b16 %v351
        %v400 = vunpack.c.l.b16 %v352
        %v401 = vunpack.c.l.b16 %v353
        %v402 = vunpack.c.l.b16 %v354
        %v403 = vunpack.c.l.b16 %v355
        %v404 = vunpack.c.l.b16 %v356
        %v405 = vunpack.c.l.b16 %v357
        %v406 = vunpack.c.l.b16 %v358
        %v407 = vunpack.c.l.b16 %v359
        %v408 = vunpack.c.l.b16 %v360
        %v409 = vunpack.c.l.b16 %v361
        %v410 = vunpack.c.l.b16 %v362
        %v411 = vunpack.c.l.b16 %v363
        %v412 = vunpack.c.l.b16 %v364
        %v413 = vunpack.c.l.b16 %v365
        %v414 = vunpack.c.l.b16 %v366
        %v415 = vpack.c.b16 %v400, %v399
        %v416 = vpack.c.b16 %v402, %v401
        %v417 = vpack.c.b16 %v404, %v403
        %v418 = vpack.c.b16 %v406, %v405
        %v419 = vpack.c.b16 %v408, %v407
        %v420 = vpack.c.b16 %v410, %v409
        %v421 = vpack.c.b16 %v412, %v411
        %v422 = vpack.c.b16 %v414, %v413
        %v447 = vunpack.c.l.b16 %v367
        %v448 = vunpack.c.l.b16 %v368
        %v449 = vunpack.c.l.b16 %v369
        %v450 = vunpack.c.l.b16 %v370
        %v451 = vunpack.c.l.b16 %v371
        %v452 = vunpack.c.l.b16 %v372
        %v453 = vunpack.c.l.b16 %v373
        %v454 = vunpack.c.l.b16 %v374
        %v455 = vunpack.c.l.b16 %v375
        %v456 = vunpack.c.l.b16 %v376
        %v457 = vunpack.c.l.b16 %v377
        %v458 = vunpack.c.l.b16 %v378
        %v459 = vunpack.c.l.b16 %v379
        %v460 = vunpack.c.l.b16 %v380
        %v461 = vunpack.c.l.b16 %v381
        %v462 = vunpack.c.l.b16 %v382
        %v463 = vpack.c.b16 %v448, %v447
        %v464 = vpack.c.b16 %v450, %v449
        %v465 = vpack.c.b16 %v452, %v451
        %v466 = vpack.c.b16 %v454, %v453
        %v467 = vpack.c.b16 %v456, %v455
        %v468 = vpack.c.b16 %v458, %v457
        %v469 = vpack.c.b16 %v460, %v459
        %v470 = vpack.c.b16 %v462, %v461
        %479 = vmatprep.subr.bf16.mxu0 0
        %480 = vmatpush1.bf16.msra.mxu0 %v463
        %481 = vmatprep.subr.bf16.mxu0 0
        %482 = vmatpush1.bf16.msra.mxu0 %v464
        %483 = vmatprep.subr.bf16.mxu0 0
        %484 = vmatpush1.bf16.msra.mxu0 %v465
        %485 = vmatprep.subr.bf16.mxu0 0
        %486 = vmatpush1.bf16.msra.mxu0 %v466
        %487 = vmatprep.subr.bf16.mxu0 0
        %488 = vmatpush1.bf16.msra.mxu0 %v467
        %489 = vmatprep.subr.bf16.mxu0 0
        %490 = vmatpush1.bf16.msra.mxu0 %v468
        %491 = vmatprep.subr.bf16.mxu0 0
        %492 = vmatpush1.bf16.msra.mxu0 %v469
        %493 = vmatprep.subr.bf16.mxu0 0
        %494 = vmatpush1.bf16.msra.mxu0 %v470
        %495 = vmatprep.subr.bf16.mxu0 0
        %496 = vmatpush1.bf16.msra.mxu0 0
        %497 = vmatprep.subr.bf16.mxu0 0
        %498 = vmatpush1.bf16.msra.mxu0 0
        %499 = vmatprep.subr.bf16.mxu0 0
        %500 = vmatpush1.bf16.msra.mxu0 0
        %501 = vmatprep.subr.bf16.mxu0 0
        %502 = vmatpush1.bf16.msra.mxu0 0
        %503 = vmatprep.subr.bf16.mxu0 0
        %504 = vmatpush1.bf16.msra.mxu0 0
        %505 = vmatprep.subr.bf16.mxu0 0
        %506 = vmatpush1.bf16.msra.mxu0 0
        %507 = vmatprep.subr.bf16.mxu0 0
        %508 = vmatpush1.bf16.msra.mxu0 0
        %509 = vmatprep.subr.bf16.mxu0 0
        %510 = vmatpush1.bf16.msra.mxu0 0
        %511 = vmatprep.mubr.bf16.mxu0 0
        %512 = vmatmul.mubr.bf16.gmra.mrb[0].mxu0 %v415
        %v513 = vpop.f32.mrb[0].mxu0
        %v514 = vadd.f32 0.0, %v513
        %v515 = vpop.f32.mrb[0].mxu0
        %v516 = vpop.f32.mrb[0].mxu0
        %v517 = vadd.f32 0.0, %v516
        %v518 = vpop.f32.mrb[0].mxu0
        %519 = vmatprep.mubr.bf16.mxu0 0
        %520 = vmatmul.mubr.bf16.gmra.mrb[0].mxu0 %v416
        %v521 = vpop.f32.mrb[0].mxu0
        %v522 = vadd.f32 0.0, %v521
        %v523 = vpop.f32.mrb[0].mxu0
        %v524 = vpop.f32.mrb[0].mxu0
        %v525 = vadd.f32 0.0, %v524
        %v526 = vpop.f32.mrb[0].mxu0
        %527 = vmatprep.mubr.bf16.mxu0 0
        %528 = vmatmul.mubr.bf16.gmra.mrb[0].mxu0 %v417
        %v529 = vpop.f32.mrb[0].mxu0
        %v530 = vadd.f32 0.0, %v529
        %v531 = vpop.f32.mrb[0].mxu0
        %v532 = vpop.f32.mrb[0].mxu0
        %v533 = vadd.f32 0.0, %v532
        %v534 = vpop.f32.mrb[0].mxu0
        %535 = vmatprep.mubr.bf16.mxu0 0
        %536 = vmatmul.mubr.bf16.gmra.mrb[0].mxu0 %v418
        %v537 = vpop.f32.mrb[0].mxu0
        %v538 = vadd.f32 0.0, %v537
        %v539 = vpop.f32.mrb[0].mxu0
        %v540 = vpop.f32.mrb[0].mxu0
        %v541 = vadd.f32 0.0, %v540
        %v542 = vpop.f32.mrb[0].mxu0
        %543 = vmatprep.mubr.bf16.mxu0 0
        %544 = vmatmul.mubr.bf16.gmra.mrb[0].mxu0 %v419
        %v545 = vpop.f32.mrb[0].mxu0
        %v546 = vadd.f32 0.0, %v545
        %v547 = vpop.f32.mrb[0].mxu0
        %v548 = vpop.f32.mrb[0].mxu0
        %v549 = vadd.f32 0.0, %v548
        %v550 = vpop.f32.mrb[0].mxu0
        %551 = vmatprep.mubr.bf16.mxu0 0
        %552 = vmatmul.mubr.bf16.gmra.mrb[0].mxu0 %v420
        %v553 = vpop.f32.mrb[0].mxu0
        %v554 = vadd.f32 0.0, %v553
        %v555 = vpop.f32.mrb[0].mxu0
        %v556 = vpop.f32.mrb[0].mxu0
        %v557 = vadd.f32 0.0, %v556
        %v558 = vpop.f32.mrb[0].mxu0
        %559 = vmatprep.mubr.bf16.mxu0 0
        %560 = vmatmul.mubr.bf16.gmra.mrb[0].mxu0 %v421
        %v561 = vpop.f32.mrb[0].mxu0
        %v562 = vadd.f32 0.0, %v561
        %v563 = vpop.f32.mrb[0].mxu0
        %v564 = vpop.f32.mrb[0].mxu0
        %v565 = vadd.f32 0.0, %v564
        %v566 = vpop.f32.mrb[0].mxu0
        %567 = vmatprep.mubr.bf16.mxu0 0
        %568 = vmatmul.mubr.bf16.gmra.mrb[0].mxu0 %v422
        %v569 = vpop.f32.mrb[0].mxu0
        %v570 = vadd.f32 0.0, %v569
        %v571 = vpop.f32.mrb[0].mxu0
        %v572 = vpop.f32.mrb[0].mxu0
        %v573 = vadd.f32 0.0, %v572
        %v574 = vpop.f32.mrb[0].mxu0
        %575 = vdwg.mxu0
        %v576 = vadd.f32 %v335, %v514
        %v577 = vadd.f32 %v336, %v517
        %v578 = vadd.f32 %v337, %v522
        %v579 = vadd.f32 %v338, %v525
        %v580 = vadd.f32 %v339, %v530
        %v581 = vadd.f32 %v340, %v533
        %v582 = vadd.f32 %v341, %v538
        %v583 = vadd.f32 %v342, %v541
        %v584 = vadd.f32 %v343, %v546
        %v585 = vadd.f32 %v344, %v549
        %v586 = vadd.f32 %v345, %v554
        %v587 = vadd.f32 %v346, %v557
        %v588 = vadd.f32 %v347, %v562
        %v589 = vadd.f32 %v348, %v565
        %v590 = vadd.f32 %v349, %v570
        %v591 = vadd.f32 %v350, %v573
        %vm592 = vcmask 130048
        %593 = vst.msk [vmem:[#allocation2] sm:$0xff] %vm592, %v576
        %594 = vst.msk [vmem:[#allocation2 + $0x8] sm:$0xff] %vm592, %v577
        %595 = vst.msk [vmem:[#allocation2 + $0x10] sm:$0xff] %vm592, %v578
        %596 = vst.msk [vmem:[#allocation2 + $0x18] sm:$0xff] %vm592, %v579
        %597 = vst.msk [vmem:[#allocation2 + $0x20] sm:$0xff] %vm592, %v580
        %598 = vst.msk [vmem:[#allocation2 + $0x28] sm:$0xff] %vm592, %v581
        %599 = vst.msk [vmem:[#allocation2 + $0x30] sm:$0xff] %vm592, %v582
        %600 = vst.msk [vmem:[#allocation2 + $0x38] sm:$0xff] %vm592, %v583
        %601 = vst.msk [vmem:[#allocation2 + $0x40] sm:$0xff] %vm592, %v584
        %602 = vst.msk [vmem:[#allocation2 + $0x48] sm:$0xff] %vm592, %v585
        %603 = vst.msk [vmem:[#allocation2 + $0x50] sm:$0xff] %vm592, %v586
        %604 = vst.msk [vmem:[#allocation2 + $0x58] sm:$0xff] %vm592, %v587
        %605 = vst.msk [vmem:[#allocation2 + $0x60] sm:$0xff] %vm592, %v588
        %606 = vst.msk [vmem:[#allocation2 + $0x68] sm:$0xff] %vm592, %v589
        %607 = vst.msk [vmem:[#allocation2 + $0x70] sm:$0xff] %vm592, %v590
        %608 = vst.msk [vmem:[#allocation2 + $0x78] sm:$0xff] %vm592, %v591
        %p609 = scmp.eq.s32.totalorder %s19, 1
        // Predicated region
        $region78: #{encoder_forward.3} parent=68 // pred_check
          %p610 = pneg %p609
        $region79: #{encoder_forward.3} parent=68 // pred_check_branch
          %612 = sbr.rel (%p610) target = $region81
        $region80: #{encoder_forward.3} parent=68 // pred_region
          %v613 = vld [vmem:[#allocation2] sm:$0xff]
          %v614 = vld [vmem:[#allocation2 + $0x8] sm:$0xff]
          %v615 = vld [vmem:[#allocation2 + $0x10] sm:$0xff]
          %v616 = vld [vmem:[#allocation2 + $0x18] sm:$0xff]
          %v617 = vld [vmem:[#allocation2 + $0x20] sm:$0xff]
          %v618 = vld [vmem:[#allocation2 + $0x28] sm:$0xff]
          %v619 = vld [vmem:[#allocation2 + $0x30] sm:$0xff]
          %v620 = vld [vmem:[#allocation2 + $0x38] sm:$0xff]
          %v621 = vld [vmem:[#allocation2 + $0x40] sm:$0xff]
          %v622 = vld [vmem:[#allocation2 + $0x48] sm:$0xff]
          %v623 = vld [vmem:[#allocation2 + $0x50] sm:$0xff]
          %v624 = vld [vmem:[#allocation2 + $0x58] sm:$0xff]
          %v625 = vld [vmem:[#allocation2 + $0x60] sm:$0xff]
          %v626 = vld [vmem:[#allocation2 + $0x68] sm:$0xff]
          %v627 = vld [vmem:[#allocation2 + $0x70] sm:$0xff]
          %v628 = vld [vmem:[#allocation2 + $0x78] sm:$0xff]
          %v629 = vld [vmem:[%s2] sm:$0x1]
          %v631 = vlaneseq
          %v632 = vshrl.u32 %v631, 7
          %v633 = vsub.s32 0, %v632
          %v634 = vrot.slane %v629, %v633
          %v636 = vadd.f32 %v613, %v634
          %v637 = vadd.f32 %v614, %v634
          %v638 = vadd.f32 %v615, %v634
          %v639 = vadd.f32 %v616, %v634
          %v640 = vadd.f32 %v617, %v634
          %v641 = vadd.f32 %v618, %v634
          %v642 = vadd.f32 %v619, %v634
          %v643 = vadd.f32 %v620, %v634
          %v644 = vadd.f32 %v621, %v634
          %v645 = vadd.f32 %v622, %v634
          %v646 = vadd.f32 %v623, %v634
          %v647 = vadd.f32 %v624, %v634
          %v648 = vadd.f32 %v625, %v634
          %v649 = vadd.f32 %v626, %v634
          %v650 = vadd.f32 %v627, %v634
          %v651 = vadd.f32 %v628, %v634
          %v652 = vmax.f32 %v636, 0.0
          %v653 = vmax.f32 %v637, 0.0
          %v654 = vmax.f32 %v638, 0.0
          %v655 = vmax.f32 %v639, 0.0
          %v656 = vmax.f32 %v640, 0.0
          %v657 = vmax.f32 %v641, 0.0
          %v658 = vmax.f32 %v642, 0.0
          %v659 = vmax.f32 %v643, 0.0
          %v660 = vmax.f32 %v644, 0.0
          %v661 = vmax.f32 %v645, 0.0
          %v662 = vmax.f32 %v646, 0.0
          %v663 = vmax.f32 %v647, 0.0
          %v664 = vmax.f32 %v648, 0.0
          %v665 = vmax.f32 %v649, 0.0
          %v666 = vmax.f32 %v650, 0.0
          %v667 = vmax.f32 %v651, 0.0
          %v668 = vpack.c.bf16 %v653, %v652
          %v669 = vpack.c.bf16 %v655, %v654
          %v670 = vpack.c.bf16 %v657, %v656
          %v671 = vpack.c.bf16 %v659, %v658
          %v672 = vpack.c.bf16 %v661, %v660
          %v673 = vpack.c.bf16 %v663, %v662
          %v674 = vpack.c.bf16 %v665, %v664
          %v675 = vpack.c.bf16 %v667, %v666
          %v684 = vunpack.c.l.b16 %v668
          %v685 = vunpack.c.h.b16 %v668
          %v686 = vunpack.c.l.b16 %v669
          %v687 = vunpack.c.h.b16 %v669
          %v688 = vunpack.c.l.b16 %v670
          %v689 = vunpack.c.h.b16 %v670
          %v690 = vunpack.c.l.b16 %v671
          %v691 = vunpack.c.h.b16 %v671
          %v692 = vunpack.c.l.b16 %v672
          %v693 = vunpack.c.h.b16 %v672
          %v694 = vunpack.c.l.b16 %v673
          %v695 = vunpack.c.h.b16 %v673
          %v696 = vunpack.c.l.b16 %v674
          %v697 = vunpack.c.h.b16 %v674
          %v698 = vunpack.c.l.b16 %v675
          %v699 = vunpack.c.h.b16 %v675
          %v700 = vpack.c.b16 %v684, %v684
          %v701 = vpack.c.b16 %v685, %v685
          %v702 = vpack.c.b16 %v686, %v686
          %v703 = vpack.c.b16 %v687, %v687
          %v704 = vpack.c.b16 %v688, %v688
          %v705 = vpack.c.b16 %v689, %v689
          %v706 = vpack.c.b16 %v690, %v690
          %v707 = vpack.c.b16 %v691, %v691
          %v708 = vpack.c.b16 %v692, %v692
          %v709 = vpack.c.b16 %v693, %v693
          %v710 = vpack.c.b16 %v694, %v694
          %v711 = vpack.c.b16 %v695, %v695
          %v712 = vpack.c.b16 %v696, %v696
          %v713 = vpack.c.b16 %v697, %v697
          %v714 = vpack.c.b16 %v698, %v698
          %v715 = vpack.c.b16 %v699, %v699
          %vm732 = vcmask 125952
          %733 = vst.msk [vmem:[%s311] sm:$0xf] %vm732, %v700
          %734 = vst.msk [vmem:[%s311 + $0x4] sm:$0xf] %vm732, %v701
          %735 = vst.msk [vmem:[%s311 + $0x8] sm:$0xf] %vm732, %v702
          %736 = vst.msk [vmem:[%s311 + $0xc] sm:$0xf] %vm732, %v703
          %737 = vst.msk [vmem:[%s311 + $0x10] sm:$0xf] %vm732, %v704
          %738 = vst.msk [vmem:[%s311 + $0x14] sm:$0xf] %vm732, %v705
          %739 = vst.msk [vmem:[%s311 + $0x18] sm:$0xf] %vm732, %v706
          %740 = vst.msk [vmem:[%s311 + $0x1c] sm:$0xf] %vm732, %v707
          %741 = vst.msk [vmem:[%s311 + $0x20] sm:$0xf] %vm732, %v708
          %742 = vst.msk [vmem:[%s311 + $0x24] sm:$0xf] %vm732, %v709
          %743 = vst.msk [vmem:[%s311 + $0x28] sm:$0xf] %vm732, %v710
          %744 = vst.msk [vmem:[%s311 + $0x2c] sm:$0xf] %vm732, %v711
          %745 = vst.msk [vmem:[%s311 + $0x30] sm:$0xf] %vm732, %v712
          %746 = vst.msk [vmem:[%s311 + $0x34] sm:$0xf] %vm732, %v713
          %747 = vst.msk [vmem:[%s311 + $0x38] sm:$0xf] %vm732, %v714
          %748 = vst.msk [vmem:[%s311 + $0x3c] sm:$0xf] %vm732, %v715
        $region81: #{encoder_forward.3} parent=68 // pred_fallthru
          _
        %s749 = smul.u32 16, %s18
        %p750 = scmp.lt.s32.totalorder %s749, 31
        %s751 = scalar_select %p750, %s749, 31
        %s752 = smul.addr %s751, 4
        %s753 = scalar_lea.vmem %s3, %s752
        // Predicated region
        $region82: #{encoder_forward.3} parent=68 // pred_check
          %p754 = pneg %p119
        $region83: #{encoder_forward.3} parent=68 // pred_check_branch
          %756 = sbr.rel (%p754) target = $region85
        $region84: #{encoder_forward.3} parent=68 // pred_region
          %s757 = smul.u32 16, %s18
        $region85: #{encoder_forward.3} parent=68 // pred_fallthru
          _
      $region69: #{encoder_forward.3} parent=5 // pred_fallthru
        _
      %p758 = scmp.le.s32.totalorder 2, %s9
      // Predicated region
      $region86: #{encoder_forward.3} parent=5 // pred_check
        %p759 = pneg %p758
      $region87: #{encoder_forward.3} parent=5 // pred_check_branch
        %761 = sbr.rel (%p759) target = $region89
      $region88: #{encoder_forward.3} parent=5 // pred_region
        %s762 = ssub.s32 %s9, 2
        // Predicated region
        $region90: #{encoder_forward.3} parent=88 // pred_check
          %p763 = pneg %p125
        $region91: #{encoder_forward.3} parent=88 // pred_check_branch
          %765 = sbr.rel (%p763) target = $region93
        $region92: #{encoder_forward.3} parent=88 // pred_region
          %s766 = smul.u32 16, %s20
          %p767 = scmp.lt.s32.totalorder %s766, 31
          %s768 = scalar_select %p767, %s766, 31
          %s769 = smul.addr %s768, 4
          %s770 = scalar_lea.vmem %s3, %s769
        $region93: #{encoder_forward.3} parent=88 // pred_fallthru
          _
      $region89: #{encoder_forward.3} parent=5 // pred_fallthru
        _
    $region6: #{encoder_forward.3} parent=1 // loop_footer
      %s13 = sadd.s32 1, %s9
    $region7: #{encoder_forward.3} parent=1 // loop_footer_branch
      %8 = sbr.rel target = $region3
    $region8: #{encoder_forward.3} parent=1 // loop_exit
      _

// kernel: encoder_forward.4
$region0: #{encoder_forward.4}
  #allocation0 [shape = 'u32[]', space=smem, size = 0x4, offset = 0x4, fixed_abs, tag = 'smem constant byte address 0x4 - core index']
  #allocation1 [shape = 'u32[144,128]{1,0:T(1,128)}', space=vmem, size = 0x12000, scoped, tag = 'internal scratch']
  #allocation2 [shape = 'f32[128,16]{1,0:T(8,128)}', space=vmem, size = 0x10000, scoped, tag = 'scratch operand']
  %s0 = inlined_call_operand.vmem [shape: bf16[256,256], index: 0, kind: input, shape index: {}]
  %s1 = inlined_call_operand.vmem [shape: bf16[256,16], index: 1, kind: input, shape index: {}]
  %s2 = inlined_call_operand.vmem [shape: f32[16,9], index: 2, kind: input, shape index: {}]
  %s3 = inlined_call_operand.vmem [shape: f32[1,9], index: 3, kind: input, shape index: {}]
  %s4 = inlined_call_operand.vmem [shape: f32[256,8], index: 4, kind: output, shape index: {0}]
  %s5 = inlined_call_operand.vmem [shape: f32[256,1], index: 5, kind: output, shape index: {1}]
  %6 = xla_tuple %s4, %s5
  %s7 = sld [smem:[#allocation0]]
  $region106: #{encoder_forward.4} parent=0
    _
  %s9 = ssub.s32 1, %s7
  %s10 = scalar_select 0, %s9, %s7
  $region1: #{encoder_forward.4} parent=0
    #allocation3 [shape = 'u8[65536]{0}', space=vmem, size = 0x10000, scoped, tag = 'input window, operand 0']
    loop: start=0, step=1, limit=6
    $region2: #{encoder_forward.4} parent=1 // loop_pre_header
      _
    $region3: #{encoder_forward.4} parent=1 // loop_header
      %s12 = sphi 0, %s16
      %p13 = scmp.ge.s32.totalorder %s12, 6
      %s19 = sphi 0, %s31
      %s20 = sphi 0, %s27
      %s21 = sphi 0, %s19
      %s22 = sphi 0, %s20
      %s23 = sphi 0, %s21
      %s24 = sphi 0, %s22
      %s36 = sphi 0, %s38
      %s39 = sphi 0, %s36
      %s40 = sphi 0, %s39
      %s56 = sphi 0, %s40
      %s62 = sphi 0, %s64
      %s65 = sphi 0, %s62
      %s66 = sphi 0, %s65
      %s82 = sphi 0, %s66
      %s86 = sphi 0, %s86
      %s88 = sphi 0, %s86
      %s89 = sphi 0, %s88
      %s103 = sphi 0, %s89
      %s107 = sphi 0, %s107
      %s109 = sphi 0, %s107
      %s110 = sphi 0, %s109
      %s124 = sphi 0, %s110
      %s130 = sphi 0, %s132
      %s133 = sphi 0, %s130
      %s134 = sphi 0, %s133
      %s150 = sphi 0, %s134
      %s156 = sphi 0, %s158
      %s159 = sphi 0, %s156
      %s160 = sphi 0, %s159
      %s176 = sphi 0, %s160
    $region4: #{encoder_forward.4} parent=1 // loop_header_branch
      %15 = sbr.rel (%p13) target = $region8
    $region5: #{encoder_forward.4} parent=1 // loop_body
      %s17 = ssub.s32 %s12, 1
      %s18 = ssub.s32 %s12, 2
      %s25 = sadd.s32 1, %s20
      %p26 = scmp.ge.s32.totalorder %s25, 2
      %s27 = scalar_select %p26, 0, %s25
      %s28 = sadd.s32 1, %s19
      %s29 = scalar_select %p26, %s28, %s19
      %p30 = scmp.ge.s32.totalorder %s29, 2
      %s31 = scalar_select %p30, 0, %s29
      %s32 = ssub.s32 %s19, %s31
      %s33 = ssub.s32 %s20, %s27
      %s34 = sor.u32 %s32, %s33
      %p35 = scmp.eq.s32.totalorder %s34, 0
      %s37 = sadd.s32 %s36, 1
      %s38 = scalar_select %p35, %s36, %s37
      %p41 = pneg %p35
      %p42 = scmp.eq.s32.totalorder %s12, 3
      %p43 = por %p41, %p42
      %p44 = scmp.ne.s32.totalorder %s36, %s39
      %p45 = scmp.eq.s32.totalorder %s12, 0
      %p46 = por %p44, %p45
      %p47 = scmp.ne.s32.totalorder %s36, %s39
      %p48 = scmp.eq.s32.totalorder %s17, 3
      %p49 = por %p47, %p48
      %p50 = scmp.ne.s32.totalorder %s39, %s40
      %p51 = scmp.eq.s32.totalorder %s17, 0
      %p52 = por %p50, %p51
      %p53 = scmp.ne.s32.totalorder %s39, %s40
      %p54 = scmp.eq.s32.totalorder %s18, 3
      %p55 = por %p53, %p54
      %p57 = scmp.ne.s32.totalorder %s40, %s56
      %p58 = scmp.eq.s32.totalorder %s18, 0
      %p59 = por %p57, %p58
      %s60 = ssub.s32 %s20, %s27
      %p61 = scmp.eq.s32.totalorder %s60, 0
      %s63 = sadd.s32 %s62, 1
      %s64 = scalar_select %p61, %s62, %s63
      %p67 = pneg %p61
      %p68 = scmp.eq.s32.totalorder %s12, 3
      %p69 = por %p67, %p68
      %p70 = scmp.ne.s32.totalorder %s62, %s65
      %p71 = scmp.eq.s32.totalorder %s12, 0
      %p72 = por %p70, %p71
      %p73 = scmp.ne.s32.totalorder %s62, %s65
      %p74 = scmp.eq.s32.totalorder %s17, 3
      %p75 = por %p73, %p74
      %p76 = scmp.ne.s32.totalorder %s65, %s66
      %p77 = scmp.eq.s32.totalorder %s17, 0
      %p78 = por %p76, %p77
      %p79 = scmp.ne.s32.totalorder %s65, %s66
      %p80 = scmp.eq.s32.totalorder %s18, 3
      %p81 = por %p79, %p80
      %p83 = scmp.ne.s32.totalorder %s66, %s82
      %p84 = scmp.eq.s32.totalorder %s18, 0
      %p85 = por %p83, %p84
      %s87 = sadd.s32 %s86, 1
      %p90 = scmp.eq.s32.totalorder %s12, 3
      %p91 = scmp.ne.s32.totalorder %s86, %s88
      %p92 = scmp.eq.s32.totalorder %s12, 0
      %p93 = por %p91, %p92
      %p94 = scmp.ne.s32.totalorder %s86, %s88
      %p95 = scmp.eq.s32.totalorder %s17, 3
      %p96 = por %p94, %p95
      %p97 = scmp.ne.s32.totalorder %s88, %s89
      %p98 = scmp.eq.s32.totalorder %s17, 0
      %p99 = por %p97, %p98
      %p100 = scmp.ne.s32.totalorder %s88, %s89
      %p101 = scmp.eq.s32.totalorder %s18, 3
      %p102 = por %p100, %p101
      %p104 = scmp.ne.s32.totalorder %s89, %s103
      %p105 = scmp.eq.s32.totalorder %s18, 0
      %p106 = por %p104, %p105
      %s108 = sadd.s32 %s107, 1
      %p111 = scmp.eq.s32.totalorder %s12, 3
      %p112 = scmp.ne.s32.totalorder %s107, %s109
      %p113 = scmp.eq.s32.totalorder %s12, 0
      %p114 = por %p112, %p113
      %p115 = scmp.ne.s32.totalorder %s107, %s109
      %p116 = scmp.eq.s32.totalorder %s17, 3
      %p117 = por %p115, %p116
      %p118 = scmp.ne.s32.totalorder %s109, %s110
      %p119 = scmp.eq.s32.totalorder %s17, 0
      %p120 = por %p118, %p119
      %p121 = scmp.ne.s32.totalorder %s109, %s110
      %p122 = scmp.eq.s32.totalorder %s18, 3
      %p123 = por %p121, %p122
      %p125 = scmp.ne.s32.totalorder %s110, %s124
      %p126 = scmp.eq.s32.totalorder %s18, 0
      %p127 = por %p125, %p126
      %s128 = ssub.s32 %s19, %s31
      %p129 = scmp.eq.s32.totalorder %s128, 0
      %s131 = sadd.s32 %s130, 1
      %s132 = scalar_select %p129, %s130, %s131
      %p135 = pneg %p129
      %p136 = scmp.eq.s32.totalorder %s12, 3
      %p137 = por %p135, %p136
      %p138 = scmp.ne.s32.totalorder %s130, %s133
      %p139 = scmp.eq.s32.totalorder %s12, 0
      %p140 = por %p138, %p139
      %p141 = scmp.ne.s32.totalorder %s130, %s133
      %p142 = scmp.eq.s32.totalorder %s17, 3
      %p143 = por %p141, %p142
      %p144 = scmp.ne.s32.totalorder %s133, %s134
      %p145 = scmp.eq.s32.totalorder %s17, 0
      %p146 = por %p144, %p145
      %p147 = scmp.ne.s32.totalorder %s133, %s134
      %p148 = scmp.eq.s32.totalorder %s18, 3
      %p149 = por %p147, %p148
      %p151 = scmp.ne.s32.totalorder %s134, %s150
      %p152 = scmp.eq.s32.totalorder %s18, 0
      %p153 = por %p151, %p152
      %s154 = ssub.s32 %s19, %s31
      %p155 = scmp.eq.s32.totalorder %s154, 0
      %s157 = sadd.s32 %s156, 1
      %s158 = scalar_select %p155, %s156, %s157
      %p161 = pneg %p155
      %p162 = scmp.eq.s32.totalorder %s12, 3
      %p163 = por %p161, %p162
      %p164 = scmp.ne.s32.totalorder %s156, %s159
      %p165 = scmp.eq.s32.totalorder %s12, 0
      %p166 = por %p164, %p165
      %p167 = scmp.ne.s32.totalorder %s156, %s159
      %p168 = scmp.eq.s32.totalorder %s17, 3
      %p169 = por %p167, %p168
      %p170 = scmp.ne.s32.totalorder %s159, %s160
      %p171 = scmp.eq.s32.totalorder %s17, 0
      %p172 = por %p170, %p171
      %p173 = scmp.ne.s32.totalorder %s159, %s160
      %p174 = scmp.eq.s32.totalorder %s18, 3
      %p175 = por %p173, %p174
      %p177 = scmp.ne.s32.totalorder %s160, %s176
      %p178 = scmp.eq.s32.totalorder %s18, 0
      %p179 = por %p177, %p178
      %p180 = scmp.le.s32.totalorder 1, %s12
      %p181 = scmp.lt.s32.totalorder %s12, 5
      %p182 = pnand %p180, %p181
      %p183 = pneg %p182
      // Predicated region
      $region9: #{encoder_forward.4} parent=5 // pred_check
        _
      $region10: #{encoder_forward.4} parent=5 // pred_check_branch
        %185 = sbr.rel (%p182) target = $region12
      $region11: #{encoder_forward.4} parent=5 // pred_region
        %s186 = ssub.s32 %s12, 1
        // Predicated region
        $region13: #{encoder_forward.4} parent=11 // pred_check
          %p187 = pneg %p99
        $region14: #{encoder_forward.4} parent=11 // pred_check_branch
          %189 = sbr.rel (%p187) target = $region16
        $region15: #{encoder_forward.4} parent=11 // pred_region
          _
        $region16: #{encoder_forward.4} parent=11 // pred_fallthru
          _
        // Predicated region
        $region17: #{encoder_forward.4} parent=11 // pred_check
          %p190 = pneg %p120
        $region18: #{encoder_forward.4} parent=11 // pred_check_branch
          %192 = sbr.rel (%p190) target = $region20
        $region19: #{encoder_forward.4} parent=11 // pred_region
          _
        $region20: #{encoder_forward.4} parent=11 // pred_fallthru
          _
      $region12: #{encoder_forward.4} parent=5 // pred_fallthru
        _
      %p193 = scmp.lt.s32.totalorder %s12, 4
      // Predicated region
      $region21: #{encoder_forward.4} parent=5 // pred_check
        %p194 = pneg %p193
      $region22: #{encoder_forward.4} parent=5 // pred_check_branch
        %196 = sbr.rel (%p194) target = $region24
      $region23: #{encoder_forward.4} parent=5 // pred_region
        // Predicated region
        $region25: #{encoder_forward.4} parent=23 // pred_check
          %p197 = pneg %p46
        $region26: #{encoder_forward.4} parent=23 // pred_check_branch
          %199 = sbr.rel (%p197) target = $region28
        $region27: #{encoder_forward.4} parent=23 // pred_region
          %s200 = sand.u32 %s36, 1
          %s201 = sand.u32 %s36, 1
          %s202 = smul.addr %s201, 64
          %s203 = scalar_lea.vmem [#allocation3], %s202
          %s204 = smul.u32 16, %s19
          %s205 = smul.addr %s204, 2
          %s206 = sadd.s32 %s20, %s205
          %s207 = smul.addr %s206, 4
          %s208 = scalar_lea.vmem %s0, %s207
          // Predicated region
          $region29: #{encoder_forward.4} parent=27 // pred_check
            _
          $region30: #{encoder_forward.4} parent=27 // pred_check_branch
            %210 = sbr.rel (0) target = $region32
          $region31: #{encoder_forward.4} parent=27 // pred_region
            // Predicated region
            $region33: #{encoder_forward.4} parent=31 // pred_check
              _
            $region34: #{encoder_forward.4} parent=31 // pred_check_branch
              %212 = sbr.rel target = $region36
            $region35: #{encoder_forward.4} parent=31 // pred_region
              // Predicated region
              $region48: #{encoder_forward.4} parent=35 // pred_check
                _
              $region49: #{encoder_forward.4} parent=35 // pred_check_branch
                %257 = sbr.rel (0) target = $region51
              $region50: #{encoder_forward.4} parent=35 // pred_region
                loop: start=0, step=1, limit=1
                $region52: #{encoder_forward.4} parent=50 // loop_pre_header
                  _
                $region53: #{encoder_forward.4} parent=50 // loop_header
                  %s259 = sphi 0, %s263
                  %p260 = scmp.ge.s32.totalorder %s259, 1
                  %s264 = sphi %s208, %s208
                  %s265 = sphi %s203, %s203
                $region54: #{encoder_forward.4} parent=50 // loop_header_branch
                  %262 = sbr.rel (%p260) target = $region58
                $region55: #{encoder_forward.4} parent=50 // loop_body
                  _
                $region56: #{encoder_forward.4} parent=50 // loop_footer
                  %s263 = sadd.s32 1, %s259
                $region57: #{encoder_forward.4} parent=50 // loop_footer_branch
                  %258 = sbr.rel target = $region53
                $region58: #{encoder_forward.4} parent=50 // loop_exit
                  _
                loop: start=0, step=1, limit=1
                $region59: #{encoder_forward.4} parent=50 // loop_pre_header
                  _
                $region60: #{encoder_forward.4} parent=50 // loop_header
                  %s268 = sphi 0, %s272
                  %p269 = scmp.ge.s32.totalorder %s268, 1
                  %s273 = sphi %s208, %s208
                  %s274 = sphi %s203, %s203
                $region61: #{encoder_forward.4} parent=50 // loop_header_branch
                  %271 = sbr.rel (%p269) target = $region65
                $region62: #{encoder_forward.4} parent=50 // loop_body
                  %v275 = vld [vmem:[%s273] sm:$0xf]
                  %276 = vst [vmem:[%s274] sm:$0xf] %v275
                  %v277 = vld [vmem:[%s273 + $0x8] sm:$0xf]
                  %278 = vst [vmem:[%s274 + $0x4] sm:$0xf] %v277
                  %v279 = vld [vmem:[%s273 + $0x10] sm:$0xf]
                  %280 = vst [vmem:[%s274 + $0x8] sm:$0xf] %v279
                  %v281 = vld [vmem:[%s273 + $0x18] sm:$0xf]
                  %282 = vst [vmem:[%s274 + $0xc] sm:$0xf] %v281
                  %v283 = vld [vmem:[%s273 + $0x20] sm:$0xf]
                  %284 = vst [vmem:[%s274 + $0x10] sm:$0xf] %v283
                  %v285 = vld [vmem:[%s273 + $0x28] sm:$0xf]
                  %286 = vst [vmem:[%s274 + $0x14] sm:$0xf] %v285
                  %v287 = vld [vmem:[%s273 + $0x30] sm:$0xf]
                  %288 = vst [vmem:[%s274 + $0x18] sm:$0xf] %v287
                  %v289 = vld [vmem:[%s273 + $0x38] sm:$0xf]
                  %290 = vst [vmem:[%s274 + $0x1c] sm:$0xf] %v289
                  %v291 = vld [vmem:[%s273 + $0x40] sm:$0xf]
                  %292 = vst [vmem:[%s274 + $0x20] sm:$0xf] %v291
                  %v293 = vld [vmem:[%s273 + $0x48] sm:$0xf]
                  %294 = vst [vmem:[%s274 + $0x24] sm:$0xf] %v293
                  %v295 = vld [vmem:[%s273 + $0x50] sm:$0xf]
                  %296 = vst [vmem:[%s274 + $0x28] sm:$0xf] %v295
                  %v297 = vld [vmem:[%s273 + $0x58] sm:$0xf]
                  %298 = vst [vmem:[%s274 + $0x2c] sm:$0xf] %v297
                  %v299 = vld [vmem:[%s273 + $0x60] sm:$0xf]
                  %300 = vst [vmem:[%s274 + $0x30] sm:$0xf] %v299
                  %v301 = vld [vmem:[%s273 + $0x68] sm:$0xf]
                  %302 = vst [vmem:[%s274 + $0x34] sm:$0xf] %v301
                  %v303 = vld [vmem:[%s273 + $0x70] sm:$0xf]
                  %304 = vst [vmem:[%s274 + $0x38] sm:$0xf] %v303
                  %v305 = vld [vmem:[%s273 + $0x78] sm:$0xf]
                  %306 = vst [vmem:[%s274 + $0x3c] sm:$0xf] %v305
                $region63: #{encoder_forward.4} parent=50 // loop_footer
                  %s272 = sadd.s32 1, %s268
                $region64: #{encoder_forward.4} parent=50 // loop_footer_branch
                  %267 = sbr.rel target = $region60
                $region65: #{encoder_forward.4} parent=50 // loop_exit
                  _
              $region51: #{encoder_forward.4} parent=35 // pred_fallthru
                _
            $region36: #{encoder_forward.4} parent=31 // pred_fallthru
              _
            // Predicated region
            $region37: #{encoder_forward.4} parent=31 // pred_check
              _
            $region38: #{encoder_forward.4} parent=31 // pred_check_branch
              %214 = sbr.rel (0) target = $region40
            $region39: #{encoder_forward.4} parent=31 // pred_region
              loop: start=0, step=1, limit=1
              $region41: #{encoder_forward.4} parent=39 // loop_pre_header
                _
              $region42: #{encoder_forward.4} parent=39 // loop_header
                %s217 = sphi 0, %s221
                %p218 = scmp.ge.s32.totalorder %s217, 1
                %s222 = sphi %s208, %s208
                %s223 = sphi %s203, %s203
              $region43: #{encoder_forward.4} parent=39 // loop_header_branch
                %220 = sbr.rel (%p218) target = $region47
              $region44: #{encoder_forward.4} parent=39 // loop_body
                %v224 = vld [vmem:[%s222] sm:$0xf]
                %225 = vst [vmem:[%s223] sm:$0xf] %v224
                %v226 = vld [vmem:[%s222 + $0x8] sm:$0xf]
                %227 = vst [vmem:[%s223 + $0x4] sm:$0xf] %v226
                %v228 = vld [vmem:[%s222 + $0x10] sm:$0xf]
                %229 = vst [vmem:[%s223 + $0x8] sm:$0xf] %v228
                %v230 = vld [vmem:[%s222 + $0x18] sm:$0xf]
                %231 = vst [vmem:[%s223 + $0xc] sm:$0xf] %v230
                %v232 = vld [vmem:[%s222 + $0x20] sm:$0xf]
                %233 = vst [vmem:[%s223 + $0x10] sm:$0xf] %v232
                %v234 = vld [vmem:[%s222 + $0x28] sm:$0xf]
                %235 = vst [vmem:[%s223 + $0x14] sm:$0xf] %v234
                %v236 = vld [vmem:[%s222 + $0x30] sm:$0xf]
                %237 = vst [vmem:[%s223 + $0x18] sm:$0xf] %v236
                %v238 = vld [vmem:[%s222 + $0x38] sm:$0xf]
                %239 = vst [vmem:[%s223 + $0x1c] sm:$0xf] %v238
                %v240 = vld [vmem:[%s222 + $0x40] sm:$0xf]
                %241 = vst [vmem:[%s223 + $0x20] sm:$0xf] %v240
                %v242 = vld [vmem:[%s222 + $0x48] sm:$0xf]
                %243 = vst [vmem:[%s223 + $0x24] sm:$0xf] %v242
                %v244 = vld [vmem:[%s222 + $0x50] sm:$0xf]
                %245 = vst [vmem:[%s223 + $0x28] sm:$0xf] %v244
                %v246 = vld [vmem:[%s222 + $0x58] sm:$0xf]
                %247 = vst [vmem:[%s223 + $0x2c] sm:$0xf] %v246
                %v248 = vld [vmem:[%s222 + $0x60] sm:$0xf]
                %249 = vst [vmem:[%s223 + $0x30] sm:$0xf] %v248
                %v250 = vld [vmem:[%s222 + $0x68] sm:$0xf]
                %251 = vst [vmem:[%s223 + $0x34] sm:$0xf] %v250
                %v252 = vld [vmem:[%s222 + $0x70] sm:$0xf]
                %253 = vst [vmem:[%s223 + $0x38] sm:$0xf] %v252
                %v254 = vld [vmem:[%s222 + $0x78] sm:$0xf]
                %255 = vst [vmem:[%s223 + $0x3c] sm:$0xf] %v254
              $region45: #{encoder_forward.4} parent=39 // loop_footer
                %s221 = sadd.s32 1, %s217
              $region46: #{encoder_forward.4} parent=39 // loop_footer_branch
                %216 = sbr.rel target = $region42
              $region47: #{encoder_forward.4} parent=39 // loop_exit
                _
            $region40: #{encoder_forward.4} parent=31 // pred_fallthru
              _
          $region32: #{encoder_forward.4} parent=27 // pred_fallthru
            _
          %307 = vnop
        $region28: #{encoder_forward.4} parent=23 // pred_fallthru
          _
        // Predicated region
        $region66: #{encoder_forward.4} parent=23 // pred_check
          %p308 = pneg %p72
        $region67: #{encoder_forward.4} parent=23 // pred_check_branch
          %310 = sbr.rel (%p308) target = $region69
        $region68: #{encoder_forward.4} parent=23 // pred_region
          %s311 = smul.u32 16, %s20
          %p312 = scmp.lt.s32.totalorder %s311, 31
          %s313 = scalar_select %p312, %s311, 31
          %s314 = smul.addr %s313, 4
          %s315 = scalar_lea.vmem %s1, %s314
          %s316 = smul.u32 16, %s20
        $region69: #{encoder_forward.4} parent=23 // pred_fallthru
          _
      $region24: #{encoder_forward.4} parent=5 // pred_fallthru
        _
      %p317 = scmp.le.s32.totalorder 1, %s12
      %p318 = scmp.lt.s32.totalorder %s12, 5
      %p319 = pnand %p317, %p318
      %p320 = pneg %p319
      // Predicated region
      $region70: #{encoder_forward.4} parent=5 // pred_check
        _
      $region71: #{encoder_forward.4} parent=5 // pred_check_branch
        %322 = sbr.rel (%p319) target = $region73
      $region72: #{encoder_forward.4} parent=5 // pred_region
        %s323 = ssub.s32 %s12, 1
        %s324 = sand.u32 %s39, 1
        %s325 = sand.u32 %s39, 1
        %s326 = smul.addr %s325, 64
        %s327 = scalar_lea.vmem [#allocation3], %s326
        // Predicated region
        $region74: #{encoder_forward.4} parent=72 // pred_check
          %p328 = pneg %p52
        $region75: #{encoder_forward.4} parent=72 // pred_check_branch
          %330 = sbr.rel (%p328) target = $region77
        $region76: #{encoder_forward.4} parent=72 // pred_region
          _
        $region77: #{encoder_forward.4} parent=72 // pred_fallthru
          _
        %s331 = sand.u32 %s39, 1
        %s332 = sand.u32 %s39, 1
        %s333 = smul.addr %s332, 64
        %s334 = scalar_lea.vmem [#allocation3], %s333
        %p335 = pneg %p52
        %p336 = pneg %p49
        %s337 = smul.u32 16, %s22
        %p338 = scmp.lt.s32.totalorder %s337, 31
        %s339 = scalar_select %p338, %s337, 31
        %s340 = smul.addr %s339, 4
        %s341 = scalar_lea.vmem %s1, %s340
        %p342 = pneg %p78
        %p343 = pneg %p75
        %p344 = pneg %p99
        %p345 = pneg %p96
        %p346 = pneg %p120
        %p347 = pneg %p117
        %p348 = pneg %p146
        %p349 = pneg %p143
        %s350 = smul.u32 16, %s21
        %p351 = scmp.lt.s32.totalorder %s350, 31
        %s352 = scalar_select %p351, %s350, 31
        %s353 = smul.addr %s352, 8
        %s354 = scalar_lea.vmem %s4, %s353
        %p355 = pneg %p172
        %p356 = pneg %p169
        %s357 = smul.u32 16, %s21
        %p358 = scmp.lt.s32.totalorder %s357, 31
        %s359 = scalar_select %p358, %s357, 31
        %s360 = smul.addr %s359, 8
        %s361 = scalar_lea.vmem %s5, %s360
        %s362 = smul.u32 16, %s21
        %s363 = smul.u32 16, %s22
        %p364 = scmp.lt.s32.totalorder %s363, 31
        %s365 = scalar_select %p364, %s363, 31
        %s366 = smul.addr %s365, 4
        %s367 = scalar_lea.vmem %s1, %s366
        %s368 = smul.u32 16, %s22
        %s369 = smul.u32 16, %s21
        %p370 = scmp.lt.s32.totalorder %s369, 31
        %s371 = scalar_select %p370, %s369, 31
        %s372 = smul.addr %s371, 8
        %s373 = scalar_lea.vmem %s4, %s372
        %s374 = smul.u32 16, %s21
        %s375 = smul.u32 16, %s21
        %p376 = scmp.lt.s32.totalorder %s375, 31
        %s377 = scalar_select %p376, %s375, 31
        %s378 = smul.addr %s377, 8
        %s379 = scalar_lea.vmem %s5, %s378
        %s380 = smul.u32 16, %s21
        %p382 = scmp.eq.s32.totalorder %s22, 0
        // Predicated region
        $region78: #{encoder_forward.4} parent=72 // pred_check
          %p383 = pneg %p382
        $region79: #{encoder_forward.4} parent=72 // pred_check_branch
          %385 = sbr.rel (%p383) target = $region81
        $region80: #{encoder_forward.4} parent=72 // pred_region
          %vm386 = vcmask 130048
          %387 = vst.msk [vmem:[#allocation2] sm:$0xff] %vm386, 0.0
          %388 = vst.msk [vmem:[#allocation2 + $0x8] sm:$0xff] %vm386, 0.0
          %389 = vst.msk [vmem:[#allocation2 + $0x10] sm:$0xff] %vm386, 0.0
          %390 = vst.msk [vmem:[#allocation2 + $0x18] sm:$0xff] %vm386, 0.0
          %391 = vst.msk [vmem:[#allocation2 + $0x20] sm:$0xff] %vm386, 0.0
          %392 = vst.msk [vmem:[#allocation2 + $0x28] sm:$0xff] %vm386, 0.0
          %393 = vst.msk [vmem:[#allocation2 + $0x30] sm:$0xff] %vm386, 0.0
          %394 = vst.msk [vmem:[#allocation2 + $0x38] sm:$0xff] %vm386, 0.0
          %395 = vst.msk [vmem:[#allocation2 + $0x40] sm:$0xff] %vm386, 0.0
          %396 = vst.msk [vmem:[#allocation2 + $0x48] sm:$0xff] %vm386, 0.0
          %397 = vst.msk [vmem:[#allocation2 + $0x50] sm:$0xff] %vm386, 0.0
          %398 = vst.msk [vmem:[#allocation2 + $0x58] sm:$0xff] %vm386, 0.0
          %399 = vst.msk [vmem:[#allocation2 + $0x60] sm:$0xff] %vm386, 0.0
          %400 = vst.msk [vmem:[#allocation2 + $0x68] sm:$0xff] %vm386, 0.0
          %401 = vst.msk [vmem:[#allocation2 + $0x70] sm:$0xff] %vm386, 0.0
          %402 = vst.msk [vmem:[#allocation2 + $0x78] sm:$0xff] %vm386, 0.0
        $region81: #{encoder_forward.4} parent=72 // pred_fallthru
          _
        %v403 = vld [vmem:[#allocation2] sm:$0xff]
        %v404 = vld [vmem:[#allocation2 + $0x8] sm:$0xff]
        %v405 = vld [vmem:[#allocation2 + $0x10] sm:$0xff]
        %v406 = vld [vmem:[#allocation2 + $0x18] sm:$0xff]
        %v407 = vld [vmem:[#allocation2 + $0x20] sm:$0xff]
        %v408 = vld [vmem:[#allocation2 + $0x28] sm:$0xff]
        %v409 = vld [vmem:[#allocation2 + $0x30] sm:$0xff]
        %v410 = vld [vmem:[#allocation2 + $0x38] sm:$0xff]
        %v411 = vld [vmem:[#allocation2 + $0x40] sm:$0xff]
        %v412 = vld [vmem:[#allocation2 + $0x48] sm:$0xff]
        %v413 = vld [vmem:[#allocation2 + $0x50] sm:$0xff]
        %v414 = vld [vmem:[#allocation2 + $0x58] sm:$0xff]
        %v415 = vld [vmem:[#allocation2 + $0x60] sm:$0xff]
        %v416 = vld [vmem:[#allocation2 + $0x68] sm:$0xff]
        %v417 = vld [vmem:[#allocation2 + $0x70] sm:$0xff]
        %v418 = vld [vmem:[#allocation2 + $0x78] sm:$0xff]
        %v419 = vld [vmem:[%s327] sm:$0xf]
        %v420 = vld [vmem:[%s327 + $0x4] sm:$0xf]
        %v421 = vld [vmem:[%s327 + $0x8] sm:$0xf]
        %v422 = vld [vmem:[%s327 + $0xc] sm:$0xf]
        %v423 = vld [vmem:[%s327 + $0x10] sm:$0xf]
        %v424 = vld [vmem:[%s327 + $0x14] sm:$0xf]
        %v425 = vld [vmem:[%s327 + $0x18] sm:$0xf]
        %v426 = vld [vmem:[%s327 + $0x1c] sm:$0xf]
        %v427 = vld [vmem:[%s327 + $0x20] sm:$0xf]
        %v428 = vld [vmem:[%s327 + $0x24] sm:$0xf]
        %v429 = vld [vmem:[%s327 + $0x28] sm:$0xf]
        %v430 = vld [vmem:[%s327 + $0x2c] sm:$0xf]
        %v431 = vld [vmem:[%s327 + $0x30] sm:$0xf]
        %v432 = vld [vmem:[%s327 + $0x34] sm:$0xf]
        %v433 = vld [vmem:[%s327 + $0x38] sm:$0xf]
        %v434 = vld [vmem:[%s327 + $0x3c] sm:$0xf]
        %v435 = vld [vmem:[%s367] sm:$0xf]
        %v436 = vld [vmem:[%s367 + $0x4] sm:$0xf]
        %v437 = vld [vmem:[%s367 + $0x8] sm:$0xf]
        %v438 = vld [vmem:[%s367 + $0xc] sm:$0xf]
        %v439 = vld [vmem:[%s367 + $0x10] sm:$0xf]
        %v440 = vld [vmem:[%s367 + $0x14] sm:$0xf]
        %v441 = vld [vmem:[%s367 + $0x18] sm:$0xf]
        %v442 = vld [vmem:[%s367 + $0x1c] sm:$0xf]
        %v443 = vld [vmem:[%s367 + $0x20] sm:$0xf]
        %v444 = vld [vmem:[%s367 + $0x24] sm:$0xf]
        %v445 = vld [vmem:[%s367 + $0x28] sm:$0xf]
        %v446 = vld [vmem:[%s367 + $0x2c] sm:$0xf]
        %v447 = vld [vmem:[%s367 + $0x30] sm:$0xf]
        %v448 = vld [vmem:[%s367 + $0x34] sm:$0xf]
        %v449 = vld [vmem:[%s367 + $0x38] sm:$0xf]
        %v450 = vld [vmem:[%s367 + $0x3c] sm:$0xf]
        %v467 = vunpack.c.l.b16 %v419
        %v468 = vunpack.c.l.b16 %v420
        %v469 = vunpack.c.l.b16 %v421
        %v470 = vunpack.c.l.b16 %v422
        %v471 = vunpack.c.l.b16 %v423
        %v472 = vunpack.c.l.b16 %v424
        %v473 = vunpack.c.l.b16 %v425
        %v474 = vunpack.c.l.b16 %v426
        %v475 = vunpack.c.l.b16 %v427
        %v476 = vunpack.c.l.b16 %v428
        %v477 = vunpack.c.l.b16 %v429
        %v478 = vunpack.c.l.b16 %v430
        %v479 = vunpack.c.l.b16 %v431
        %v480 = vunpack.c.l.b16 %v432
        %v481 = vunpack.c.l.b16 %v433
        %v482 = vunpack.c.l.b16 %v434
        %v483 = vpack.c.b16 %v468, %v467
        %v484 = vpack.c.b16 %v470, %v469
        %v485 = vpack.c.b16 %v472, %v471
        %v486 = vpack.c.b16 %v474, %v473
        %v487 = vpack.c.b16 %v476, %v475
        %v488 = vpack.c.b16 %v478, %v477
        %v489 = vpack.c.b16 %v480, %v479
        %v490 = vpack.c.b16 %v482, %v481
        %v515 = vunpack.c.l.b16 %v435
        %v516 = vunpack.c.l.b16 %v436
        %v517 = vunpack.c.l.b16 %v437
        %v518 = vunpack.c.l.b16 %v438
        %v519 = vunpack.c.l.b16 %v439
        %v520 = vunpack.c.l.b16 %v440
        %v521 = vunpack.c.l.b16 %v441
        %v522 = vunpack.c.l.b16 %v442
        %v523 = vunpack.c.l.b16 %v443
        %v524 = vunpack.c.l.b16 %v444
        %v525 = vunpack.c.l.b16 %v445
        %v526 = vunpack.c.l.b16 %v446
        %v527 = vunpack.c.l.b16 %v447
        %v528 = vunpack.c.l.b16 %v448
        %v529 = vunpack.c.l.b16 %v449
        %v530 = vunpack.c.l.b16 %v450
        %v531 = vpack.c.b16 %v516, %v515
        %v532 = vpack.c.b16 %v518, %v517
        %v533 = vpack.c.b16 %v520, %v519
        %v534 = vpack.c.b16 %v522, %v521
        %v535 = vpack.c.b16 %v524, %v523
        %v536 = vpack.c.b16 %v526, %v525
        %v537 = vpack.c.b16 %v528, %v527
        %v538 = vpack.c.b16 %v530, %v529
        %547 = vmatprep.subr.bf16.mxu0 0
        %548 = vmatpush1.bf16.msra.mxu0 %v531
        %549 = vmatprep.subr.bf16.mxu0 0
        %550 = vmatpush1.bf16.msra.mxu0 %v532
        %551 = vmatprep.subr.bf16.mxu0 0
        %552 = vmatpush1.bf16.msra.mxu0 %v533
        %553 = vmatprep.subr.bf16.mxu0 0
        %554 = vmatpush1.bf16.msra.mxu0 %v534
        %555 = vmatprep.subr.bf16.mxu0 0
        %556 = vmatpush1.bf16.msra.mxu0 %v535
        %557 = vmatprep.subr.bf16.mxu0 0
        %558 = vmatpush1.bf16.msra.mxu0 %v536
        %559 = vmatprep.subr.bf16.mxu0 0
        %560 = vmatpush1.bf16.msra.mxu0 %v537
        %561 = vmatprep.subr.bf16.mxu0 0
        %562 = vmatpush1.bf16.msra.mxu0 %v538
        %563 = vmatprep.subr.bf16.mxu0 0
        %564 = vmatpush1.bf16.msra.mxu0 0
        %565 = vmatprep.subr.bf16.mxu0 0
        %566 = vmatpush1.bf16.msra.mxu0 0
        %567 = vmatprep.subr.bf16.mxu0 0
        %568 = vmatpush1.bf16.msra.mxu0 0
        %569 = vmatprep.subr.bf16.mxu0 0
        %570 = vmatpush1.bf16.msra.mxu0 0
        %571 = vmatprep.subr.bf16.mxu0 0
        %572 = vmatpush1.bf16.msra.mxu0 0
        %573 = vmatprep.subr.bf16.mxu0 0
        %574 = vmatpush1.bf16.msra.mxu0 0
        %575 = vmatprep.subr.bf16.mxu0 0
        %576 = vmatpush1.bf16.msra.mxu0 0
        %577 = vmatprep.subr.bf16.mxu0 0
        %578 = vmatpush1.bf16.msra.mxu0 0
        %579 = vmatprep.mubr.bf16.mxu0 0
        %580 = vmatmul.mubr.bf16.gmra.mrb[0].mxu0 %v483
        %v581 = vpop.f32.mrb[0].mxu0
        %v582 = vadd.f32 0.0, %v581
        %v583 = vpop.f32.mrb[0].mxu0
        %v584 = vpop.f32.mrb[0].mxu0
        %v585 = vadd.f32 0.0, %v584
        %v586 = vpop.f32.mrb[0].mxu0
        %587 = vmatprep.mubr.bf16.mxu0 0
        %588 = vmatmul.mubr.bf16.gmra.mrb[0].mxu0 %v484
        %v589 = vpop.f32.mrb[0].mxu0
        %v590 = vadd.f32 0.0, %v589
        %v591 = vpop.f32.mrb[0].mxu0
        %v592 = vpop.f32.mrb[0].mxu0
        %v593 = vadd.f32 0.0, %v592
        %v594 = vpop.f32.mrb[0].mxu0
        %595 = vmatprep.mubr.bf16.mxu0 0
        %596 = vmatmul.mubr.bf16.gmra.mrb[0].mxu0 %v485
        %v597 = vpop.f32.mrb[0].mxu0
        %v598 = vadd.f32 0.0, %v597
        %v599 = vpop.f32.mrb[0].mxu0
        %v600 = vpop.f32.mrb[0].mxu0
        %v601 = vadd.f32 0.0, %v600
        %v602 = vpop.f32.mrb[0].mxu0
        %603 = vmatprep.mubr.bf16.mxu0 0
        %604 = vmatmul.mubr.bf16.gmra.mrb[0].mxu0 %v486
        %v605 = vpop.f32.mrb[0].mxu0
        %v606 = vadd.f32 0.0, %v605
        %v607 = vpop.f32.mrb[0].mxu0
        %v608 = vpop.f32.mrb[0].mxu0
        %v609 = vadd.f32 0.0, %v608
        %v610 = vpop.f32.mrb[0].mxu0
        %611 = vmatprep.mubr.bf16.mxu0 0
        %612 = vmatmul.mubr.bf16.gmra.mrb[0].mxu0 %v487
        %v613 = vpop.f32.mrb[0].mxu0
        %v614 = vadd.f32 0.0, %v613
        %v615 = vpop.f32.mrb[0].mxu0
        %v616 = vpop.f32.mrb[0].mxu0
        %v617 = vadd.f32 0.0, %v616
        %v618 = vpop.f32.mrb[0].mxu0
        %619 = vmatprep.mubr.bf16.mxu0 0
        %620 = vmatmul.mubr.bf16.gmra.mrb[0].mxu0 %v488
        %v621 = vpop.f32.mrb[0].mxu0
        %v622 = vadd.f32 0.0, %v621
        %v623 = vpop.f32.mrb[0].mxu0
        %v624 = vpop.f32.mrb[0].mxu0
        %v625 = vadd.f32 0.0, %v624
        %v626 = vpop.f32.mrb[0].mxu0
        %627 = vmatprep.mubr.bf16.mxu0 0
        %628 = vmatmul.mubr.bf16.gmra.mrb[0].mxu0 %v489
        %v629 = vpop.f32.mrb[0].mxu0
        %v630 = vadd.f32 0.0, %v629
        %v631 = vpop.f32.mrb[0].mxu0
        %v632 = vpop.f32.mrb[0].mxu0
        %v633 = vadd.f32 0.0, %v632
        %v634 = vpop.f32.mrb[0].mxu0
        %635 = vmatprep.mubr.bf16.mxu0 0
        %636 = vmatmul.mubr.bf16.gmra.mrb[0].mxu0 %v490
        %v637 = vpop.f32.mrb[0].mxu0
        %v638 = vadd.f32 0.0, %v637
        %v639 = vpop.f32.mrb[0].mxu0
        %v640 = vpop.f32.mrb[0].mxu0
        %v641 = vadd.f32 0.0, %v640
        %v642 = vpop.f32.mrb[0].mxu0
        %643 = vdwg.mxu0
        %v644 = vadd.f32 %v403, %v582
        %v645 = vadd.f32 %v404, %v585
        %v646 = vadd.f32 %v405, %v590
        %v647 = vadd.f32 %v406, %v593
        %v648 = vadd.f32 %v407, %v598
        %v649 = vadd.f32 %v408, %v601
        %v650 = vadd.f32 %v409, %v606
        %v651 = vadd.f32 %v410, %v609
        %v652 = vadd.f32 %v411, %v614
        %v653 = vadd.f32 %v412, %v617
        %v654 = vadd.f32 %v413, %v622
        %v655 = vadd.f32 %v414, %v625
        %v656 = vadd.f32 %v415, %v630
        %v657 = vadd.f32 %v416, %v633
        %v658 = vadd.f32 %v417, %v638
        %v659 = vadd.f32 %v418, %v641
        %vm660 = vcmask 130048
        %661 = vst.msk [vmem:[#allocation2] sm:$0xff] %vm660, %v644
        %662 = vst.msk [vmem:[#allocation2 + $0x8] sm:$0xff] %vm660, %v645
        %663 = vst.msk [vmem:[#allocation2 + $0x10] sm:$0xff] %vm660, %v646
        %664 = vst.msk [vmem:[#allocation2 + $0x18] sm:$0xff] %vm660, %v647
        %665 = vst.msk [vmem:[#allocation2 + $0x20] sm:$0xff] %vm660, %v648
        %666 = vst.msk [vmem:[#allocation2 + $0x28] sm:$0xff] %vm660, %v649
        %667 = vst.msk [vmem:[#allocation2 + $0x30] sm:$0xff] %vm660, %v650
        %668 = vst.msk [vmem:[#allocation2 + $0x38] sm:$0xff] %vm660, %v651
        %669 = vst.msk [vmem:[#allocation2 + $0x40] sm:$0xff] %vm660, %v652
        %670 = vst.msk [vmem:[#allocation2 + $0x48] sm:$0xff] %vm660, %v653
        %671 = vst.msk [vmem:[#allocation2 + $0x50] sm:$0xff] %vm660, %v654
        %672 = vst.msk [vmem:[#allocation2 + $0x58] sm:$0xff] %vm660, %v655
        %673 = vst.msk [vmem:[#allocation2 + $0x60] sm:$0xff] %vm660, %v656
        %674 = vst.msk [vmem:[#allocation2 + $0x68] sm:$0xff] %vm660, %v657
        %675 = vst.msk [vmem:[#allocation2 + $0x70] sm:$0xff] %vm660, %v658
        %676 = vst.msk [vmem:[#allocation2 + $0x78] sm:$0xff] %vm660, %v659
        %p677 = scmp.eq.s32.totalorder %s22, 1
        // Predicated region
        $region82: #{encoder_forward.4} parent=72 // pred_check
          %p678 = pneg %p677
        $region83: #{encoder_forward.4} parent=72 // pred_check_branch
          %680 = sbr.rel (%p678) target = $region85
        $region84: #{encoder_forward.4} parent=72 // pred_region
          %v681 = vld [vmem:[#allocation2] sm:$0xff]
          %v682 = vld [vmem:[#allocation2 + $0x8] sm:$0xff]
          %v683 = vld [vmem:[#allocation2 + $0x10] sm:$0xff]
          %v684 = vld [vmem:[#allocation2 + $0x18] sm:$0xff]
          %v685 = vld [vmem:[#allocation2 + $0x20] sm:$0xff]
          %v686 = vld [vmem:[#allocation2 + $0x28] sm:$0xff]
          %v687 = vld [vmem:[#allocation2 + $0x30] sm:$0xff]
          %v688 = vld [vmem:[#allocation2 + $0x38] sm:$0xff]
          %v689 = vld [vmem:[#allocation2 + $0x40] sm:$0xff]
          %v690 = vld [vmem:[#allocation2 + $0x48] sm:$0xff]
          %v691 = vld [vmem:[#allocation2 + $0x50] sm:$0xff]
          %v692 = vld [vmem:[#allocation2 + $0x58] sm:$0xff]
          %v693 = vld [vmem:[#allocation2 + $0x60] sm:$0xff]
          %v694 = vld [vmem:[#allocation2 + $0x68] sm:$0xff]
          %v695 = vld [vmem:[#allocation2 + $0x70] sm:$0xff]
          %v696 = vld [vmem:[#allocation2 + $0x78] sm:$0xff]
          %v697 = vld [vmem:[%s2] sm:$0xff]
          %v698 = vld [vmem:[%s2 + $0x8] sm:$0xff]
          %v699 = vld [vmem:[%s3] sm:$0x1]
          %v701 = vlaneseq
          %v702 = vshrl.u32 %v701, 7
          %v703 = vsub.s32 0, %v702
          %v704 = vrot.slane %v699, %v703
          %v707 = vsel %vm660, %v681, 0
          %v710 = vsel %vm660, %v682, 0
          %v713 = vsel %vm660, %v683, 0
          %v716 = vsel %vm660, %v684, 0
          %v719 = vsel %vm660, %v685, 0
          %v722 = vsel %vm660, %v686, 0
          %v725 = vsel %vm660, %v687, 0
          %v728 = vsel %vm660, %v688, 0
          %v731 = vsel %vm660, %v689, 0
          %v734 = vsel %vm660, %v690, 0
          %v737 = vsel %vm660, %v691, 0
          %v740 = vsel %vm660, %v692, 0
          %v743 = vsel %vm660, %v693, 0
          %v746 = vsel %vm660, %v694, 0
          %v749 = vsel %vm660, %v695, 0
          %v752 = vsel %vm660, %v696, 0
          %754 = vmatprep.subr.mxu0 0.0
          %755 = vmatpush1.msra.mxu0 %v697
          %756 = vmatprep.subr.mxu0 0.0
          %757 = vmatpush1.msra.mxu0 %v698
          %758 = vmatprep.subr.mxu0 0.0
          %759 = vmatpush1.msra.mxu0 0.0
          %760 = vmatprep.subr.mxu0 0.0
          %761 = vmatpush1.msra.mxu0 0.0
          %762 = vmatprep.subr.mxu0 0.0
          %763 = vmatpush1.msra.mxu0 0.0
          %764 = vmatprep.subr.mxu0 0.0
          %765 = vmatpush1.msra.mxu0 0.0
          %766 = vmatprep.subr.mxu0 0.0
          %767 = vmatpush1.msra.mxu0 0.0
          %768 = vmatprep.subr.mxu0 0.0
          %769 = vmatpush1.msra.mxu0 0.0
          %770 = vmatprep.subr.mxu0 0.0
          %771 = vmatpush1.msra.mxu0 0.0
          %772 = vmatprep.subr.mxu0 0.0
          %773 = vmatpush1.msra.mxu0 0.0
          %774 = vmatprep.subr.mxu0 0.0
          %775 = vmatpush1.msra.mxu0 0.0
          %776 = vmatprep.subr.mxu0 0.0
          %777 = vmatpush1.msra.mxu0 0.0
          %778 = vmatprep.subr.mxu0 0.0
          %779 = vmatpush1.msra.mxu0 0.0
          %780 = vmatprep.subr.mxu0 0.0
          %781 = vmatpush1.msra.mxu0 0.0
          %782 = vmatprep.subr.mxu0 0.0
          %783 = vmatpush1.msra.mxu0 0.0
          %784 = vmatprep.subr.mxu0 0.0
          %785 = vmatpush1.msra.mxu0 0.0
          %786 = vmatprep.subr.mxu0 0.0
          %787 = vmatpush1.msra.mxu0 0.0
          %788 = vmatprep.subr.mxu0 0.0
          %789 = vmatpush1.msra.mxu0 0.0
          %790 = vmatprep.subr.mxu0 0.0
          %791 = vmatpush1.msra.mxu0 0.0
          %792 = vmatprep.subr.mxu0 0.0
          %793 = vmatpush1.msra.mxu0 0.0
          %794 = vmatprep.subr.mxu0 0.0
          %795 = vmatpush1.msra.mxu0 0.0
          %796 = vmatprep.subr.mxu0 0.0
          %797 = vmatpush1.msra.mxu0 0.0
          %798 = vmatprep.subr.mxu0 0.0
          %799 = vmatpush1.msra.mxu0 0.0
          %800 = vmatprep.subr.mxu0 0.0
          %801 = vmatpush1.msra.mxu0 0.0
          %802 = vmatprep.subr.mxu0 0.0
          %803 = vmatpush1.msra.mxu0 0.0
          %804 = vmatprep.subr.mxu0 0.0
          %805 = vmatpush1.msra.mxu0 0.0
          %806 = vmatprep.subr.mxu0 0.0
          %807 = vmatpush1.msra.mxu0 0.0
          %808 = vmatprep.subr.mxu0 0.0
          %809 = vmatpush1.msra.mxu0 0.0
          %810 = vmatprep.subr.mxu0 0.0
          %811 = vmatpush1.msra.mxu0 0.0
          %812 = vmatprep.subr.mxu0 0.0
          %813 = vmatpush1.msra.mxu0 0.0
          %814 = vmatprep.subr.mxu0 0.0
          %815 = vmatpush1.msra.mxu0 0.0
          %816 = vmatprep.subr.mxu0 0.0
          %817 = vmatpush1.msra.mxu0 0.0
          %818 = vmatprep.mubr.f32.mxu0 0.0
          %819 = vmatmul.mubr.f32.gmra.mrb[0].mxu0 %v707
          %v820 = vpop.f32.mrb[0].mxu0
          %v821 = vadd.f32 %v704, %v820
          %v822 = vpop.f32.mrb[0].mxu0
          %823 = vmatprep.mubr.f32.mxu0 0.0
          %824 = vmatmul.mubr.f32.gmra.mrb[0].mxu0 %v710
          %v825 = vpop.f32.mrb[0].mxu0
          %v826 = vadd.f32 %v704, %v825
          %v827 = vpop.f32.mrb[0].mxu0
          %828 = vmatprep.mubr.f32.mxu0 0.0
          %829 = vmatmul.mubr.f32.gmra.mrb[0].mxu0 %v713
          %v830 = vpop.f32.mrb[0].mxu0
          %v831 = vadd.f32 %v704, %v830
          %v832 = vpop.f32.mrb[0].mxu0
          %833 = vmatprep.mubr.f32.mxu0 0.0
          %834 = vmatmul.mubr.f32.gmra.mrb[0].mxu0 %v716
          %v835 = vpop.f32.mrb[0].mxu0
          %v836 = vadd.f32 %v704, %v835
          %v837 = vpop.f32.mrb[0].mxu0
          %838 = vmatprep.mubr.f32.mxu0 0.0
          %839 = vmatmul.mubr.f32.gmra.mrb[0].mxu0 %v719
          %v840 = vpop.f32.mrb[0].mxu0
          %v841 = vadd.f32 %v704, %v840
          %v842 = vpop.f32.mrb[0].mxu0
          %843 = vmatprep.mubr.f32.mxu0 0.0
          %844 = vmatmul.mubr.f32.gmra.mrb[0].mxu0 %v722
          %v845 = vpop.f32.mrb[0].mxu0
          %v846 = vadd.f32 %v704, %v845
          %v847 = vpop.f32.mrb[0].mxu0
          %848 = vmatprep.mubr.f32.mxu0 0.0
          %849 = vmatmul.mubr.f32.gmra.mrb[0].mxu0 %v725
          %v850 = vpop.f32.mrb[0].mxu0
          %v851 = vadd.f32 %v704, %v850
          %v852 = vpop.f32.mrb[0].mxu0
          %853 = vmatprep.mubr.f32.mxu0 0.0
          %854 = vmatmul.mubr.f32.gmra.mrb[0].mxu0 %v728
          %v855 = vpop.f32.mrb[0].mxu0
          %v856 = vadd.f32 %v704, %v855
          %v857 = vpop.f32.mrb[0].mxu0
          %858 = vmatprep.mubr.f32.mxu0 0.0
          %859 = vmatmul.mubr.f32.gmra.mrb[0].mxu0 %v731
          %v860 = vpop.f32.mrb[0].mxu0
          %v861 = vadd.f32 %v704, %v860
          %v862 = vpop.f32.mrb[0].mxu0
          %863 = vmatprep.mubr.f32.mxu0 0.0
          %864 = vmatmul.mubr.f32.gmra.mrb[0].mxu0 %v734
          %v865 = vpop.f32.mrb[0].mxu0
          %v866 = vadd.f32 %v704, %v865
          %v867 = vpop.f32.mrb[0].mxu0
          %868 = vmatprep.mubr.f32.mxu0 0.0
          %869 = vmatmul.mubr.f32.gmra.mrb[0].mxu0 %v737
          %v870 = vpop.f32.mrb[0].mxu0
          %v871 = vadd.f32 %v704, %v870
          %v872 = vpop.f32.mrb[0].mxu0
          %873 = vmatprep.mubr.f32.mxu0 0.0
          %874 = vmatmul.mubr.f32.gmra.mrb[0].mxu0 %v740
          %v875 = vpop.f32.mrb[0].mxu0
          %v876 = vadd.f32 %v704, %v875
          %v877 = vpop.f32.mrb[0].mxu0
          %878 = vmatprep.mubr.f32.mxu0 0.0
          %879 = vmatmul.mubr.f32.gmra.mrb[0].mxu0 %v743
          %v880 = vpop.f32.mrb[0].mxu0
          %v881 = vadd.f32 %v704, %v880
          %v882 = vpop.f32.mrb[0].mxu0
          %883 = vmatprep.mubr.f32.mxu0 0.0
          %884 = vmatmul.mubr.f32.gmra.mrb[0].mxu0 %v746
          %v885 = vpop.f32.mrb[0].mxu0
          %v886 = vadd.f32 %v704, %v885
          %v887 = vpop.f32.mrb[0].mxu0
          %888 = vmatprep.mubr.f32.mxu0 0.0
          %889 = vmatmul.mubr.f32.gmra.mrb[0].mxu0 %v749
          %v890 = vpop.f32.mrb[0].mxu0
          %v891 = vadd.f32 %v704, %v890
          %v892 = vpop.f32.mrb[0].mxu0
          %893 = vmatprep.mubr.f32.mxu0 0.0
          %894 = vmatmul.mubr.f32.gmra.mrb[0].mxu0 %v752
          %v895 = vpop.f32.mrb[0].mxu0
          %v896 = vadd.f32 %v704, %v895
          %v897 = vpop.f32.mrb[0].mxu0
          %898 = vdwg.mxu0
          %vm899 = vcmask 64512
          %900 = vst.msk [vmem:[%s373] sm:$0xff] %vm899, %v821
          %901 = vst.msk [vmem:[%s373 + $0x8] sm:$0xff] %vm899, %v826
          %902 = vst.msk [vmem:[%s373 + $0x10] sm:$0xff] %vm899, %v831
          %903 = vst.msk [vmem:[%s373 + $0x18] sm:$0xff] %vm899, %v836
          %904 = vst.msk [vmem:[%s373 + $0x20] sm:$0xff] %vm899, %v841
          %905 = vst.msk [vmem:[%s373 + $0x28] sm:$0xff] %vm899, %v846
          %906 = vst.msk [vmem:[%s373 + $0x30] sm:$0xff] %vm899, %v851
          %907 = vst.msk [vmem:[%s373 + $0x38] sm:$0xff] %vm899, %v856
          %908 = vst.msk [vmem:[%s373 + $0x40] sm:$0xff] %vm899, %v861
          %909 = vst.msk [vmem:[%s373 + $0x48] sm:$0xff] %vm899, %v866
          %910 = vst.msk [vmem:[%s373 + $0x50] sm:$0xff] %vm899, %v871
          %911 = vst.msk [vmem:[%s373 + $0x58] sm:$0xff] %vm899, %v876
          %912 = vst.msk [vmem:[%s373 + $0x60] sm:$0xff] %vm899, %v881
          %913 = vst.msk [vmem:[%s373 + $0x68] sm:$0xff] %vm899, %v886
          %914 = vst.msk [vmem:[%s373 + $0x70] sm:$0xff] %vm899, %v891
          %915 = vst.msk [vmem:[%s373 + $0x78] sm:$0xff] %vm899, %v896
          %v916 = vxor.u32 %v821, 2147483648
          %v917 = vxor.u32 %v826, 2147483648
          %v918 = vxor.u32 %v831, 2147483648
          %v919 = vxor.u32 %v836, 2147483648
          %v920 = vxor.u32 %v841, 2147483648
          %v921 = vxor.u32 %v846, 2147483648
          %v922 = vxor.u32 %v851, 2147483648
          %v923 = vxor.u32 %v856, 2147483648
          %v924 = vxor.u32 %v861, 2147483648
          %v925 = vxor.u32 %v866, 2147483648
          %v926 = vxor.u32 %v871, 2147483648
          %v927 = vxor.u32 %v876, 2147483648
          %v928 = vxor.u32 %v881, 2147483648
          %v929 = vxor.u32 %v886, 2147483648
          %v930 = vxor.u32 %v891, 2147483648
          %v931 = vxor.u32 %v896, 2147483648
          %v932 = vmul.f32 %v916, 1.442695
          %v933 = vpow.pop %v932
          %v934 = vmul.f32 %v917, 1.442695
          %v935 = vpow.pop %v934
          %v936 = vmul.f32 %v918, 1.442695
          %v937 = vpow.pop %v936
          %v938 = vmul.f32 %v919, 1.442695
          %v939 = vpow.pop %v938
          %v940 = vmul.f32 %v920, 1.442695
          %v941 = vpow.pop %v940
          %v942 = vmul.f32 %v921, 1.442695
          %v943 = vpow.pop %v942
          %v944 = vmul.f32 %v922, 1.442695
          %v945 = vpow.pop %v944
          %v946 = vmul.f32 %v923, 1.442695
          %v947 = vpow.pop %v946
          %v948 = vmul.f32 %v924, 1.442695
          %v949 = vpow.pop %v948
          %v950 = vmul.f32 %v925, 1.442695
          %v951 = vpow.pop %v950
          %v952 = vmul.f32 %v926, 1.442695
          %v953 = vpow.pop %v952
          %v954 = vmul.f32 %v927, 1.442695
          %v955 = vpow.pop %v954
          %v956 = vmul.f32 %v928, 1.442695
          %v957 = vpow.pop %v956
          %v958 = vmul.f32 %v929, 1.442695
          %v959 = vpow.pop %v958
          %v960 = vmul.f32 %v930, 1.442695
          %v961 = vpow.pop %v960
          %v962 = vmul.f32 %v931, 1.442695
          %v963 = vpow.pop %v962
          %v964 = vadd.f32 %v933, 1.0
          %v965 = vadd.f32 %v935, 1.0
          %v966 = vadd.f32 %v937, 1.0
          %v967 = vadd.f32 %v939, 1.0
          %v968 = vadd.f32 %v941, 1.0
          %v969 = vadd.f32 %v943, 1.0
          %v970 = vadd.f32 %v945, 1.0
          %v971 = vadd.f32 %v947, 1.0
          %v972 = vadd.f32 %v949, 1.0
          %v973 = vadd.f32 %v951, 1.0
          %v974 = vadd.f32 %v953, 1.0
          %v975 = vadd.f32 %v955, 1.0
          %v976 = vadd.f32 %v957, 1.0
          %v977 = vadd.f32 %v959, 1.0
          %v978 = vadd.f32 %v961, 1.0
          %v979 = vadd.f32 %v963, 1.0
          %v980 = vrcp.pop %v964
          %v981 = vmul.f32 1.0, %v980
          %v982 = vrcp.pop %v965
          %v983 = vmul.f32 1.0, %v982
          %v984 = vrcp.pop %v966
          %v985 = vmul.f32 1.0, %v984
          %v986 = vrcp.pop %v967
          %v987 = vmul.f32 1.0, %v986
          %v988 = vrcp.pop %v968
          %v989 = vmul.f32 1.0, %v988
          %v990 = vrcp.pop %v969
          %v991 = vmul.f32 1.0, %v990
          %v992 = vrcp.pop %v970
          %v993 = vmul.f32 1.0, %v992
          %v994 = vrcp.pop %v971
          %v995 = vmul.f32 1.0, %v994
          %v996 = vrcp.pop %v972
          %v997 = vmul.f32 1.0, %v996
          %v998 = vrcp.pop %v973
          %v999 = vmul.f32 1.0, %v998
          %v1000 = vrcp.pop %v974
          %v1001 = vmul.f32 1.0, %v1000
          %v1002 = vrcp.pop %v975
          %v1003 = vmul.f32 1.0, %v1002
          %v1004 = vrcp.pop %v976
          %v1005 = vmul.f32 1.0, %v1004
          %v1006 = vrcp.pop %v977
          %v1007 = vmul.f32 1.0, %v1006
          %v1008 = vrcp.pop %v978
          %v1009 = vmul.f32 1.0, %v1008
          %v1010 = vrcp.pop %v979
          %v1011 = vmul.f32 1.0, %v1010
          %1028 = vrot.lane.b32.xlu0 %v981, 120
          %v1029 = vpop.permute.xlu0 %1028
          %1030 = vrot.lane.b32.xlu0 %v983, 120
          %v1031 = vpop.permute.xlu0 %1030
          %1032 = vrot.lane.b32.xlu0 %v985, 120
          %v1033 = vpop.permute.xlu0 %1032
          %1034 = vrot.lane.b32.xlu0 %v987, 120
          %v1035 = vpop.permute.xlu0 %1034
          %1036 = vrot.lane.b32.xlu0 %v989, 120
          %v1037 = vpop.permute.xlu0 %1036
          %1038 = vrot.lane.b32.xlu0 %v991, 120
          %v1039 = vpop.permute.xlu0 %1038
          %1040 = vrot.lane.b32.xlu0 %v993, 120
          %v1041 = vpop.permute.xlu0 %1040
          %1042 = vrot.lane.b32.xlu0 %v995, 120
          %v1043 = vpop.permute.xlu0 %1042
          %1044 = vrot.lane.b32.xlu0 %v997, 120
          %v1045 = vpop.permute.xlu0 %1044
          %1046 = vrot.lane.b32.xlu0 %v999, 120
          %v1047 = vpop.permute.xlu0 %1046
          %1048 = vrot.lane.b32.xlu0 %v1001, 120
          %v1049 = vpop.permute.xlu0 %1048
          %1050 = vrot.lane.b32.xlu0 %v1003, 120
          %v1051 = vpop.permute.xlu0 %1050
          %1052 = vrot.lane.b32.xlu0 %v1005, 120
          %v1053 = vpop.permute.xlu0 %1052
          %1054 = vrot.lane.b32.xlu0 %v1007, 120
          %v1055 = vpop.permute.xlu0 %1054
          %1056 = vrot.lane.b32.xlu0 %v1009, 120
          %v1057 = vpop.permute.xlu0 %1056
          %1058 = vrot.lane.b32.xlu0 %v1011, 120
          %v1059 = vpop.permute.xlu0 %1058
          %vm1076 = vcmask 7168
          %1077 = vst.msk [vmem:[%s379] sm:$0xff] %vm1076, %v1029
          %1078 = vst.msk [vmem:[%s379 + $0x8] sm:$0xff] %vm1076, %v1031
          %1079 = vst.msk [vmem:[%s379 + $0x10] sm:$0xff] %vm1076, %v1033
          %1080 = vst.msk [vmem:[%s379 + $0x18] sm:$0xff] %vm1076, %v1035
          %1081 = vst.msk [vmem:[%s379 + $0x20] sm:$0xff] %vm1076, %v1037
          %1082 = vst.msk [vmem:[%s379 + $0x28] sm:$0xff] %vm1076, %v1039
          %1083 = vst.msk [vmem:[%s379 + $0x30] sm:$0xff] %vm1076, %v1041
          %1084 = vst.msk [vmem:[%s379 + $0x38] sm:$0xff] %vm1076, %v1043
          %1085 = vst.msk [vmem:[%s379 + $0x40] sm:$0xff] %vm1076, %v1045
          %1086 = vst.msk [vmem:[%s379 + $0x48] sm:$0xff] %vm1076, %v1047
          %1087 = vst.msk [vmem:[%s379 + $0x50] sm:$0xff] %vm1076, %v1049
          %1088 = vst.msk [vmem:[%s379 + $0x58] sm:$0xff] %vm1076, %v1051
          %1089 = vst.msk [vmem:[%s379 + $0x60] sm:$0xff] %vm1076, %v1053
          %1090 = vst.msk [vmem:[%s379 + $0x68] sm:$0xff] %vm1076, %v1055
          %1091 = vst.msk [vmem:[%s379 + $0x70] sm:$0xff] %vm1076, %v1057
          %1092 = vst.msk [vmem:[%s379 + $0x78] sm:$0xff] %vm1076, %v1059
        $region85: #{encoder_forward.4} parent=72 // pred_fallthru
          _
        %s1093 = smul.u32 16, %s21
        %p1094 = scmp.lt.s32.totalorder %s1093, 31
        %s1095 = scalar_select %p1094, %s1093, 31
        %s1096 = smul.addr %s1095, 8
        %s1097 = scalar_lea.vmem %s4, %s1096
        %s1098 = smul.u32 16, %s21
        %p1099 = scmp.lt.s32.totalorder %s1098, 31
        %s1100 = scalar_select %p1099, %s1098, 31
        %s1101 = smul.addr %s1100, 8
        %s1102 = scalar_lea.vmem %s5, %s1101
        // Predicated region
        $region86: #{encoder_forward.4} parent=72 // pred_check
          %p1103 = pneg %p143
        $region87: #{encoder_forward.4} parent=72 // pred_check_branch
          %1105 = sbr.rel (%p1103) target = $region89
        $region88: #{encoder_forward.4} parent=72 // pred_region
          %s1106 = smul.u32 16, %s21
        $region89: #{encoder_forward.4} parent=72 // pred_fallthru
          _
        // Predicated region
        $region90: #{encoder_forward.4} parent=72 // pred_check
          %p1107 = pneg %p169
        $region91: #{encoder_forward.4} parent=72 // pred_check_branch
          %1109 = sbr.rel (%p1107) target = $region93
        $region92: #{encoder_forward.4} parent=72 // pred_region
          %s1110 = smul.u32 16, %s21
        $region93: #{encoder_forward.4} parent=72 // pred_fallthru
          _
      $region73: #{encoder_forward.4} parent=5 // pred_fallthru
        _
      %p1111 = scmp.le.s32.totalorder 2, %s12
      // Predicated region
      $region94: #{encoder_forward.4} parent=5 // pred_check
        %p1112 = pneg %p1111
      $region95: #{encoder_forward.4} parent=5 // pred_check_branch
        %1114 = sbr.rel (%p1112) target = $region97
      $region96: #{encoder_forward.4} parent=5 // pred_region
        %s1115 = ssub.s32 %s12, 2
        // Predicated region
        $region98: #{encoder_forward.4} parent=96 // pred_check
          %p1116 = pneg %p149
        $region99: #{encoder_forward.4} parent=96 // pred_check_branch
          %1118 = sbr.rel (%p1116) target = $region101
        $region100: #{encoder_forward.4} parent=96 // pred_region
          %s1119 = smul.u32 16, %s23
          %p1120 = scmp.lt.s32.totalorder %s1119, 31
          %s1121 = scalar_select %p1120, %s1119, 31
          %s1122 = smul.addr %s1121, 8
          %s1123 = scalar_lea.vmem %s4, %s1122
        $region101: #{encoder_forward.4} parent=96 // pred_fallthru
          _
        // Predicated region
        $region102: #{encoder_forward.4} parent=96 // pred_check
          %p1124 = pneg %p175
        $region103: #{encoder_forward.4} parent=96 // pred_check_branch
          %1126 = sbr.rel (%p1124) target = $region105
        $region104: #{encoder_forward.4} parent=96 // pred_region
          %s1127 = smul.u32 16, %s23
          %p1128 = scmp.lt.s32.totalorder %s1127, 31
          %s1129 = scalar_select %p1128, %s1127, 31
          %s1130 = smul.addr %s1129, 8
          %s1131 = scalar_lea.vmem %s5, %s1130
        $region105: #{encoder_forward.4} parent=96 // pred_fallthru
          _
      $region97: #{encoder_forward.4} parent=5 // pred_fallthru
        _
    $region6: #{encoder_forward.4} parent=1 // loop_footer
      %s16 = sadd.s32 1, %s12
    $region7: #{encoder_forward.4} parent=1 // loop_footer_branch
      %11 = sbr.rel target = $region3
    $region8: #{encoder_forward.4} parent=1 // loop_exit
      _

// kernel: encoder_forward.5
$region0: #{encoder_forward.5}
  #allocation0 [shape = 'u32[]', space=smem, size = 0x4, offset = 0x4, fixed_abs, tag = 'smem constant byte address 0x4 - core index']
  #allocation1 [shape = 'u32[144,128]{1,0:T(1,128)}', space=vmem, size = 0x12000, scoped, tag = 'internal scratch']
  %s0 = inlined_call_operand.vmem [shape: f32[256,8], index: 0, kind: input, shape index: {}, may-alias: {0,1}]
  %s1 = inlined_call_operand.vmem [shape: f32[256,8], index: 1, kind: input, shape index: {}, may-alias: {0,1}]
  %s2 = inlined_call_operand.vmem [shape: f32[256,1], index: 2, kind: input, shape index: {}]
  %s3 = inlined_call_operand.hbm [shape: bf16[256,256], index: 3, kind: output, shape index: {}]
  %s4 = sld [smem:[#allocation0]]
  $region45: #{encoder_forward.5} parent=0
    _
  %s6 = ssub.s32 1, %s4
  %s7 = scalar_select 0, %s6, %s4
  $region1: #{encoder_forward.5} parent=0
    #allocation2 [shape = 'u8[131072]{0}', space=vmem, size = 0x20000, scoped, tag = 'output window, operand 0']
    #allocation3 [shape = 's32[2]{0}', space=sflag, size = 0x8, scoped, tag = 'scoped memory for encoder_forward.5']
    %8 = vsyncpa [#allocation3], 0
    %s9 = scalar_lea.sflag [#allocation3], 1
    %10 = vsyncpa %s9, 0
    loop: start=0, step=1, limit=4
    $region2: #{encoder_forward.5} parent=1 // loop_pre_header
      _
    $region3: #{encoder_forward.5} parent=1 // loop_header
      %s12 = sphi 0, %s16
      %p13 = scmp.ge.s32.totalorder %s12, 4
      %s22 = sphi 0, %s24
      %s25 = sphi 0, %s22
      %s26 = sphi 0, %s25
      %s42 = sphi 0, %s26
      %s46 = sphi 0, %s46
      %s48 = sphi 0, %s46
      %s49 = sphi 0, %s48
      %s63 = sphi 0, %s49
      %s69 = sphi 0, %s71
      %s72 = sphi 0, %s69
      %s73 = sphi 0, %s72
      %s89 = sphi 0, %s73
      %s95 = sphi 0, %s97
      %s98 = sphi 0, %s95
      %s99 = sphi 0, %s98
      %s115 = sphi 0, %s99
    $region4: #{encoder_forward.5} parent=1 // loop_header_branch
      %15 = sbr.rel (%p13) target = $region8
    $region5: #{encoder_forward.5} parent=1 // loop_body
      %s17 = ssub.s32 %s12, 1
      %s18 = ssub.s32 %s12, 2
      %s19 = sadd.s32 %s12, 1
      %s20 = ssub.s32 %s12, %s19
      %p21 = scmp.eq.s32.totalorder %s20, 0
      %s23 = sadd.s32 %s22, 1
      %s24 = scalar_select %p21, %s22, %s23
      %p27 = pneg %p21
      %p28 = scmp.eq.s32.totalorder %s12, 1
      %p29 = por %p27, %p28
      %p30 = scmp.ne.s32.totalorder %s22, %s25
      %p31 = scmp.eq.s32.totalorder %s12, 0
      %p32 = por %p30, %p31
      %p33 = scmp.ne.s32.totalorder %s22, %s25
      %p34 = scmp.eq.s32.totalorder %s17, 1
      %p35 = por %p33, %p34
      %p36 = scmp.ne.s32.totalorder %s25, %s26
      %p37 = scmp.eq.s32.totalorder %s17, 0
      %p38 = por %p36, %p37
      %p39 = scmp.ne.s32.totalorder %s25, %s26
      %p40 = scmp.eq.s32.totalorder %s18, 1
      %p41 = por %p39, %p40
      %p43 = scmp.ne.s32.totalorder %s26, %s42
      %p44 = scmp.eq.s32.totalorder %s18, 0
      %p45 = por %p43, %p44
      %s47 = sadd.s32 %s46, 1
      %p50 = scmp.eq.s32.totalorder %s12, 1
      %p51 = scmp.ne.s32.totalorder %s46, %s48
      %p52 = scmp.eq.s32.totalorder %s12, 0
      %p53 = por %p51, %p52
      %p54 = scmp.ne.s32.totalorder %s46, %s48
      %p55 = scmp.eq.s32.totalorder %s17, 1
      %p56 = por %p54, %p55
      %p57 = scmp.ne.s32.totalorder %s48, %s49
      %p58 = scmp.eq.s32.totalorder %s17, 0
      %p59 = por %p57, %p58
      %p60 = scmp.ne.s32.totalorder %s48, %s49
      %p61 = scmp.eq.s32.totalorder %s18, 1
      %p62 = por %p60, %p61
      %p64 = scmp.ne.s32.totalorder %s49, %s63
      %p65 = scmp.eq.s32.totalorder %s18, 0
      %p66 = por %p64, %p65
      %s67 = ssub.s32 %s12, %s19
      %p68 = scmp.eq.s32.totalorder %s67, 0
      %s70 = sadd.s32 %s69, 1
      %s71 = scalar_select %p68, %s69, %s70
      %p74 = pneg %p68
      %p75 = scmp.eq.s32.totalorder %s12, 1
      %p76 = por %p74, %p75
      %p77 = scmp.ne.s32.totalorder %s69, %s72
      %p78 = scmp.eq.s32.totalorder %s12, 0
      %p79 = por %p77, %p78
      %p80 = scmp.ne.s32.totalorder %s69, %s72
      %p81 = scmp.eq.s32.totalorder %s17, 1
      %p82 = por %p80, %p81
      %p83 = scmp.ne.s32.totalorder %s72, %s73
      %p84 = scmp.eq.s32.totalorder %s17, 0
      %p85 = por %p83, %p84
      %p86 = scmp.ne.s32.totalorder %s72, %s73
      %p87 = scmp.eq.s32.totalorder %s18, 1
      %p88 = por %p86, %p87
      %p90 = scmp.ne.s32.totalorder %s73, %s89
      %p91 = scmp.eq.s32.totalorder %s18, 0
      %p92 = por %p90, %p91
      %s93 = ssub.s32 %s12, %s19
      %p94 = scmp.eq.s32.totalorder %s93, 0
      %s96 = sadd.s32 %s95, 1
      %s97 = scalar_select %p94, %s95, %s96
      %p100 = pneg %p94
      %p101 = scmp.eq.s32.totalorder %s12, 1
      %p102 = por %p100, %p101
      %p103 = scmp.ne.s32.totalorder %s95, %s98
      %p104 = scmp.eq.s32.totalorder %s12, 0
      %p105 = por %p103, %p104
      %p106 = scmp.ne.s32.totalorder %s95, %s98
      %p107 = scmp.eq.s32.totalorder %s17, 1
      %p108 = por %p106, %p107
      %p109 = scmp.ne.s32.totalorder %s98, %s99
      %p110 = scmp.eq.s32.totalorder %s17, 0
      %p111 = por %p109, %p110
      %p112 = scmp.ne.s32.totalorder %s98, %s99
      %p113 = scmp.eq.s32.totalorder %s18, 1
      %p114 = por %p112, %p113
      %p116 = scmp.ne.s32.totalorder %s99, %s115
      %p117 = scmp.eq.s32.totalorder %s18, 0
      %p118 = por %p116, %p117
      %p119 = scmp.le.s32.totalorder 1, %s12
      %p120 = scmp.lt.s32.totalorder %s12, 3
      %p121 = pnand %p119, %p120
      %p122 = pneg %p121
      // Predicated region
      $region9: #{encoder_forward.5} parent=5 // pred_check
        _
      $region10: #{encoder_forward.5} parent=5 // pred_check_branch
        %124 = sbr.rel (%p121) target = $region12
      $region11: #{encoder_forward.5} parent=5 // pred_region
        %s125 = ssub.s32 %s12, 1
        // Predicated region
        $region13: #{encoder_forward.5} parent=11 // pred_check
          %p126 = pneg %p59
        $region14: #{encoder_forward.5} parent=11 // pred_check_branch
          %128 = sbr.rel (%p126) target = $region16
        $region15: #{encoder_forward.5} parent=11 // pred_region
          _
        $region16: #{encoder_forward.5} parent=11 // pred_fallthru
          _
      $region12: #{encoder_forward.5} parent=5 // pred_fallthru
        _
      %p129 = scmp.lt.s32.totalorder %s12, 2
      // Predicated region
      $region17: #{encoder_forward.5} parent=5 // pred_check
        %p130 = pneg %p129
      $region18: #{encoder_forward.5} parent=5 // pred_check_branch
        %132 = sbr.rel (%p130) target = $region20
      $region19: #{encoder_forward.5} parent=5 // pred_region
        // Predicated region
        $region21: #{encoder_forward.5} parent=19 // pred_check
          %p133 = pneg %p32
        $region22: #{encoder_forward.5} parent=19 // pred_check_branch
          %135 = sbr.rel (%p133) target = $region24
        $region23: #{encoder_forward.5} parent=19 // pred_region
          %s136 = smul.u32 16, %s12
          %p137 = scmp.lt.s32.totalorder %s136, 31
          %s138 = scalar_select %p137, %s136, 31
          %s139 = smul.addr %s138, 8
          %s140 = scalar_lea.vmem %s0, %s139
          %s141 = smul.u32 16, %s12
        $region24: #{encoder_forward.5} parent=19 // pred_fallthru
          _
        // Predicated region
        $region25: #{encoder_forward.5} parent=19 // pred_check
          %p142 = pneg %p79
        $region26: #{encoder_forward.5} parent=19 // pred_check_branch
          %144 = sbr.rel (%p142) target = $region28
        $region27: #{encoder_forward.5} parent=19 // pred_region
          %s145 = smul.u32 16, %s12
          %p146 = scmp.lt.s32.totalorder %s145, 31
          %s147 = scalar_select %p146, %s145, 31
          %s148 = smul.addr %s147, 8
          %s149 = scalar_lea.vmem %s2, %s148
          %s150 = smul.u32 16, %s12
        $region28: #{encoder_forward.5} parent=19 // pred_fallthru
          _
      $region20: #{encoder_forward.5} parent=5 // pred_fallthru
        _
      %p151 = scmp.le.s32.totalorder 1, %s12
      %p152 = scmp.lt.s32.totalorder %s12, 3
      %p153 = pnand %p151, %p152
      %p154 = pneg %p153
      // Predicated region
      $region29: #{encoder_forward.5} parent=5 // pred_check
        _
      $region30: #{encoder_forward.5} parent=5 // pred_check_branch
        %156 = sbr.rel (%p153) target = $region32
      $region31: #{encoder_forward.5} parent=5 // pred_region
        %s157 = ssub.s32 %s12, 1
        %s158 = smul.u32 16, %s17
        %p159 = scmp.lt.s32.totalorder %s158, 31
        %s160 = scalar_select %p159, %s158, 31
        %s161 = smul.addr %s160, 8
        %s162 = scalar_lea.vmem %s0, %s161
        %p163 = pneg %p38
        %p164 = pneg %p35
        %p165 = pneg %p59
        %p166 = pneg %p56
        %s167 = smul.u32 16, %s17
        %p168 = scmp.lt.s32.totalorder %s167, 31
        %s169 = scalar_select %p168, %s167, 31
        %s170 = smul.addr %s169, 8
        %s171 = scalar_lea.vmem %s2, %s170
        %p172 = pneg %p85
        %p173 = pneg %p82
        %p174 = pneg %p111
        %p175 = pneg %p108
        %s176 = sand.u32 %s98, 1
        %s177 = scalar_lea.sflag [#allocation3], %s176
        %s178 = sand.u32 %s98, 1
        %s179 = smul.addr %s178, 128
        %s180 = scalar_lea.vmem [#allocation2], %s179
        %s181 = smul.u32 16, %s17
        %p182 = scmp.lt.s32.totalorder %s181, 31
        %s183 = scalar_select %p182, %s181, 31
        %s184 = smul.addr %s183, 8
        %s185 = scalar_lea.vmem %s0, %s184
        %s186 = smul.u32 16, %s17
        %s187 = smul.u32 16, %s17
        %p188 = scmp.lt.s32.totalorder %s187, 31
        %s189 = scalar_select %p188, %s187, 31
        %s190 = smul.addr %s189, 8
        %s191 = scalar_lea.vmem %s2, %s190
        %s192 = smul.u32 16, %s17
        %s193 = smul.u32 16, %s17
        %v194 = vld [vmem:[%s185] sm:$0xff]
        %v195 = vld [vmem:[%s185 + $0x8] sm:$0xff]
        %v196 = vld [vmem:[%s185 + $0x10] sm:$0xff]
        %v197 = vld [vmem:[%s185 + $0x18] sm:$0xff]
        %v198 = vld [vmem:[%s185 + $0x20] sm:$0xff]
        %v199 = vld [vmem:[%s185 + $0x28] sm:$0xff]
        %v200 = vld [vmem:[%s185 + $0x30] sm:$0xff]
        %v201 = vld [vmem:[%s185 + $0x38] sm:$0xff]
        %v202 = vld [vmem:[%s185 + $0x40] sm:$0xff]
        %v203 = vld [vmem:[%s185 + $0x48] sm:$0xff]
        %v204 = vld [vmem:[%s185 + $0x50] sm:$0xff]
        %v205 = vld [vmem:[%s185 + $0x58] sm:$0xff]
        %v206 = vld [vmem:[%s185 + $0x60] sm:$0xff]
        %v207 = vld [vmem:[%s185 + $0x68] sm:$0xff]
        %v208 = vld [vmem:[%s185 + $0x70] sm:$0xff]
        %v209 = vld [vmem:[%s185 + $0x78] sm:$0xff]
        %v210 = vld [vmem:[%s1] sm:$0xff]
        %v211 = vld [vmem:[%s1 + $0x8] sm:$0xff]
        %v212 = vld [vmem:[%s1 + $0x10] sm:$0xff]
        %v213 = vld [vmem:[%s1 + $0x18] sm:$0xff]
        %v214 = vld [vmem:[%s1 + $0x20] sm:$0xff]
        %v215 = vld [vmem:[%s1 + $0x28] sm:$0xff]
        %v216 = vld [vmem:[%s1 + $0x30] sm:$0xff]
        %v217 = vld [vmem:[%s1 + $0x38] sm:$0xff]
        %v218 = vld [vmem:[%s1 + $0x40] sm:$0xff]
        %v219 = vld [vmem:[%s1 + $0x48] sm:$0xff]
        %v220 = vld [vmem:[%s1 + $0x50] sm:$0xff]
        %v221 = vld [vmem:[%s1 + $0x58] sm:$0xff]
        %v222 = vld [vmem:[%s1 + $0x60] sm:$0xff]
        %v223 = vld [vmem:[%s1 + $0x68] sm:$0xff]
        %v224 = vld [vmem:[%s1 + $0x70] sm:$0xff]
        %v225 = vld [vmem:[%s1 + $0x78] sm:$0xff]
        %v226 = vld [vmem:[%s1 + $0x80] sm:$0xff]
        %v227 = vld [vmem:[%s1 + $0x88] sm:$0xff]
        %v228 = vld [vmem:[%s1 + $0x90] sm:$0xff]
        %v229 = vld [vmem:[%s1 + $0x98] sm:$0xff]
        %v230 = vld [vmem:[%s1 + $0xa0] sm:$0xff]
        %v231 = vld [vmem:[%s1 + $0xa8] sm:$0xff]
        %v232 = vld [vmem:[%s1 + $0xb0] sm:$0xff]
        %v233 = vld [vmem:[%s1 + $0xb8] sm:$0xff]
        %v234 = vld [vmem:[%s1 + $0xc0] sm:$0xff]
        %v235 = vld [vmem:[%s1 + $0xc8] sm:$0xff]
        %v236 = vld [vmem:[%s1 + $0xd0] sm:$0xff]
        %v237 = vld [vmem:[%s1 + $0xd8] sm:$0xff]
        %v238 = vld [vmem:[%s1 + $0xe0] sm:$0xff]
        %v239 = vld [vmem:[%s1 + $0xe8] sm:$0xff]
        %v240 = vld [vmem:[%s1 + $0xf0] sm:$0xff]
        %v241 = vld [vmem:[%s1 + $0xf8] sm:$0xff]
        %vm242 = vcmask 64512
        %v244 = vsel %vm242, %v194, 0
        %v247 = vsel %vm242, %v195, 0
        %v250 = vsel %vm242, %v196, 0
        %v253 = vsel %vm242, %v197, 0
        %v256 = vsel %vm242, %v198, 0
        %v259 = vsel %vm242, %v199, 0
        %v262 = vsel %vm242, %v200, 0
        %v265 = vsel %vm242, %v201, 0
        %v268 = vsel %vm242, %v202, 0
        %v271 = vsel %vm242, %v203, 0
        %v274 = vsel %vm242, %v204, 0
        %v277 = vsel %vm242, %v205, 0
        %v280 = vsel %vm242, %v206, 0
        %v283 = vsel %vm242, %v207, 0
        %v286 = vsel %vm242, %v208, 0
        %v289 = vsel %vm242, %v209, 0
        %v292 = vsel %vm242, %v210, 0
        %v295 = vsel %vm242, %v211, 0
        %v298 = vsel %vm242, %v212, 0
        %v301 = vsel %vm242, %v213, 0
        %v304 = vsel %vm242, %v214, 0
        %v307 = vsel %vm242, %v215, 0
        %v310 = vsel %vm242, %v216, 0
        %v313 = vsel %vm242, %v217, 0
        %v316 = vsel %vm242, %v218, 0
        %v319 = vsel %vm242, %v219, 0
        %v322 = vsel %vm242, %v220, 0
        %v325 = vsel %vm242, %v221, 0
        %v328 = vsel %vm242, %v222, 0
        %v331 = vsel %vm242, %v223, 0
        %v334 = vsel %vm242, %v224, 0
        %v337 = vsel %vm242, %v225, 0
        %v340 = vsel %vm242, %v226, 0
        %v343 = vsel %vm242, %v227, 0
        %v346 = vsel %vm242, %v228, 0
        %v349 = vsel %vm242, %v229, 0
        %v352 = vsel %vm242, %v230, 0
        %v355 = vsel %vm242, %v231, 0
        %v358 = vsel %vm242, %v232, 0
        %v361 = vsel %vm242, %v233, 0
        %v364 = vsel %vm242, %v234, 0
        %v367 = vsel %vm242, %v235, 0
        %v370 = vsel %vm242, %v236, 0
        %v373 = vsel %vm242, %v237, 0
        %v376 = vsel %vm242, %v238, 0
        %v379 = vsel %vm242, %v239, 0
        %v382 = vsel %vm242, %v240, 0
        %v385 = vsel %vm242, %v241, 0
        %387 = vmatprep.subr.mxu0 0.0
        %388 = vmatpush1.xpose.msra.mxu0 %v292
        %389 = vmatprep.subr.mxu0 0.0
        %390 = vmatpush1.xpose.msra.mxu0 %v295
        %391 = vmatprep.subr.mxu0 0.0
        %392 = vmatpush1.xpose.msra.mxu0 %v298
        %393 = vmatprep.subr.mxu0 0.0
        %394 = vmatpush1.xpose.msra.mxu0 %v301
        %395 = vmatprep.subr.mxu0 0.0
        %396 = vmatpush1.xpose.msra.mxu0 %v304
        %397 = vmatprep.subr.mxu0 0.0
        %398 = vmatpush1.xpose.msra.mxu0 %v307
        %399 = vmatprep.subr.mxu0 0.0
        %400 = vmatpush1.xpose.msra.mxu0 %v310
        %401 = vmatprep.subr.mxu0 0.0
        %402 = vmatpush1.xpose.msra.mxu0 %v313
        %403 = vmatprep.subr.mxu0 0.0
        %404 = vmatpush1.xpose.msra.mxu0 %v316
        %405 = vmatprep.subr.mxu0 0.0
        %406 = vmatpush1.xpose.msra.mxu0 %v319
        %407 = vmatprep.subr.mxu0 0.0
        %408 = vmatpush1.xpose.msra.mxu0 %v322
        %409 = vmatprep.subr.mxu0 0.0
        %410 = vmatpush1.xpose.msra.mxu0 %v325
        %411 = vmatprep.subr.mxu0 0.0
        %412 = vmatpush1.xpose.msra.mxu0 %v328
        %413 = vmatprep.subr.mxu0 0.0
        %414 = vmatpush1.xpose.msra.mxu0 %v331
        %415 = vmatprep.subr.mxu0 0.0
        %416 = vmatpush1.xpose.msra.mxu0 %v334
        %417 = vmatprep.subr.mxu0 0.0
        %418 = vmatpush1.xpose.msra.mxu0 %v337
        %419 = vmatprep.subr.mxu0 0.0
        %420 = vmatpush1.xpose.msra.mxu0 %v340
        %421 = vmatprep.subr.mxu0 0.0
        %422 = vmatpush1.xpose.msra.mxu0 %v343
        %423 = vmatprep.subr.mxu0 0.0
        %424 = vmatpush1.xpose.msra.mxu0 %v346
        %425 = vmatprep.subr.mxu0 0.0
        %426 = vmatpush1.xpose.msra.mxu0 %v349
        %427 = vmatprep.subr.mxu0 0.0
        %428 = vmatpush1.xpose.msra.mxu0 %v352
        %429 = vmatprep.subr.mxu0 0.0
        %430 = vmatpush1.xpose.msra.mxu0 %v355
        %431 = vmatprep.subr.mxu0 0.0
        %432 = vmatpush1.xpose.msra.mxu0 %v358
        %433 = vmatprep.subr.mxu0 0.0
        %434 = vmatpush1.xpose.msra.mxu0 %v361
        %435 = vmatprep.subr.mxu0 0.0
        %436 = vmatpush1.xpose.msra.mxu0 %v364
        %437 = vmatprep.subr.mxu0 0.0
        %438 = vmatpush1.xpose.msra.mxu0 %v367
        %439 = vmatprep.subr.mxu0 0.0
        %440 = vmatpush1.xpose.msra.mxu0 %v370
        %441 = vmatprep.subr.mxu0 0.0
        %442 = vmatpush1.xpose.msra.mxu0 %v373
        %443 = vmatprep.subr.mxu0 0.0
        %444 = vmatpush1.xpose.msra.mxu0 %v376
        %445 = vmatprep.subr.mxu0 0.0
        %446 = vmatpush1.xpose.msra.mxu0 %v379
        %447 = vmatprep.subr.mxu0 0.0
        %448 = vmatpush1.xpose.msra.mxu0 %v382
        %449 = vmatprep.subr.mxu0 0.0
        %450 = vmatpush1.xpose.msra.mxu0 %v385
        %451 = vmatprep.mubr.f32.mxu0 0.0
        %452 = vmatmul.mubr.f32.gmra.mrb[0].mxu0 %v244
        %v453 = vpop.f32.mrb[0].mxu0
        %v454 = vadd.f32 0.0, %v453
        %v455 = vpop.f32.mrb[0].mxu0
        %v456 = vadd.f32 0.0, %v455
        %457 = vmatprep.mubr.f32.mxu0 0.0
        %458 = vmatmul.mubr.f32.gmra.mrb[0].mxu0 %v247
        %v459 = vpop.f32.mrb[0].mxu0
        %v460 = vadd.f32 0.0, %v459
        %v461 = vpop.f32.mrb[0].mxu0
        %v462 = vadd.f32 0.0, %v461
        %463 = vmatprep.mubr.f32.mxu0 0.0
        %464 = vmatmul.mubr.f32.gmra.mrb[0].mxu0 %v250
        %v465 = vpop.f32.mrb[0].mxu0
        %v466 = vadd.f32 0.0, %v465
        %v467 = vpop.f32.mrb[0].mxu0
        %v468 = vadd.f32 0.0, %v467
        %469 = vmatprep.mubr.f32.mxu0 0.0
        %470 = vmatmul.mubr.f32.gmra.mrb[0].mxu0 %v253
        %v471 = vpop.f32.mrb[0].mxu0
        %v472 = vadd.f32 0.0, %v471
        %v473 = vpop.f32.mrb[0].mxu0
        %v474 = vadd.f32 0.0, %v473
        %475 = vmatprep.mubr.f32.mxu0 0.0
        %476 = vmatmul.mubr.f32.gmra.mrb[0].mxu0 %v256
        %v477 = vpop.f32.mrb[0].mxu0
        %v478 = vadd.f32 0.0, %v477
        %v479 = vpop.f32.mrb[0].mxu0
        %v480 = vadd.f32 0.0, %v479
        %481 = vmatprep.mubr.f32.mxu0 0.0
        %482 = vmatmul.mubr.f32.gmra.mrb[0].mxu0 %v259
        %v483 = vpop.f32.mrb[0].mxu0
        %v484 = vadd.f32 0.0, %v483
        %v485 = vpop.f32.mrb[0].mxu0
        %v486 = vadd.f32 0.0, %v485
        %487 = vmatprep.mubr.f32.mxu0 0.0
        %488 = vmatmul.mubr.f32.gmra.mrb[0].mxu0 %v262
        %v489 = vpop.f32.mrb[0].mxu0
        %v490 = vadd.f32 0.0, %v489
        %v491 = vpop.f32.mrb[0].mxu0
        %v492 = vadd.f32 0.0, %v491
        %493 = vmatprep.mubr.f32.mxu0 0.0
        %494 = vmatmul.mubr.f32.gmra.mrb[0].mxu0 %v265
        %v495 = vpop.f32.mrb[0].mxu0
        %v496 = vadd.f32 0.0, %v495
        %v497 = vpop.f32.mrb[0].mxu0
        %v498 = vadd.f32 0.0, %v497
        %499 = vmatprep.mubr.f32.mxu0 0.0
        %500 = vmatmul.mubr.f32.gmra.mrb[0].mxu0 %v268
        %v501 = vpop.f32.mrb[0].mxu0
        %v502 = vadd.f32 0.0, %v501
        %v503 = vpop.f32.mrb[0].mxu0
        %v504 = vadd.f32 0.0, %v503
        %505 = vmatprep.mubr.f32.mxu0 0.0
        %506 = vmatmul.mubr.f32.gmra.mrb[0].mxu0 %v271
        %v507 = vpop.f32.mrb[0].mxu0
        %v508 = vadd.f32 0.0, %v507
        %v509 = vpop.f32.mrb[0].mxu0
        %v510 = vadd.f32 0.0, %v509
        %511 = vmatprep.mubr.f32.mxu0 0.0
        %512 = vmatmul.mubr.f32.gmra.mrb[0].mxu0 %v274
        %v513 = vpop.f32.mrb[0].mxu0
        %v514 = vadd.f32 0.0, %v513
        %v515 = vpop.f32.mrb[0].mxu0
        %v516 = vadd.f32 0.0, %v515
        %517 = vmatprep.mubr.f32.mxu0 0.0
        %518 = vmatmul.mubr.f32.gmra.mrb[0].mxu0 %v277
        %v519 = vpop.f32.mrb[0].mxu0
        %v520 = vadd.f32 0.0, %v519
        %v521 = vpop.f32.mrb[0].mxu0
        %v522 = vadd.f32 0.0, %v521
        %523 = vmatprep.mubr.f32.mxu0 0.0
        %524 = vmatmul.mubr.f32.gmra.mrb[0].mxu0 %v280
        %v525 = vpop.f32.mrb[0].mxu0
        %v526 = vadd.f32 0.0, %v525
        %v527 = vpop.f32.mrb[0].mxu0
        %v528 = vadd.f32 0.0, %v527
        %529 = vmatprep.mubr.f32.mxu0 0.0
        %530 = vmatmul.mubr.f32.gmra.mrb[0].mxu0 %v283
        %v531 = vpop.f32.mrb[0].mxu0
        %v532 = vadd.f32 0.0, %v531
        %v533 = vpop.f32.mrb[0].mxu0
        %v534 = vadd.f32 0.0, %v533
        %535 = vmatprep.mubr.f32.mxu0 0.0
        %536 = vmatmul.mubr.f32.gmra.mrb[0].mxu0 %v286
        %v537 = vpop.f32.mrb[0].mxu0
        %v538 = vadd.f32 0.0, %v537
        %v539 = vpop.f32.mrb[0].mxu0
        %v540 = vadd.f32 0.0, %v539
        %541 = vmatprep.mubr.f32.mxu0 0.0
        %542 = vmatmul.mubr.f32.gmra.mrb[0].mxu0 %v289
        %v543 = vpop.f32.mrb[0].mxu0
        %v544 = vadd.f32 0.0, %v543
        %v545 = vpop.f32.mrb[0].mxu0
        %v546 = vadd.f32 0.0, %v545
        %547 = vdwg.mxu0
        %v548 = vmax.f32 %v454, %v456
        %549 = vmax.xlane.f32.xlu0 %v548
        %v550 = vpop.xlane.xlu0 %549
        %v551 = vmax.f32 %v460, %v462
        %552 = vmax.xlane.f32.xlu0 %v551
        %v553 = vpop.xlane.xlu0 %552
        %v554 = vmax.f32 %v466, %v468
        %555 = vmax.xlane.f32.xlu0 %v554
        %v556 = vpop.xlane.xlu0 %555
        %v557 = vmax.f32 %v472, %v474
        %558 = vmax.xlane.f32.xlu0 %v557
        %v559 = vpop.xlane.xlu0 %558
        %v560 = vmax.f32 %v478, %v480
        %561 = vmax.xlane.f32.xlu0 %v560
        %v562 = vpop.xlane.xlu0 %561
        %v563 = vmax.f32 %v484, %v486
        %564 = vmax.xlane.f32.xlu0 %v563
        %v565 = vpop.xlane.xlu0 %564
        %v566 = vmax.f32 %v490, %v492
        %567 = vmax.xlane.f32.xlu0 %v566
        %v568 = vpop.xlane.xlu0 %567
        %v569 = vmax.f32 %v496, %v498
        %570 = vmax.xlane.f32.xlu0 %v569
        %v571 = vpop.xlane.xlu0 %570
        %v572 = vmax.f32 %v502, %v504
        %573 = vmax.xlane.f32.xlu0 %v572
        %v574 = vpop.xlane.xlu0 %573
        %v575 = vmax.f32 %v508, %v510
        %576 = vmax.xlane.f32.xlu0 %v575
        %v577 = vpop.xlane.xlu0 %576
        %v578 = vmax.f32 %v514, %v516
        %579 = vmax.xlane.f32.xlu0 %v578
        %v580 = vpop.xlane.xlu0 %579
        %v581 = vmax.f32 %v520, %v522
        %582 = vmax.xlane.f32.xlu0 %v581
        %v583 = vpop.xlane.xlu0 %582
        %v584 = vmax.f32 %v526, %v528
        %585 = vmax.xlane.f32.xlu0 %v584
        %v586 = vpop.xlane.xlu0 %585
        %v587 = vmax.f32 %v532, %v534
        %588 = vmax.xlane.f32.xlu0 %v587
        %v589 = vpop.xlane.xlu0 %588
        %v590 = vmax.f32 %v538, %v540
        %591 = vmax.xlane.f32.xlu0 %v590
        %v592 = vpop.xlane.xlu0 %591
        %v593 = vmax.f32 %v544, %v546
        %594 = vmax.xlane.f32.xlu0 %v593
        %v595 = vpop.xlane.xlu0 %594
        %v596 = vsub.f32 %v454, %v550
        %v597 = vsub.f32 %v456, %v550
        %v598 = vsub.f32 %v460, %v553
        %v599 = vsub.f32 %v462, %v553
        %v600 = vsub.f32 %v466, %v556
        %v601 = vsub.f32 %v468, %v556
        %v602 = vsub.f32 %v472, %v559
        %v603 = vsub.f32 %v474, %v559
        %v604 = vsub.f32 %v478, %v562
        %v605 = vsub.f32 %v480, %v562
        %v606 = vsub.f32 %v484, %v565
        %v607 = vsub.f32 %v486, %v565
        %v608 = vsub.f32 %v490, %v568
        %v609 = vsub.f32 %v492, %v568
        %v610 = vsub.f32 %v496, %v571
        %v611 = vsub.f32 %v498, %v571
        %v612 = vsub.f32 %v502, %v574
        %v613 = vsub.f32 %v504, %v574
        %v614 = vsub.f32 %v508, %v577
        %v615 = vsub.f32 %v510, %v577
        %v616 = vsub.f32 %v514, %v580
        %v617 = vsub.f32 %v516, %v580
        %v618 = vsub.f32 %v520, %v583
        %v619 = vsub.f32 %v522, %v583
        %v620 = vsub.f32 %v526, %v586
        %v621 = vsub.f32 %v528, %v586
        %v622 = vsub.f32 %v532, %v589
        %v623 = vsub.f32 %v534, %v589
        %v624 = vsub.f32 %v538, %v592
        %v625 = vsub.f32 %v540, %v592
        %v626 = vsub.f32 %v544, %v595
        %v627 = vsub.f32 %v546, %v595
        %v628 = vmul.f32 %v596, 1.442695
        %v629 = vpow.pop %v628
        %v630 = vmul.f32 %v597, 1.442695
        %v631 = vpow.pop %v630
        %v632 = vmul.f32 %v598, 1.442695
        %v633 = vpow.pop %v632
        %v634 = vmul.f32 %v599, 1.442695
        %v635 = vpow.pop %v634
        %v636 = vmul.f32 %v600, 1.442695
        %v637 = vpow.pop %v636
        %v638 = vmul.f32 %v601, 1.442695
        %v639 = vpow.pop %v638
        %v640 = vmul.f32 %v602, 1.442695
        %v641 = vpow.pop %v640
        %v642 = vmul.f32 %v603, 1.442695
        %v643 = vpow.pop %v642
        %v644 = vmul.f32 %v604, 1.442695
        %v645 = vpow.pop %v644
        %v646 = vmul.f32 %v605, 1.442695
        %v647 = vpow.pop %v646
        %v648 = vmul.f32 %v606, 1.442695
        %v649 = vpow.pop %v648
        %v650 = vmul.f32 %v607, 1.442695
        %v651 = vpow.pop %v650
        %v652 = vmul.f32 %v608, 1.442695
        %v653 = vpow.pop %v652
        %v654 = vmul.f32 %v609, 1.442695
        %v655 = vpow.pop %v654
        %v656 = vmul.f32 %v610, 1.442695
        %v657 = vpow.pop %v656
        %v658 = vmul.f32 %v611, 1.442695
        %v659 = vpow.pop %v658
        %v660 = vmul.f32 %v612, 1.442695
        %v661 = vpow.pop %v660
        %v662 = vmul.f32 %v613, 1.442695
        %v663 = vpow.pop %v662
        %v664 = vmul.f32 %v614, 1.442695
        %v665 = vpow.pop %v664
        %v666 = vmul.f32 %v615, 1.442695
        %v667 = vpow.pop %v666
        %v668 = vmul.f32 %v616, 1.442695
        %v669 = vpow.pop %v668
        %v670 = vmul.f32 %v617, 1.442695
        %v671 = vpow.pop %v670
        %v672 = vmul.f32 %v618, 1.442695
        %v673 = vpow.pop %v672
        %v674 = vmul.f32 %v619, 1.442695
        %v675 = vpow.pop %v674
        %v676 = vmul.f32 %v620, 1.442695
        %v677 = vpow.pop %v676
        %v678 = vmul.f32 %v621, 1.442695
        %v679 = vpow.pop %v678
        %v680 = vmul.f32 %v622, 1.442695
        %v681 = vpow.pop %v680
        %v682 = vmul.f32 %v623, 1.442695
        %v683 = vpow.pop %v682
        %v684 = vmul.f32 %v624, 1.442695
        %v685 = vpow.pop %v684
        %v686 = vmul.f32 %v625, 1.442695
        %v687 = vpow.pop %v686
        %v688 = vmul.f32 %v626, 1.442695
        %v689 = vpow.pop %v688
        %v690 = vmul.f32 %v627, 1.442695
        %v691 = vpow.pop %v690
        %v692 = vld [vmem:[%s191] sm:$0xff]
        %v693 = vld [vmem:[%s191 + $0x8] sm:$0xff]
        %v694 = vld [vmem:[%s191 + $0x10] sm:$0xff]
        %v695 = vld [vmem:[%s191 + $0x18] sm:$0xff]
        %v696 = vld [vmem:[%s191 + $0x20] sm:$0xff]
        %v697 = vld [vmem:[%s191 + $0x28] sm:$0xff]
        %v698 = vld [vmem:[%s191 + $0x30] sm:$0xff]
        %v699 = vld [vmem:[%s191 + $0x38] sm:$0xff]
        %v700 = vld [vmem:[%s191 + $0x40] sm:$0xff]
        %v701 = vld [vmem:[%s191 + $0x48] sm:$0xff]
        %v702 = vld [vmem:[%s191 + $0x50] sm:$0xff]
        %v703 = vld [vmem:[%s191 + $0x58] sm:$0xff]
        %v704 = vld [vmem:[%s191 + $0x60] sm:$0xff]
        %v705 = vld [vmem:[%s191 + $0x68] sm:$0xff]
        %v706 = vld [vmem:[%s191 + $0x70] sm:$0xff]
        %v707 = vld [vmem:[%s191 + $0x78] sm:$0xff]
        %709 = vset.pattern.permute.xlu0 0
        %710 = vperm.xlu0 %709, %v692
        %v711 = vpop.permute.xlu0 %710
        %714 = vset.pattern.permute.xlu0 0
        %715 = vperm.xlu0 %714, %v693
        %v716 = vpop.permute.xlu0 %715
        %719 = vset.pattern.permute.xlu0 0
        %720 = vperm.xlu0 %719, %v694
        %v721 = vpop.permute.xlu0 %720
        %724 = vset.pattern.permute.xlu0 0
        %725 = vperm.xlu0 %724, %v695
        %v726 = vpop.permute.xlu0 %725
        %729 = vset.pattern.permute.xlu0 0
        %730 = vperm.xlu0 %729, %v696
        %v731 = vpop.permute.xlu0 %730
        %734 = vset.pattern.permute.xlu0 0
        %735 = vperm.xlu0 %734, %v697
        %v736 = vpop.permute.xlu0 %735
        %739 = vset.pattern.permute.xlu0 0
        %740 = vperm.xlu0 %739, %v698
        %v741 = vpop.permute.xlu0 %740
        %744 = vset.pattern.permute.xlu0 0
        %745 = vperm.xlu0 %744, %v699
        %v746 = vpop.permute.xlu0 %745
        %749 = vset.pattern.permute.xlu0 0
        %750 = vperm.xlu0 %749, %v700
        %v751 = vpop.permute.xlu0 %750
        %754 = vset.pattern.permute.xlu0 0
        %755 = vperm.xlu0 %754, %v701
        %v756 = vpop.permute.xlu0 %755
        %759 = vset.pattern.permute.xlu0 0
        %760 = vperm.xlu0 %759, %v702
        %v761 = vpop.permute.xlu0 %760
        %764 = vset.pattern.permute.xlu0 0
        %765 = vperm.xlu0 %764, %v703
        %v766 = vpop.permute.xlu0 %765
        %769 = vset.pattern.permute.xlu0 0
        %770 = vperm.xlu0 %769, %v704
        %v771 = vpop.permute.xlu0 %770
        %774 = vset.pattern.permute.xlu0 0
        %775 = vperm.xlu0 %774, %v705
        %v776 = vpop.permute.xlu0 %775
        %779 = vset.pattern.permute.xlu0 0
        %780 = vperm.xlu0 %779, %v706
        %v781 = vpop.permute.xlu0 %780
        %784 = vset.pattern.permute.xlu0 0
        %785 = vperm.xlu0 %784, %v707
        %v786 = vpop.permute.xlu0 %785
        %v788 = vmul.f32 %v629, %v711
        %v789 = vmul.f32 %v631, %v711
        %v790 = vmul.f32 %v633, %v716
        %v791 = vmul.f32 %v635, %v716
        %v792 = vmul.f32 %v637, %v721
        %v793 = vmul.f32 %v639, %v721
        %v794 = vmul.f32 %v641, %v726
        %v795 = vmul.f32 %v643, %v726
        %v796 = vmul.f32 %v645, %v731
        %v797 = vmul.f32 %v647, %v731
        %v798 = vmul.f32 %v649, %v736
        %v799 = vmul.f32 %v651, %v736
        %v800 = vmul.f32 %v653, %v741
        %v801 = vmul.f32 %v655, %v741
        %v802 = vmul.f32 %v657, %v746
        %v803 = vmul.f32 %v659, %v746
        %v804 = vmul.f32 %v661, %v751
        %v805 = vmul.f32 %v663, %v751
        %v806 = vmul.f32 %v665, %v756
        %v807 = vmul.f32 %v667, %v756
        %v808 = vmul.f32 %v669, %v761
        %v809 = vmul.f32 %v671, %v761
        %v810 = vmul.f32 %v673, %v766
        %v811 = vmul.f32 %v675, %v766
        %v812 = vmul.f32 %v677, %v771
        %v813 = vmul.f32 %v679, %v771
        %v814 = vmul.f32 %v681, %v776
        %v815 = vmul.f32 %v683, %v776
        %v816 = vmul.f32 %v685, %v781
        %v817 = vmul.f32 %v687, %v781
        %v818 = vmul.f32 %v689, %v786
        %v819 = vmul.f32 %v691, %v786
        %v820 = vadd.f32 %v788, %v789
        %821 = vadd.xlane.f32.xlu0 %v820
        %v822 = vpop.xlane.xlu0 %821
        %v823 = vadd.f32 %v790, %v791
        %824 = vadd.xlane.f32.xlu0 %v823
        %v825 = vpop.xlane.xlu0 %824
        %v826 = vadd.f32 %v792, %v793
        %827 = vadd.xlane.f32.xlu0 %v826
        %v828 = vpop.xlane.xlu0 %827
        %v829 = vadd.f32 %v794, %v795
        %830 = vadd.xlane.f32.xlu0 %v829
        %v831 = vpop.xlane.xlu0 %830
        %v832 = vadd.f32 %v796, %v797
        %833 = vadd.xlane.f32.xlu0 %v832
        %v834 = vpop.xlane.xlu0 %833
        %v835 = vadd.f32 %v798, %v799
        %836 = vadd.xlane.f32.xlu0 %v835
        %v837 = vpop.xlane.xlu0 %836
        %v838 = vadd.f32 %v800, %v801
        %839 = vadd.xlane.f32.xlu0 %v838
        %v840 = vpop.xlane.xlu0 %839
        %v841 = vadd.f32 %v802, %v803
        %842 = vadd.xlane.f32.xlu0 %v841
        %v843 = vpop.xlane.xlu0 %842
        %v844 = vadd.f32 %v804, %v805
        %845 = vadd.xlane.f32.xlu0 %v844
        %v846 = vpop.xlane.xlu0 %845
        %v847 = vadd.f32 %v806, %v807
        %848 = vadd.xlane.f32.xlu0 %v847
        %v849 = vpop.xlane.xlu0 %848
        %v850 = vadd.f32 %v808, %v809
        %851 = vadd.xlane.f32.xlu0 %v850
        %v852 = vpop.xlane.xlu0 %851
        %v853 = vadd.f32 %v810, %v811
        %854 = vadd.xlane.f32.xlu0 %v853
        %v855 = vpop.xlane.xlu0 %854
        %v856 = vadd.f32 %v812, %v813
        %857 = vadd.xlane.f32.xlu0 %v856
        %v858 = vpop.xlane.xlu0 %857
        %v859 = vadd.f32 %v814, %v815
        %860 = vadd.xlane.f32.xlu0 %v859
        %v861 = vpop.xlane.xlu0 %860
        %v862 = vadd.f32 %v816, %v817
        %863 = vadd.xlane.f32.xlu0 %v862
        %v864 = vpop.xlane.xlu0 %863
        %v865 = vadd.f32 %v818, %v819
        %866 = vadd.xlane.f32.xlu0 %v865
        %v867 = vpop.xlane.xlu0 %866
        %v868 = vrcp.pop %v822
        %v869 = vrcp.pop %v825
        %v870 = vrcp.pop %v828
        %v871 = vrcp.pop %v831
        %v872 = vrcp.pop %v834
        %v873 = vrcp.pop %v837
        %v874 = vrcp.pop %v840
        %v875 = vrcp.pop %v843
        %v876 = vrcp.pop %v846
        %v877 = vrcp.pop %v849
        %v878 = vrcp.pop %v852
        %v879 = vrcp.pop %v855
        %v880 = vrcp.pop %v858
        %v881 = vrcp.pop %v861
        %v882 = vrcp.pop %v864
        %v883 = vrcp.pop %v867
        %v884 = vmul.f32 %v788, %v868
        %v885 = vmul.f32 %v789, %v868
        %v886 = vmul.f32 %v790, %v869
        %v887 = vmul.f32 %v791, %v869
        %v888 = vmul.f32 %v792, %v870
        %v889 = vmul.f32 %v793, %v870
        %v890 = vmul.f32 %v794, %v871
        %v891 = vmul.f32 %v795, %v871
        %v892 = vmul.f32 %v796, %v872
        %v893 = vmul.f32 %v797, %v872
        %v894 = vmul.f32 %v798, %v873
        %v895 = vmul.f32 %v799, %v873
        %v896 = vmul.f32 %v800, %v874
        %v897 = vmul.f32 %v801, %v874
        %v898 = vmul.f32 %v802, %v875
        %v899 = vmul.f32 %v803, %v875
        %v900 = vmul.f32 %v804, %v876
        %v901 = vmul.f32 %v805, %v876
        %v902 = vmul.f32 %v806, %v877
        %v903 = vmul.f32 %v807, %v877
        %v904 = vmul.f32 %v808, %v878
        %v905 = vmul.f32 %v809, %v878
        %v906 = vmul.f32 %v810, %v879
        %v907 = vmul.f32 %v811, %v879
        %v908 = vmul.f32 %v812, %v880
        %v909 = vmul.f32 %v813, %v880
        %v910 = vmul.f32 %v814, %v881
        %v911 = vmul.f32 %v815, %v881
        %v912 = vmul.f32 %v816, %v882
        %v913 = vmul.f32 %v817, %v882
        %v914 = vmul.f32 %v818, %v883
        %v915 = vmul.f32 %v819, %v883
        %v916 = vmul.f32 %v884, 0.5
        %v917 = vmul.f32 %v885, 0.5
        %v918 = vmul.f32 %v886, 0.5
        %v919 = vmul.f32 %v887, 0.5
        %v920 = vmul.f32 %v888, 0.5
        %v921 = vmul.f32 %v889, 0.5
        %v922 = vmul.f32 %v890, 0.5
        %v923 = vmul.f32 %v891, 0.5
        %v924 = vmul.f32 %v892, 0.5
        %v925 = vmul.f32 %v893, 0.5
        %v926 = vmul.f32 %v894, 0.5
        %v927 = vmul.f32 %v895, 0.5
        %v928 = vmul.f32 %v896, 0.5
        %v929 = vmul.f32 %v897, 0.5
        %v930 = vmul.f32 %v898, 0.5
        %v931 = vmul.f32 %v899, 0.5
        %v932 = vmul.f32 %v900, 0.5
        %v933 = vmul.f32 %v901, 0.5
        %v934 = vmul.f32 %v902, 0.5
        %v935 = vmul.f32 %v903, 0.5
        %v936 = vmul.f32 %v904, 0.5
        %v937 = vmul.f32 %v905, 0.5
        %v938 = vmul.f32 %v906, 0.5
        %v939 = vmul.f32 %v907, 0.5
        %v940 = vmul.f32 %v908, 0.5
        %v941 = vmul.f32 %v909, 0.5
        %v942 = vmul.f32 %v910, 0.5
        %v943 = vmul.f32 %v911, 0.5
        %v944 = vmul.f32 %v912, 0.5
        %v945 = vmul.f32 %v913, 0.5
        %v946 = vmul.f32 %v914, 0.5
        %v947 = vmul.f32 %v915, 0.5
        %v948 = vtanh.pop %v916
        %v949 = vtanh.pop %v917
        %v950 = vtanh.pop %v918
        %v951 = vtanh.pop %v919
        %v952 = vtanh.pop %v920
        %v953 = vtanh.pop %v921
        %v954 = vtanh.pop %v922
        %v955 = vtanh.pop %v923
        %v956 = vtanh.pop %v924
        %v957 = vtanh.pop %v925
        %v958 = vtanh.pop %v926
        %v959 = vtanh.pop %v927
        %v960 = vtanh.pop %v928
        %v961 = vtanh.pop %v929
        %v962 = vtanh.pop %v930
        %v963 = vtanh.pop %v931
        %v964 = vtanh.pop %v932
        %v965 = vtanh.pop %v933
        %v966 = vtanh.pop %v934
        %v967 = vtanh.pop %v935
        %v968 = vtanh.pop %v936
        %v969 = vtanh.pop %v937
        %v970 = vtanh.pop %v938
        %v971 = vtanh.pop %v939
        %v972 = vtanh.pop %v940
        %v973 = vtanh.pop %v941
        %v974 = vtanh.pop %v942
        %v975 = vtanh.pop %v943
        %v976 = vtanh.pop %v944
        %v977 = vtanh.pop %v945
        %v978 = vtanh.pop %v946
        %v979 = vtanh.pop %v947
        %v980 = vmul.f32 %v948, 0.5
        %v981 = vmul.f32 %v949, 0.5
        %v982 = vmul.f32 %v950, 0.5
        %v983 = vmul.f32 %v951, 0.5
        %v984 = vmul.f32 %v952, 0.5
        %v985 = vmul.f32 %v953, 0.5
        %v986 = vmul.f32 %v954, 0.5
        %v987 = vmul.f32 %v955, 0.5
        %v988 = vmul.f32 %v956, 0.5
        %v989 = vmul.f32 %v957, 0.5
        %v990 = vmul.f32 %v958, 0.5
        %v991 = vmul.f32 %v959, 0.5
        %v992 = vmul.f32 %v960, 0.5
        %v993 = vmul.f32 %v961, 0.5
        %v994 = vmul.f32 %v962, 0.5
        %v995 = vmul.f32 %v963, 0.5
        %v996 = vmul.f32 %v964, 0.5
        %v997 = vmul.f32 %v965, 0.5
        %v998 = vmul.f32 %v966, 0.5
        %v999 = vmul.f32 %v967, 0.5
        %v1000 = vmul.f32 %v968, 0.5
        %v1001 = vmul.f32 %v969, 0.5
        %v1002 = vmul.f32 %v970, 0.5
        %v1003 = vmul.f32 %v971, 0.5
        %v1004 = vmul.f32 %v972, 0.5
        %v1005 = vmul.f32 %v973, 0.5
        %v1006 = vmul.f32 %v974, 0.5
        %v1007 = vmul.f32 %v975, 0.5
        %v1008 = vmul.f32 %v976, 0.5
        %v1009 = vmul.f32 %v977, 0.5
        %v1010 = vmul.f32 %v978, 0.5
        %v1011 = vmul.f32 %v979, 0.5
        %v1012 = vadd.f32 %v980, 0.5
        %v1013 = vadd.f32 %v981, 0.5
        %v1014 = vadd.f32 %v982, 0.5
        %v1015 = vadd.f32 %v983, 0.5
        %v1016 = vadd.f32 %v984, 0.5
        %v1017 = vadd.f32 %v985, 0.5
        %v1018 = vadd.f32 %v986, 0.5
        %v1019 = vadd.f32 %v987, 0.5
        %v1020 = vadd.f32 %v988, 0.5
        %v1021 = vadd.f32 %v989, 0.5
        %v1022 = vadd.f32 %v990, 0.5
        %v1023 = vadd.f32 %v991, 0.5
        %v1024 = vadd.f32 %v992, 0.5
        %v1025 = vadd.f32 %v993, 0.5
        %v1026 = vadd.f32 %v994, 0.5
        %v1027 = vadd.f32 %v995, 0.5
        %v1028 = vadd.f32 %v996, 0.5
        %v1029 = vadd.f32 %v997, 0.5
        %v1030 = vadd.f32 %v998, 0.5
        %v1031 = vadd.f32 %v999, 0.5
        %v1032 = vadd.f32 %v1000, 0.5
        %v1033 = vadd.f32 %v1001, 0.5
        %v1034 = vadd.f32 %v1002, 0.5
        %v1035 = vadd.f32 %v1003, 0.5
        %v1036 = vadd.f32 %v1004, 0.5
        %v1037 = vadd.f32 %v1005, 0.5
        %v1038 = vadd.f32 %v1006, 0.5
        %v1039 = vadd.f32 %v1007, 0.5
        %v1040 = vadd.f32 %v1008, 0.5
        %v1041 = vadd.f32 %v1009, 0.5
        %v1042 = vadd.f32 %v1010, 0.5
        %v1043 = vadd.f32 %v1011, 0.5
        %v1044 = vpack.c.bf16 %v1014, %v1012
        %v1045 = vpack.c.bf16 %v1015, %v1013
        %v1046 = vpack.c.bf16 %v1018, %v1016
        %v1047 = vpack.c.bf16 %v1019, %v1017
        %v1048 = vpack.c.bf16 %v1022, %v1020
        %v1049 = vpack.c.bf16 %v1023, %v1021
        %v1050 = vpack.c.bf16 %v1026, %v1024
        %v1051 = vpack.c.bf16 %v1027, %v1025
        %v1052 = vpack.c.bf16 %v1030, %v1028
        %v1053 = vpack.c.bf16 %v1031, %v1029
        %v1054 = vpack.c.bf16 %v1034, %v1032
        %v1055 = vpack.c.bf16 %v1035, %v1033
        %v1056 = vpack.c.bf16 %v1038, %v1036
        %v1057 = vpack.c.bf16 %v1039, %v1037
        %v1058 = vpack.c.bf16 %v1042, %v1040
        %v1059 = vpack.c.bf16 %v1043, %v1041
        %v1076 = vunpack.c.l.b16 %v1044
        %v1077 = vunpack.c.l.b16 %v1045
        %v1078 = vunpack.c.h.b16 %v1044
        %v1079 = vunpack.c.h.b16 %v1045
        %v1080 = vunpack.c.l.b16 %v1046
        %v1081 = vunpack.c.l.b16 %v1047
        %v1082 = vunpack.c.h.b16 %v1046
        %v1083 = vunpack.c.h.b16 %v1047
        %v1084 = vunpack.c.l.b16 %v1048
        %v1085 = vunpack.c.l.b16 %v1049
        %v1086 = vunpack.c.h.b16 %v1048
        %v1087 = vunpack.c.h.b16 %v1049
        %v1088 = vunpack.c.l.b16 %v1050
        %v1089 = vunpack.c.l.b16 %v1051
        %v1090 = vunpack.c.h.b16 %v1050
        %v1091 = vunpack.c.h.b16 %v1051
        %v1092 = vunpack.c.l.b16 %v1052
        %v1093 = vunpack.c.l.b16 %v1053
        %v1094 = vunpack.c.h.b16 %v1052
        %v1095 = vunpack.c.h.b16 %v1053
        %v1096 = vunpack.c.l.b16 %v1054
        %v1097 = vunpack.c.l.b16 %v1055
        %v1098 = vunpack.c.h.b16 %v1054
        %v1099 = vunpack.c.h.b16 %v1055
        %v1100 = vunpack.c.l.b16 %v1056
        %v1101 = vunpack.c.l.b16 %v1057
        %v1102 = vunpack.c.h.b16 %v1056
        %v1103 = vunpack.c.h.b16 %v1057
        %v1104 = vunpack.c.l.b16 %v1058
        %v1105 = vunpack.c.l.b16 %v1059
        %v1106 = vunpack.c.h.b16 %v1058
        %v1107 = vunpack.c.h.b16 %v1059
        %v1108 = vpack.c.b16 %v1077, %v1076
        %v1109 = vpack.c.b16 %v1079, %v1078
        %v1110 = vpack.c.b16 %v1081, %v1080
        %v1111 = vpack.c.b16 %v1083, %v1082
        %v1112 = vpack.c.b16 %v1085, %v1084
        %v1113 = vpack.c.b16 %v1087, %v1086
        %v1114 = vpack.c.b16 %v1089, %v1088
        %v1115 = vpack.c.b16 %v1091, %v1090
        %v1116 = vpack.c.b16 %v1093, %v1092
        %v1117 = vpack.c.b16 %v1095, %v1094
        %v1118 = vpack.c.b16 %v1097, %v1096
        %v1119 = vpack.c.b16 %v1099, %v1098
        %v1120 = vpack.c.b16 %v1101, %v1100
        %v1121 = vpack.c.b16 %v1103, %v1102
        %v1122 = vpack.c.b16 %v1105, %v1104
        %v1123 = vpack.c.b16 %v1107, %v1106
        %1140 = vst [vmem:[%s180] sm:$0xff] %v1108
        %1141 = vst [vmem:[%s180 + $0x8] sm:$0xff] %v1109
        %1142 = vst [vmem:[%s180 + $0x10] sm:$0xff] %v1110
        %1143 = vst [vmem:[%s180 + $0x18] sm:$0xff] %v1111
        %1144 = vst [vmem:[%s180 + $0x20] sm:$0xff] %v1112
        %1145 = vst [vmem:[%s180 + $0x28] sm:$0xff] %v1113
        %1146 = vst [vmem:[%s180 + $0x30] sm:$0xff] %v1114
        %1147 = vst [vmem:[%s180 + $0x38] sm:$0xff] %v1115
        %1148 = vst [vmem:[%s180 + $0x40] sm:$0xff] %v1116
        %1149 = vst [vmem:[%s180 + $0x48] sm:$0xff] %v1117
        %1150 = vst [vmem:[%s180 + $0x50] sm:$0xff] %v1118
        %1151 = vst [vmem:[%s180 + $0x58] sm:$0xff] %v1119
        %1152 = vst [vmem:[%s180 + $0x60] sm:$0xff] %v1120
        %1153 = vst [vmem:[%s180 + $0x68] sm:$0xff] %v1121
        %1154 = vst [vmem:[%s180 + $0x70] sm:$0xff] %v1122
        %1155 = vst [vmem:[%s180 + $0x78] sm:$0xff] %v1123
        %s1156 = sand.u32 %s98, 1
        %s1157 = scalar_lea.sflag [#allocation3], %s1156
        %s1158 = sand.u32 %s98, 1
        %s1159 = smul.addr %s1158, 128
        %s1160 = scalar_lea.vmem [#allocation2], %s1159
        // Predicated region
        $region33: #{encoder_forward.5} parent=31 // pred_check
          %p1161 = pneg %p108
        $region34: #{encoder_forward.5} parent=31 // pred_check_branch
          %1163 = sbr.rel (%p1161) target = $region36
        $region35: #{encoder_forward.5} parent=31 // pred_region
          %s1164 = smul.u32 16, %s17
          %s1166 = ssub.s32 2048, 2048
          %1167 = vsyncadd %s1157, %s1166
          %s1168 = smul.addr %s1164, 2
          %s1169 = smul.addr %s1168, 64
          %s1170 = scalar_lea.hbm %s3, %s1169
          %s1171 = sshll.u32 %s1160, 4
          %s1172 = int_to_ptr.vmem [resolvable:$true] %s1171
          %1177 = dma.vmem_to_hbm [thread:$0]  %s1172, 2048, %s1170, %s1157, 128, 128, 8
        $region36: #{encoder_forward.5} parent=31 // pred_fallthru
          _
      $region32: #{encoder_forward.5} parent=5 // pred_fallthru
        _
      %p1178 = scmp.le.s32.totalorder 2, %s12
      // Predicated region
      $region37: #{encoder_forward.5} parent=5 // pred_check
        %p1179 = pneg %p1178
      $region38: #{encoder_forward.5} parent=5 // pred_check_branch
        %1181 = sbr.rel (%p1179) target = $region40
      $region39: #{encoder_forward.5} parent=5 // pred_region
        %s1182 = ssub.s32 %s12, 2
        // Predicated region
        $region41: #{encoder_forward.5} parent=39 // pred_check
          %p1183 = pneg %p114
        $region42: #{encoder_forward.5} parent=39 // pred_check_branch
          %1185 = sbr.rel (%p1183) target = $region44
        $region43: #{encoder_forward.5} parent=39 // pred_region
          %s1186 = sand.u32 %s99, 1
          %s1187 = scalar_lea.sflag [#allocation3], %s1186
          %s1188 = sand.u32 %s99, 1
          %s1189 = smul.addr %s1188, 128
          %s1190 = scalar_lea.vmem [#allocation2], %s1189
          %1191 = dma.done %s1187, 2048
        $region44: #{encoder_forward.5} parent=39 // pred_fallthru
          _
      $region40: #{encoder_forward.5} parent=5 // pred_fallthru
        _
    $region6: #{encoder_forward.5} parent=1 // loop_footer
      %s16 = sadd.s32 1, %s12
    $region7: #{encoder_forward.5} parent=1 // loop_footer_branch
      %11 = sbr.rel target = $region3
    $region8: #{encoder_forward.5} parent=1 // loop_exit
      _
    %1192 = vsyncpa [#allocation3], 1
    %s1193 = scalar_lea.sflag [#allocation3], 1
    %1194 = vsyncpa %s1193, 1

</llo_original>
